<compile_context>
chip_gen: v7x
topology: tpu7x:2x2x1
jax: 0.10.0
libtpu: 0.0.40
codegen_flags: <defaults>
</compile_context>

<pallas_src>
import functools

import jax
import jax.numpy as jnp
from jax.experimental import pallas as pl
from jax.experimental.pallas import tpu as pltpu

EPS = 1e-5


# ----------------------------------------------------------------------------
# Pallas kernels
# ----------------------------------------------------------------------------
def _conv_tap_kernel(xp_ref, w_ref, b_ref, y_ref, sum_ref, sq_ref, acc_ref,
                     *, H, W):
    """One (batch n, output depth plane d, depth tap kd) grid step.

    xp_ref : (1, 1, H+2, W+2, Cin)  halo'd input plane at padded depth d+kd
    w_ref  : (1, 3, 3, Cin, Cout)   weight taps for this kd
    b_ref  : (1, Cout) f32          bias
    y_ref  : (1, 1, H*W, Cout)      conv+bias output for plane (n, d)
    sum_ref/sq_ref : (1, Cout) f32  per-channel batch-stat accumulators
    acc_ref: (H*W, Cout) f32        VMEM accumulator across the 3 kd taps
    """
    n = pl.program_id(0)
    d = pl.program_id(1)
    kd = pl.program_id(2)

    @pl.when((n == 0) & (d == 0) & (kd == 0))
    def _():
        sum_ref[...] = jnp.zeros_like(sum_ref)
        sq_ref[...] = jnp.zeros_like(sq_ref)

    @pl.when(kd == 0)
    def _():
        acc_ref[...] = jnp.zeros_like(acc_ref)

    x = xp_ref[0, 0]                                   # (H+2, W+2, Cin)
    acc = acc_ref[...]
    for kh in range(3):                                # 9 shifted matmuls
        for kw in range(3):
            sl = x[kh:kh + H, kw:kw + W, :].reshape(H * W, -1)
            acc = acc + jnp.dot(sl, w_ref[0, kh, kw],
                                preferred_element_type=jnp.float32)
    acc_ref[...] = acc

    @pl.when(kd == 2)                                  # plane finished
    def _():
        y = acc_ref[...] + b_ref[...]
        y_ref[0, 0] = y.astype(y_ref.dtype)
        sum_ref[...] += jnp.sum(y, axis=0, keepdims=True)
        sq_ref[...] += jnp.sum(y * y, axis=0, keepdims=True)


def _bn_relu_add_kernel(y1_ref, y2_ref, s1_ref, t1_ref, s2_ref, t2_ref, o_ref):
    # out = relu(bn1(y1)) + relu(bn2(y2))   (residual recomputed from y1)
    a1 = jnp.maximum(y1_ref[...] * s1_ref[...] + t1_ref[...], 0.0)
    a2 = jnp.maximum(y2_ref[...] * s2_ref[...] + t2_ref[...], 0.0)
    o_ref[...] = a1 + a2


# ----------------------------------------------------------------------------
# Pallas wrappers
# ----------------------------------------------------------------------------
def conv3x3x3_bias_stats(xp, w, b):
    """3x3x3 'same' conv + bias with fused BN batch-stat reduction.

    xp : (N, D+2, H+2, W+2, Cin)  spatially zero-padded, channel-last input
    w  : (3, 3, 3, Cin, Cout)     weights, tap-major
    b  : (1, Cout) f32            bias
    returns: y (N, D, H*W, Cout) f32, per-channel sum and sumsq, each (1, Cout)
    """
    N, Dp2, Hp2, Wp2, Cin = xp.shape
    D, H, W = Dp2 - 2, Hp2 - 2, Wp2 - 2
    Cout = w.shape[-1]
    HW = H * W

    kernel = functools.partial(_conv_tap_kernel, H=H, W=W)
    return pl.pallas_call(
        kernel,
        out_shape=(
            jax.ShapeDtypeStruct((N, D, HW, Cout), jnp.float32),
            jax.ShapeDtypeStruct((1, Cout), jnp.float32),
            jax.ShapeDtypeStruct((1, Cout), jnp.float32),
        ),
        grid_spec=pltpu.PrefetchScalarGridSpec(
            num_scalar_prefetch=0,
            grid=(N, D, 3),
            in_specs=[
                pl.BlockSpec((1, 1, Hp2, Wp2, Cin),
                             lambda n, d, k: (n, d + k, 0, 0, 0)),
                pl.BlockSpec((1, 3, 3, Cin, Cout),
                             lambda n, d, k: (k, 0, 0, 0, 0)),
                pl.BlockSpec((1, Cout), lambda n, d, k: (0, 0)),
            ],
            out_specs=(
                pl.BlockSpec((1, 1, HW, Cout), lambda n, d, k: (n, d, 0, 0)),
                pl.BlockSpec((1, Cout), lambda n, d, k: (0, 0)),
                pl.BlockSpec((1, Cout), lambda n, d, k: (0, 0)),
            ),
            scratch_shapes=[pltpu.VMEM((HW, Cout), jnp.float32)],
        ),
        # All axes "arbitrary": the (1, Cout) stat accumulators are revisited
        # by every grid point, so no axis may be sharded across cores.
        compiler_params=pltpu.CompilerParams(
            dimension_semantics=("arbitrary", "arbitrary", "arbitrary")),
    )(xp, w, b)


def bn_relu_add(y1, y2, s1, t1, s2, t2, tm=512):
    """relu(y1*s1+t1) + relu(y2*s2+t2) on a lane-dense (rows, W*C) view."""
    R, L = y1.shape
    tm = min(tm, ((R + 7) // 8) * 8)
    Rp = pl.cdiv(R, tm) * tm
    if Rp != R:                         # ragged last tile: pad rows, slice after
        pad = ((0, Rp - R), (0, 0))
        y1 = jnp.pad(y1, pad)
        y2 = jnp.pad(y2, pad)
    out = pl.pallas_call(
        _bn_relu_add_kernel,
        out_shape=jax.ShapeDtypeStruct((Rp, L), jnp.float32),
        grid_spec=pltpu.PrefetchScalarGridSpec(
            num_scalar_prefetch=0,
            grid=(Rp // tm,),
            in_specs=[
                pl.BlockSpec((tm, L), lambda i: (i, 0)),
                pl.BlockSpec((tm, L), lambda i: (i, 0)),
                pl.BlockSpec((1, L), lambda i: (0, 0)),
                pl.BlockSpec((1, L), lambda i: (0, 0)),
                pl.BlockSpec((1, L), lambda i: (0, 0)),
                pl.BlockSpec((1, L), lambda i: (0, 0)),
            ],
            out_specs=pl.BlockSpec((tm, L), lambda i: (i, 0)),
        ),
        compiler_params=pltpu.CompilerParams(dimension_semantics=("parallel",)),
    )(y1, y2, s1, t1, s2, t2)
    return out[:R] if Rp != R else out


# ----------------------------------------------------------------------------
# ResConv forward (glue in plain JAX: transposes, pads, tiny per-channel math)
# ----------------------------------------------------------------------------
def _bn_scale_shift(s, q, gamma, beta, count):
    mean = s / count
    # E[x^2]-E[x]^2 in f32; clamp guards tiny negative values from cancellation.
    var = jnp.maximum(q / count - mean * mean, 0.0)
    scale = gamma.reshape(1, -1) / jnp.sqrt(var + EPS)
    shift = beta.reshape(1, -1) - mean * scale
    return scale, shift


def res_conv_forward(x, params, conv_dtype=jnp.bfloat16):
    """Pallas implementation of ResConv.forward.  x: (N, Cin, D, H, W)."""
    w1, b1, g1, be1, w2, b2, g2, be2 = params
    N, Cin, D, H, W = x.shape
    Cout = w1.shape[0]
    M = N * D * H * W

    # channel-last, pad once, cast the streamed conv operands (bf16 on MXU)
    xl = jnp.transpose(x, (0, 2, 3, 4, 1))                       # (N,D,H,W,Cin)
    xp = jnp.pad(xl, ((0, 0), (1, 1), (1, 1), (1, 1), (0, 0))).astype(conv_dtype)
    w1t = jnp.transpose(w1, (2, 3, 4, 1, 0)).astype(conv_dtype)  # (3,3,3,Cin,Cout)
    w2t = jnp.transpose(w2, (2, 3, 4, 1, 0)).astype(conv_dtype)

    # conv1 + bias, fused BN batch-stats
    y1, s1, q1 = conv3x3x3_bias_stats(
        xp, w1t, b1.reshape(1, Cout).astype(jnp.float32))
    scale1, shift1 = _bn_scale_shift(s1, q1, g1, be1, M)

    # residual a1 = relu(bn1(y1)); pad it once for conv2 (single fused XLA pass)
    a1 = jnp.maximum(y1.reshape(N, D, H, W, Cout) * scale1 + shift1, 0.0)
    a1p = jnp.pad(a1, ((0, 0), (1, 1), (1, 1), (1, 1), (0, 0))).astype(conv_dtype)

    # conv2 + bias, fused BN batch-stats
    y2, s2, q2 = conv3x3x3_bias_stats(
        a1p, w2t, b2.reshape(1, Cout).astype(jnp.float32))
    scale2, shift2 = _bn_scale_shift(s2, q2, g2, be2, M)

    # fused finalize: relu(bn1(y1)) + relu(bn2(y2)) on a lane-dense (., W*C) view
    L = W * Cout
    out = bn_relu_add(
        y1.reshape(N * D * H, L), y2.reshape(N * D * H, L),
        jnp.tile(scale1, (1, W)), jnp.tile(shift1, (1, W)),
        jnp.tile(scale2, (1, W)), jnp.tile(shift2, (1, W)))
    out = out.reshape(N, D, H, W, Cout)
    return jnp.transpose(out, (0, 4, 1, 2, 3))                   # back to NCDHW


# ----------------------------------------------------------------------------
# Pure-JAX reference (correctness check only)
# ----------------------------------------------------------------------------
def ref_forward(x, params):
    w1, b1, g1, be1, w2, b2, g2, be2 = params

    def conv(x, w, b):
        y = jax.lax.conv_general_dilated(
            x, w, window_strides=(1, 1, 1), padding=[(1, 1)] * 3,
            dimension_numbers=("NCDHW", "OIDHW", "NCDHW"))
        return y + b.reshape(1, -1, 1, 1, 1)

    def bn(y, g, be):
        mean = y.mean(axis=(0, 2, 3, 4), keepdims=True)
        var = y.var(axis=(0, 2, 3, 4), keepdims=True)
        return (y - mean) / jnp.sqrt(var + EPS) * g.reshape(1, -1, 1, 1, 1) \
            + be.reshape(1, -1, 1, 1, 1)

    a = jax.nn.relu(bn(conv(x, w1, b1), g1, be1))
    y = jax.nn.relu(bn(conv(a, w2, b2), g2, be2))
    return a + y


# ----------------------------------------------------------------------------
def make_params(key, in_channels, out_channels):
    ks = jax.random.split(key, 4)
    fan1 = in_channels * 27
    fan2 = out_channels * 27
    w1 = jax.random.uniform(ks[0], (out_channels, in_channels, 3, 3, 3),
                            jnp.float32, -1.0, 1.0) / jnp.sqrt(fan1)
    b1 = jax.random.uniform(ks[1], (out_channels,),
                            jnp.float32, -1.0, 1.0) / jnp.sqrt(fan1)
    w2 = jax.random.uniform(ks[2], (out_channels, out_channels, 3, 3, 3),
                            jnp.float32, -1.0, 1.0) / jnp.sqrt(fan2)
    b2 = jax.random.uniform(ks[3], (out_channels,),
                            jnp.float32, -1.0, 1.0) / jnp.sqrt(fan2)
    # BatchNorm3d defaults: weight=1, bias=0
    g1 = jnp.ones((out_channels,), jnp.float32)
    be1 = jnp.zeros((out_channels,), jnp.float32)
    g2 = jnp.ones((out_channels,), jnp.float32)
    be2 = jnp.zeros((out_channels,), jnp.float32)
    return (w1, b1, g1, be1, w2, b2, g2, be2)


if __name__ == "__main__":
    # ResUNet's first block: ResConv(n_channels=3, 16), small volume.
    N, Cin, Cout, D, H, W = 2, 3, 16, 8, 8, 8
    key = jax.random.PRNGKey(0)
    kx, kp = jax.random.split(key)
    x = jax.random.normal(kx, (N, Cin, D, H, W), jnp.float32)
    params = make_params(kp, Cin, Cout)

    ref = ref_forward(x, params)

    fwd_f32 = jax.jit(functools.partial(res_conv_forward, conv_dtype=jnp.float32))
    fwd_bf16 = jax.jit(functools.partial(res_conv_forward, conv_dtype=jnp.bfloat16))

    # f32 operands: bit-for-bit-ish match with the reference
    out_f32 = jax.block_until_ready(fwd_f32(x, params))
    assert out_f32.shape == (N, Cout, D, H, W)
    assert jnp.allclose(out_f32, ref, rtol=1e-4, atol=1e-4), (
        float(jnp.max(jnp.abs(out_f32 - ref))))

    # bf16 conv operands (recommended fast path): BN normalization amplifies the
    # bf16 quantization error, so compare with a correspondingly looser bound.
    out_bf16 = jax.block_until_ready(fwd_bf16(x, params))
    assert jnp.allclose(out_bf16, ref, rtol=1e-1, atol=1e-1), (
        float(jnp.max(jnp.abs(out_bf16 - ref))))

    print("KERNEL_OK")
</pallas_src>

<mosaic_0001>
module attributes {stable_mosaic.version = 11 : i64} {
  func.func @_conv_tap_kernel(%arg0: i32, %arg1: i32, %arg2: i32, %arg3: memref<1x1x10x10x3xf32, #tpu.memory_space<vmem>>, %arg4: memref<1x3x3x3x16xf32, #tpu.memory_space<vmem>>, %arg5: memref<1x16xf32, #tpu.memory_space<vmem>>, %arg6: memref<1x1x64x16xf32, #tpu.memory_space<vmem>>, %arg7: memref<1x16xf32, #tpu.memory_space<vmem>>, %arg8: memref<1x16xf32, #tpu.memory_space<vmem>>, %arg9: memref<64x16xf32, #tpu.memory_space<vmem>>) attributes {dimension_semantics = [#tpu.dimension_semantics<arbitrary>, #tpu.dimension_semantics<arbitrary>, #tpu.dimension_semantics<arbitrary>], iteration_bounds = array<i64: 2, 8, 3>, scalar_prefetch = 0 : i64, scratch_operands = 1 : i64, tpu.core_type = #tpu.core_type<tc>, window_params = [{transform_indices = @transform_0, window_bounds = array<i64: 1, 1, 10, 10, 3>}, {transform_indices = @transform_1, window_bounds = array<i64: 1, 3, 3, 3, 16>}, {pipeline_mode = #tpu.pipeline_mode<synchronous>, transform_indices = @transform_2, window_bounds = array<i64: 1, 16>}, {transform_indices = @transform_3, window_bounds = array<i64: 1, 1, 64, 16>}, {pipeline_mode = #tpu.pipeline_mode<synchronous>, transform_indices = @transform_4, window_bounds = array<i64: 1, 16>}, {pipeline_mode = #tpu.pipeline_mode<synchronous>, transform_indices = @transform_5, window_bounds = array<i64: 1, 16>}]} {
    %c0_i32 = arith.constant 0 : i32
    %0 = arith.cmpi eq, %arg0, %c0_i32 : i32
    %c0_i32_0 = arith.constant 0 : i32
    %1 = arith.cmpi eq, %arg1, %c0_i32_0 : i32
    %2 = arith.andi %0, %1 : i1
    %c0_i32_1 = arith.constant 0 : i32
    %3 = arith.cmpi eq, %arg2, %c0_i32_1 : i32
    %4 = arith.andi %2, %3 : i1
    %5 = arith.extui %4 : i1 to i32
    %c0_i32_2 = arith.constant 0 : i32
    %6 = arith.cmpi ne, %5, %c0_i32_2 : i32
    scf.if %6 {
      %cst_65 = arith.constant 0.000000e+00 : f32
      %71 = vector.broadcast %cst_65 : f32 to vector<1x16xf32>
      %c0_66 = arith.constant 0 : index
      %c0_67 = arith.constant 0 : index
      %72 = vector.load %arg7[%c0_66, %c0_67] : memref<1x16xf32, #tpu.memory_space<vmem>>, vector<1x16xf32>
      tpu.vector_store %arg7[%c0_66, %c0_67], %71 {strides = array<i32>} : memref<1x16xf32, #tpu.memory_space<vmem>>, vector<1x16xf32>,
      %cst_68 = arith.constant 0.000000e+00 : f32
      %73 = vector.broadcast %cst_68 : f32 to vector<1x16xf32>
      %c0_69 = arith.constant 0 : index
      %c0_70 = arith.constant 0 : index
      %74 = vector.load %arg8[%c0_69, %c0_70] : memref<1x16xf32, #tpu.memory_space<vmem>>, vector<1x16xf32>
      tpu.vector_store %arg8[%c0_69, %c0_70], %73 {strides = array<i32>} : memref<1x16xf32, #tpu.memory_space<vmem>>, vector<1x16xf32>,
    } else {
    }
    %c0_i32_3 = arith.constant 0 : i32
    %7 = arith.cmpi eq, %arg2, %c0_i32_3 : i32
    %8 = arith.extui %7 : i1 to i32
    %c0_i32_4 = arith.constant 0 : i32
    %9 = arith.cmpi ne, %8, %c0_i32_4 : i32
    scf.if %9 {
      %cst_65 = arith.constant 0.000000e+00 : f32
      %71 = vector.broadcast %cst_65 : f32 to vector<64x16xf32>
      %c0_66 = arith.constant 0 : index
      %c0_67 = arith.constant 0 : index
      %72 = vector.load %arg9[%c0_66, %c0_67] : memref<64x16xf32, #tpu.memory_space<vmem>>, vector<64x16xf32>
      tpu.vector_store %arg9[%c0_66, %c0_67], %71 {strides = array<i32>} : memref<64x16xf32, #tpu.memory_space<vmem>>, vector<64x16xf32>,
    } else {
    }
    %c0 = arith.constant 0 : index
    %c0_5 = arith.constant 0 : index
    %c0_6 = arith.constant 0 : index
    %c0_7 = arith.constant 0 : index
    %c0_8 = arith.constant 0 : index
    %10 = vector.load %arg3[%c0, %c0_5, %c0_6, %c0_7, %c0_8] : memref<1x1x10x10x3xf32, #tpu.memory_space<vmem>>, vector<1x1x10x10x3xf32>
    %11 = vector.shape_cast %10 : vector<1x1x10x10x3xf32> to vector<10x10x3xf32>
    %c0_9 = arith.constant 0 : index
    %c0_10 = arith.constant 0 : index
    %12 = vector.load %arg9[%c0_9, %c0_10] : memref<64x16xf32, #tpu.memory_space<vmem>>, vector<64x16xf32>
    %13 = vector.extract_strided_slice %11 {offsets = [0, 0, 0], sizes = [8, 8, 3], strides = [1, 1, 1]} : vector<10x10x3xf32> to vector<8x8x3xf32>
    %14 = vector.shape_cast %13 : vector<8x8x3xf32> to vector<64x3xf32>
    %c0_11 = arith.constant 0 : index
    %c0_12 = arith.constant 0 : index
    %c0_13 = arith.constant 0 : index
    %c0_14 = arith.constant 0 : index
    %c0_15 = arith.constant 0 : index
    %15 = vector.load %arg4[%c0_11, %c0_12, %c0_13, %c0_14, %c0_15] : memref<1x3x3x3x16xf32, #tpu.memory_space<vmem>>, vector<1x1x1x3x16xf32>
    %16 = vector.shape_cast %15 : vector<1x1x1x3x16xf32> to vector<3x16xf32>
    %cst = arith.constant dense<0.000000e+00> : vector<64x16xf32>
    %17 = tpu.matmul %14, %16, %cst {dimension_numbers = #tpu.dot_dimension_numbers<[1], [0], [0], [1], [0, 0, 1, 1], [], []>} : vector<64x3xf32>, vector<3x16xf32>, vector<64x16xf32> -> vector<64x16xf32>
    %18 = arith.addf %12, %17 : vector<64x16xf32>
    %19 = vector.extract_strided_slice %11 {offsets = [0, 1, 0], sizes = [8, 8, 3], strides = [1, 1, 1]} : vector<10x10x3xf32> to vector<8x8x3xf32>
    %20 = vector.shape_cast %19 : vector<8x8x3xf32> to vector<64x3xf32>
    %c0_16 = arith.constant 0 : index
    %c0_17 = arith.constant 0 : index
    %c1 = arith.constant 1 : index
    %c0_18 = arith.constant 0 : index
    %c0_19 = arith.constant 0 : index
    %21 = vector.load %arg4[%c0_16, %c0_17, %c1, %c0_18, %c0_19] : memref<1x3x3x3x16xf32, #tpu.memory_space<vmem>>, vector<1x1x1x3x16xf32>
    %22 = vector.shape_cast %21 : vector<1x1x1x3x16xf32> to vector<3x16xf32>
    %cst_20 = arith.constant dense<0.000000e+00> : vector<64x16xf32>
    %23 = tpu.matmul %20, %22, %cst_20 {dimension_numbers = #tpu.dot_dimension_numbers<[1], [0], [0], [1], [0, 0, 1, 1], [], []>} : vector<64x3xf32>, vector<3x16xf32>, vector<64x16xf32> -> vector<64x16xf32>
    %24 = arith.addf %18, %23 : vector<64x16xf32>
    %25 = vector.extract_strided_slice %11 {offsets = [0, 2, 0], sizes = [8, 8, 3], strides = [1, 1, 1]} : vector<10x10x3xf32> to vector<8x8x3xf32>
    %26 = vector.shape_cast %25 : vector<8x8x3xf32> to vector<64x3xf32>
    %c0_21 = arith.constant 0 : index
    %c0_22 = arith.constant 0 : index
    %c2 = arith.constant 2 : index
    %c0_23 = arith.constant 0 : index
    %c0_24 = arith.constant 0 : index
    %27 = vector.load %arg4[%c0_21, %c0_22, %c2, %c0_23, %c0_24] : memref<1x3x3x3x16xf32, #tpu.memory_space<vmem>>, vector<1x1x1x3x16xf32>
    %28 = vector.shape_cast %27 : vector<1x1x1x3x16xf32> to vector<3x16xf32>
    %cst_25 = arith.constant dense<0.000000e+00> : vector<64x16xf32>
    %29 = tpu.matmul %26, %28, %cst_25 {dimension_numbers = #tpu.dot_dimension_numbers<[1], [0], [0], [1], [0, 0, 1, 1], [], []>} : vector<64x3xf32>, vector<3x16xf32>, vector<64x16xf32> -> vector<64x16xf32>
    %30 = arith.addf %24, %29 : vector<64x16xf32>
    %31 = vector.extract_strided_slice %11 {offsets = [1, 0, 0], sizes = [8, 8, 3], strides = [1, 1, 1]} : vector<10x10x3xf32> to vector<8x8x3xf32>
    %32 = vector.shape_cast %31 : vector<8x8x3xf32> to vector<64x3xf32>
    %c0_26 = arith.constant 0 : index
    %c1_27 = arith.constant 1 : index
    %c0_28 = arith.constant 0 : index
    %c0_29 = arith.constant 0 : index
    %c0_30 = arith.constant 0 : index
    %33 = vector.load %arg4[%c0_26, %c1_27, %c0_28, %c0_29, %c0_30] : memref<1x3x3x3x16xf32, #tpu.memory_space<vmem>>, vector<1x1x1x3x16xf32>
    %34 = vector.shape_cast %33 : vector<1x1x1x3x16xf32> to vector<3x16xf32>
    %cst_31 = arith.constant dense<0.000000e+00> : vector<64x16xf32>
    %35 = tpu.matmul %32, %34, %cst_31 {dimension_numbers = #tpu.dot_dimension_numbers<[1], [0], [0], [1], [0, 0, 1, 1], [], []>} : vector<64x3xf32>, vector<3x16xf32>, vector<64x16xf32> -> vector<64x16xf32>
    %36 = arith.addf %30, %35 : vector<64x16xf32>
    %37 = vector.extract_strided_slice %11 {offsets = [1, 1, 0], sizes = [8, 8, 3], strides = [1, 1, 1]} : vector<10x10x3xf32> to vector<8x8x3xf32>
    %38 = vector.shape_cast %37 : vector<8x8x3xf32> to vector<64x3xf32>
    %c0_32 = arith.constant 0 : index
    %c1_33 = arith.constant 1 : index
    %c1_34 = arith.constant 1 : index
    %c0_35 = arith.constant 0 : index
    %c0_36 = arith.constant 0 : index
    %39 = vector.load %arg4[%c0_32, %c1_33, %c1_34, %c0_35, %c0_36] : memref<1x3x3x3x16xf32, #tpu.memory_space<vmem>>, vector<1x1x1x3x16xf32>
    %40 = vector.shape_cast %39 : vector<1x1x1x3x16xf32> to vector<3x16xf32>
    %cst_37 = arith.constant dense<0.000000e+00> : vector<64x16xf32>
    %41 = tpu.matmul %38, %40, %cst_37 {dimension_numbers = #tpu.dot_dimension_numbers<[1], [0], [0], [1], [0, 0, 1, 1], [], []>} : vector<64x3xf32>, vector<3x16xf32>, vector<64x16xf32> -> vector<64x16xf32>
    %42 = arith.addf %36, %41 : vector<64x16xf32>
    %43 = vector.extract_strided_slice %11 {offsets = [1, 2, 0], sizes = [8, 8, 3], strides = [1, 1, 1]} : vector<10x10x3xf32> to vector<8x8x3xf32>
    %44 = vector.shape_cast %43 : vector<8x8x3xf32> to vector<64x3xf32>
    %c0_38 = arith.constant 0 : index
    %c1_39 = arith.constant 1 : index
    %c2_40 = arith.constant 2 : index
    %c0_41 = arith.constant 0 : index
    %c0_42 = arith.constant 0 : index
    %45 = vector.load %arg4[%c0_38, %c1_39, %c2_40, %c0_41, %c0_42] : memref<1x3x3x3x16xf32, #tpu.memory_space<vmem>>, vector<1x1x1x3x16xf32>
    %46 = vector.shape_cast %45 : vector<1x1x1x3x16xf32> to vector<3x16xf32>
    %cst_43 = arith.constant dense<0.000000e+00> : vector<64x16xf32>
    %47 = tpu.matmul %44, %46, %cst_43 {dimension_numbers = #tpu.dot_dimension_numbers<[1], [0], [0], [1], [0, 0, 1, 1], [], []>} : vector<64x3xf32>, vector<3x16xf32>, vector<64x16xf32> -> vector<64x16xf32>
    %48 = arith.addf %42, %47 : vector<64x16xf32>
    %49 = vector.extract_strided_slice %11 {offsets = [2, 0, 0], sizes = [8, 8, 3], strides = [1, 1, 1]} : vector<10x10x3xf32> to vector<8x8x3xf32>
    %50 = vector.shape_cast %49 : vector<8x8x3xf32> to vector<64x3xf32>
    %c0_44 = arith.constant 0 : index
    %c2_45 = arith.constant 2 : index
    %c0_46 = arith.constant 0 : index
    %c0_47 = arith.constant 0 : index
    %c0_48 = arith.constant 0 : index
    %51 = vector.load %arg4[%c0_44, %c2_45, %c0_46, %c0_47, %c0_48] : memref<1x3x3x3x16xf32, #tpu.memory_space<vmem>>, vector<1x1x1x3x16xf32>
    %52 = vector.shape_cast %51 : vector<1x1x1x3x16xf32> to vector<3x16xf32>
    %cst_49 = arith.constant dense<0.000000e+00> : vector<64x16xf32>
    %53 = tpu.matmul %50, %52, %cst_49 {dimension_numbers = #tpu.dot_dimension_numbers<[1], [0], [0], [1], [0, 0, 1, 1], [], []>} : vector<64x3xf32>, vector<3x16xf32>, vector<64x16xf32> -> vector<64x16xf32>
    %54 = arith.addf %48, %53 : vector<64x16xf32>
    %55 = vector.extract_strided_slice %11 {offsets = [2, 1, 0], sizes = [8, 8, 3], strides = [1, 1, 1]} : vector<10x10x3xf32> to vector<8x8x3xf32>
    %56 = vector.shape_cast %55 : vector<8x8x3xf32> to vector<64x3xf32>
    %c0_50 = arith.constant 0 : index
    %c2_51 = arith.constant 2 : index
    %c1_52 = arith.constant 1 : index
    %c0_53 = arith.constant 0 : index
    %c0_54 = arith.constant 0 : index
    %57 = vector.load %arg4[%c0_50, %c2_51, %c1_52, %c0_53, %c0_54] : memref<1x3x3x3x16xf32, #tpu.memory_space<vmem>>, vector<1x1x1x3x16xf32>
    %58 = vector.shape_cast %57 : vector<1x1x1x3x16xf32> to vector<3x16xf32>
    %cst_55 = arith.constant dense<0.000000e+00> : vector<64x16xf32>
    %59 = tpu.matmul %56, %58, %cst_55 {dimension_numbers = #tpu.dot_dimension_numbers<[1], [0], [0], [1], [0, 0, 1, 1], [], []>} : vector<64x3xf32>, vector<3x16xf32>, vector<64x16xf32> -> vector<64x16xf32>
    %60 = arith.addf %54, %59 : vector<64x16xf32>
    %61 = vector.extract_strided_slice %11 {offsets = [2, 2, 0], sizes = [8, 8, 3], strides = [1, 1, 1]} : vector<10x10x3xf32> to vector<8x8x3xf32>
    %62 = vector.shape_cast %61 : vector<8x8x3xf32> to vector<64x3xf32>
    %c0_56 = arith.constant 0 : index
    %c2_57 = arith.constant 2 : index
    %c2_58 = arith.constant 2 : index
    %c0_59 = arith.constant 0 : index
    %c0_60 = arith.constant 0 : index
    %63 = vector.load %arg4[%c0_56, %c2_57, %c2_58, %c0_59, %c0_60] : memref<1x3x3x3x16xf32, #tpu.memory_space<vmem>>, vector<1x1x1x3x16xf32>
    %64 = vector.shape_cast %63 : vector<1x1x1x3x16xf32> to vector<3x16xf32>
    %cst_61 = arith.constant dense<0.000000e+00> : vector<64x16xf32>
    %65 = tpu.matmul %62, %64, %cst_61 {dimension_numbers = #tpu.dot_dimension_numbers<[1], [0], [0], [1], [0, 0, 1, 1], [], []>} : vector<64x3xf32>, vector<3x16xf32>, vector<64x16xf32> -> vector<64x16xf32>
    %66 = arith.addf %60, %65 : vector<64x16xf32>
    %c0_62 = arith.constant 0 : index
    %c0_63 = arith.constant 0 : index
    %67 = vector.load %arg9[%c0_62, %c0_63] : memref<64x16xf32, #tpu.memory_space<vmem>>, vector<64x16xf32>
    tpu.vector_store %arg9[%c0_62, %c0_63], %66 {strides = array<i32>} : memref<64x16xf32, #tpu.memory_space<vmem>>, vector<64x16xf32>,
    %c2_i32 = arith.constant 2 : i32
    %68 = arith.cmpi eq, %arg2, %c2_i32 : i32
    %69 = arith.extui %68 : i1 to i32
    %c0_i32_64 = arith.constant 0 : i32
    %70 = arith.cmpi ne, %69, %c0_i32_64 : i32
    scf.if %70 {
      %c0_65 = arith.constant 0 : index
      %c0_66 = arith.constant 0 : index
      %71 = vector.load %arg9[%c0_65, %c0_66] : memref<64x16xf32, #tpu.memory_space<vmem>>, vector<64x16xf32>
      %c0_67 = arith.constant 0 : index
      %c0_68 = arith.constant 0 : index
      %72 = vector.load %arg5[%c0_67, %c0_68] : memref<1x16xf32, #tpu.memory_space<vmem>>, vector<1x16xf32>
      %73 = vector.broadcast %72 : vector<1x16xf32> to vector<64x16xf32>
      %74 = arith.addf %71, %73 : vector<64x16xf32>
      %c0_69 = arith.constant 0 : index
      %c0_70 = arith.constant 0 : index
      %c0_71 = arith.constant 0 : index
      %c0_72 = arith.constant 0 : index
      %75 = vector.load %arg6[%c0_69, %c0_70, %c0_71, %c0_72] : memref<1x1x64x16xf32, #tpu.memory_space<vmem>>, vector<1x1x64x16xf32>
      %76 = vector.shape_cast %75 : vector<1x1x64x16xf32> to vector<64x16xf32>
      %77 = vector.shape_cast %74 : vector<64x16xf32> to vector<1x1x64x16xf32>
      tpu.vector_store %arg6[%c0_69, %c0_70, %c0_71, %c0_72], %77 {strides = array<i32>} : memref<1x1x64x16xf32, #tpu.memory_space<vmem>>, vector<1x1x64x16xf32>,
      %c0_73 = arith.constant 0 : index
      %c0_74 = arith.constant 0 : index
      %78 = vector.load %arg7[%c0_73, %c0_74] : memref<1x16xf32, #tpu.memory_space<vmem>>, vector<1x16xf32>
      %cst_75 = arith.constant dense<0.000000e+00> : vector<16xf32>
      %79 = vector.multi_reduction <add>, %74, %cst_75 [0] : vector<64x16xf32> to vector<16xf32>
      %80 = vector.shape_cast %79 : vector<16xf32> to vector<1x16xf32>
      %81 = arith.addf %78, %80 : vector<1x16xf32>
      %c0_76 = arith.constant 0 : index
      %c0_77 = arith.constant 0 : index
      %82 = vector.load %arg7[%c0_76, %c0_77] : memref<1x16xf32, #tpu.memory_space<vmem>>, vector<1x16xf32>
      tpu.vector_store %arg7[%c0_76, %c0_77], %81 {strides = array<i32>} : memref<1x16xf32, #tpu.memory_space<vmem>>, vector<1x16xf32>,
      %c0_78 = arith.constant 0 : index
      %c0_79 = arith.constant 0 : index
      %83 = vector.load %arg8[%c0_78, %c0_79] : memref<1x16xf32, #tpu.memory_space<vmem>>, vector<1x16xf32>
      %84 = arith.mulf %74, %74 : vector<64x16xf32>
      %cst_80 = arith.constant dense<0.000000e+00> : vector<16xf32>
      %85 = vector.multi_reduction <add>, %84, %cst_80 [0] : vector<64x16xf32> to vector<16xf32>
      %86 = vector.shape_cast %85 : vector<16xf32> to vector<1x16xf32>
      %87 = arith.addf %83, %86 : vector<1x16xf32>
      %c0_81 = arith.constant 0 : index
      %c0_82 = arith.constant 0 : index
      %88 = vector.load %arg8[%c0_81, %c0_82] : memref<1x16xf32, #tpu.memory_space<vmem>>, vector<1x16xf32>
      tpu.vector_store %arg8[%c0_81, %c0_82], %87 {strides = array<i32>} : memref<1x16xf32, #tpu.memory_space<vmem>>, vector<1x16xf32>,
    } else {
    }
    return
  }
  func.func @transform_0(%arg0: i32, %arg1: i32, %arg2: i32) -> (i32, i32, i32, i32, i32) {
    %0 = arith.addi %arg1, %arg2 : i32
    %c0_i32 = arith.constant 0 : i32
    %c0_i32_0 = arith.constant 0 : i32
    %c0_i32_1 = arith.constant 0 : i32
    %c0_i32_2 = arith.constant 0 : i32
    return %arg0, %0, %c0_i32, %c0_i32_0, %c0_i32_1 : i32, i32, i32, i32, i32
  }
  func.func @transform_1(%arg0: i32, %arg1: i32, %arg2: i32) -> (i32, i32, i32, i32, i32) {
    %c0_i32 = arith.constant 0 : i32
    %c0_i32_0 = arith.constant 0 : i32
    %c0_i32_1 = arith.constant 0 : i32
    %c0_i32_2 = arith.constant 0 : i32
    %c0_i32_3 = arith.constant 0 : i32
    return %arg2, %c0_i32, %c0_i32_0, %c0_i32_1, %c0_i32_2 : i32, i32, i32, i32, i32
  }
  func.func @transform_2(%arg0: i32, %arg1: i32, %arg2: i32) -> (i32, i32) {
    %c0_i32 = arith.constant 0 : i32
    %c0_i32_0 = arith.constant 0 : i32
    %c0_i32_1 = arith.constant 0 : i32
    return %c0_i32, %c0_i32_0 : i32, i32
  }
  func.func @transform_3(%arg0: i32, %arg1: i32, %arg2: i32) -> (i32, i32, i32, i32) {
    %c0_i32 = arith.constant 0 : i32
    %c0_i32_0 = arith.constant 0 : i32
    %c0_i32_1 = arith.constant 0 : i32
    return %arg0, %arg1, %c0_i32, %c0_i32_0 : i32, i32, i32, i32
  }
  func.func @transform_4(%arg0: i32, %arg1: i32, %arg2: i32) -> (i32, i32) {
    %c0_i32 = arith.constant 0 : i32
    %c0_i32_0 = arith.constant 0 : i32
    %c0_i32_1 = arith.constant 0 : i32
    return %c0_i32, %c0_i32_0 : i32, i32
  }
  func.func @transform_5(%arg0: i32, %arg1: i32, %arg2: i32) -> (i32, i32) {
    %c0_i32 = arith.constant 0 : i32
    %c0_i32_0 = arith.constant 0 : i32
    %c0_i32_1 = arith.constant 0 : i32
    return %c0_i32, %c0_i32_0 : i32, i32
  }
}

module attributes {stable_mosaic.version = 11 : i64} {
  func.func @_conv_tap_kernel(%arg0: i32, %arg1: i32, %arg2: i32, %arg3: memref<1x1x10x10x16xf32, #tpu.memory_space<vmem>>, %arg4: memref<1x3x3x16x16xf32, #tpu.memory_space<vmem>>, %arg5: memref<1x16xf32, #tpu.memory_space<vmem>>, %arg6: memref<1x1x64x16xf32, #tpu.memory_space<vmem>>, %arg7: memref<1x16xf32, #tpu.memory_space<vmem>>, %arg8: memref<1x16xf32, #tpu.memory_space<vmem>>, %arg9: memref<64x16xf32, #tpu.memory_space<vmem>>) attributes {dimension_semantics = [#tpu.dimension_semantics<arbitrary>, #tpu.dimension_semantics<arbitrary>, #tpu.dimension_semantics<arbitrary>], iteration_bounds = array<i64: 2, 8, 3>, scalar_prefetch = 0 : i64, scratch_operands = 1 : i64, tpu.core_type = #tpu.core_type<tc>, window_params = [{transform_indices = @transform_0, window_bounds = array<i64: 1, 1, 10, 10, 16>}, {transform_indices = @transform_1, window_bounds = array<i64: 1, 3, 3, 16, 16>}, {pipeline_mode = #tpu.pipeline_mode<synchronous>, transform_indices = @transform_2, window_bounds = array<i64: 1, 16>}, {transform_indices = @transform_3, window_bounds = array<i64: 1, 1, 64, 16>}, {pipeline_mode = #tpu.pipeline_mode<synchronous>, transform_indices = @transform_4, window_bounds = array<i64: 1, 16>}, {pipeline_mode = #tpu.pipeline_mode<synchronous>, transform_indices = @transform_5, window_bounds = array<i64: 1, 16>}]} {
    %c0_i32 = arith.constant 0 : i32
    %0 = arith.cmpi eq, %arg0, %c0_i32 : i32
    %c0_i32_0 = arith.constant 0 : i32
    %1 = arith.cmpi eq, %arg1, %c0_i32_0 : i32
    %2 = arith.andi %0, %1 : i1
    %c0_i32_1 = arith.constant 0 : i32
    %3 = arith.cmpi eq, %arg2, %c0_i32_1 : i32
    %4 = arith.andi %2, %3 : i1
    %5 = arith.extui %4 : i1 to i32
    %c0_i32_2 = arith.constant 0 : i32
    %6 = arith.cmpi ne, %5, %c0_i32_2 : i32
    scf.if %6 {
      %cst_65 = arith.constant 0.000000e+00 : f32
      %71 = vector.broadcast %cst_65 : f32 to vector<1x16xf32>
      %c0_66 = arith.constant 0 : index
      %c0_67 = arith.constant 0 : index
      %72 = vector.load %arg7[%c0_66, %c0_67] : memref<1x16xf32, #tpu.memory_space<vmem>>, vector<1x16xf32>
      tpu.vector_store %arg7[%c0_66, %c0_67], %71 {strides = array<i32>} : memref<1x16xf32, #tpu.memory_space<vmem>>, vector<1x16xf32>,
      %cst_68 = arith.constant 0.000000e+00 : f32
      %73 = vector.broadcast %cst_68 : f32 to vector<1x16xf32>
      %c0_69 = arith.constant 0 : index
      %c0_70 = arith.constant 0 : index
      %74 = vector.load %arg8[%c0_69, %c0_70] : memref<1x16xf32, #tpu.memory_space<vmem>>, vector<1x16xf32>
      tpu.vector_store %arg8[%c0_69, %c0_70], %73 {strides = array<i32>} : memref<1x16xf32, #tpu.memory_space<vmem>>, vector<1x16xf32>,
    } else {
    }
    %c0_i32_3 = arith.constant 0 : i32
    %7 = arith.cmpi eq, %arg2, %c0_i32_3 : i32
    %8 = arith.extui %7 : i1 to i32
    %c0_i32_4 = arith.constant 0 : i32
    %9 = arith.cmpi ne, %8, %c0_i32_4 : i32
    scf.if %9 {
      %cst_65 = arith.constant 0.000000e+00 : f32
      %71 = vector.broadcast %cst_65 : f32 to vector<64x16xf32>
      %c0_66 = arith.constant 0 : index
      %c0_67 = arith.constant 0 : index
      %72 = vector.load %arg9[%c0_66, %c0_67] : memref<64x16xf32, #tpu.memory_space<vmem>>, vector<64x16xf32>
      tpu.vector_store %arg9[%c0_66, %c0_67], %71 {strides = array<i32>} : memref<64x16xf32, #tpu.memory_space<vmem>>, vector<64x16xf32>,
    } else {
    }
    %c0 = arith.constant 0 : index
    %c0_5 = arith.constant 0 : index
    %c0_6 = arith.constant 0 : index
    %c0_7 = arith.constant 0 : index
    %c0_8 = arith.constant 0 : index
    %10 = vector.load %arg3[%c0, %c0_5, %c0_6, %c0_7, %c0_8] : memref<1x1x10x10x16xf32, #tpu.memory_space<vmem>>, vector<1x1x10x10x16xf32>
    %11 = vector.shape_cast %10 : vector<1x1x10x10x16xf32> to vector<10x10x16xf32>
    %c0_9 = arith.constant 0 : index
    %c0_10 = arith.constant 0 : index
    %12 = vector.load %arg9[%c0_9, %c0_10] : memref<64x16xf32, #tpu.memory_space<vmem>>, vector<64x16xf32>
    %13 = vector.extract_strided_slice %11 {offsets = [0, 0, 0], sizes = [8, 8, 16], strides = [1, 1, 1]} : vector<10x10x16xf32> to vector<8x8x16xf32>
    %14 = vector.shape_cast %13 : vector<8x8x16xf32> to vector<64x16xf32>
    %c0_11 = arith.constant 0 : index
    %c0_12 = arith.constant 0 : index
    %c0_13 = arith.constant 0 : index
    %c0_14 = arith.constant 0 : index
    %c0_15 = arith.constant 0 : index
    %15 = vector.load %arg4[%c0_11, %c0_12, %c0_13, %c0_14, %c0_15] : memref<1x3x3x16x16xf32, #tpu.memory_space<vmem>>, vector<1x1x1x16x16xf32>
    %16 = vector.shape_cast %15 : vector<1x1x1x16x16xf32> to vector<16x16xf32>
    %cst = arith.constant dense<0.000000e+00> : vector<64x16xf32>
    %17 = tpu.matmul %14, %16, %cst {dimension_numbers = #tpu.dot_dimension_numbers<[1], [0], [0], [1], [0, 0, 1, 1], [], []>} : vector<64x16xf32>, vector<16x16xf32>, vector<64x16xf32> -> vector<64x16xf32>
    %18 = arith.addf %12, %17 : vector<64x16xf32>
    %19 = vector.extract_strided_slice %11 {offsets = [0, 1, 0], sizes = [8, 8, 16], strides = [1, 1, 1]} : vector<10x10x16xf32> to vector<8x8x16xf32>
    %20 = vector.shape_cast %19 : vector<8x8x16xf32> to vector<64x16xf32>
    %c0_16 = arith.constant 0 : index
    %c0_17 = arith.constant 0 : index
    %c1 = arith.constant 1 : index
    %c0_18 = arith.constant 0 : index
    %c0_19 = arith.constant 0 : index
    %21 = vector.load %arg4[%c0_16, %c0_17, %c1, %c0_18, %c0_19] : memref<1x3x3x16x16xf32, #tpu.memory_space<vmem>>, vector<1x1x1x16x16xf32>
    %22 = vector.shape_cast %21 : vector<1x1x1x16x16xf32> to vector<16x16xf32>
    %cst_20 = arith.constant dense<0.000000e+00> : vector<64x16xf32>
    %23 = tpu.matmul %20, %22, %cst_20 {dimension_numbers = #tpu.dot_dimension_numbers<[1], [0], [0], [1], [0, 0, 1, 1], [], []>} : vector<64x16xf32>, vector<16x16xf32>, vector<64x16xf32> -> vector<64x16xf32>
    %24 = arith.addf %18, %23 : vector<64x16xf32>
    %25 = vector.extract_strided_slice %11 {offsets = [0, 2, 0], sizes = [8, 8, 16], strides = [1, 1, 1]} : vector<10x10x16xf32> to vector<8x8x16xf32>
    %26 = vector.shape_cast %25 : vector<8x8x16xf32> to vector<64x16xf32>
    %c0_21 = arith.constant 0 : index
    %c0_22 = arith.constant 0 : index
    %c2 = arith.constant 2 : index
    %c0_23 = arith.constant 0 : index
    %c0_24 = arith.constant 0 : index
    %27 = vector.load %arg4[%c0_21, %c0_22, %c2, %c0_23, %c0_24] : memref<1x3x3x16x16xf32, #tpu.memory_space<vmem>>, vector<1x1x1x16x16xf32>
    %28 = vector.shape_cast %27 : vector<1x1x1x16x16xf32> to vector<16x16xf32>
    %cst_25 = arith.constant dense<0.000000e+00> : vector<64x16xf32>
    %29 = tpu.matmul %26, %28, %cst_25 {dimension_numbers = #tpu.dot_dimension_numbers<[1], [0], [0], [1], [0, 0, 1, 1], [], []>} : vector<64x16xf32>, vector<16x16xf32>, vector<64x16xf32> -> vector<64x16xf32>
    %30 = arith.addf %24, %29 : vector<64x16xf32>
    %31 = vector.extract_strided_slice %11 {offsets = [1, 0, 0], sizes = [8, 8, 16], strides = [1, 1, 1]} : vector<10x10x16xf32> to vector<8x8x16xf32>
    %32 = vector.shape_cast %31 : vector<8x8x16xf32> to vector<64x16xf32>
    %c0_26 = arith.constant 0 : index
    %c1_27 = arith.constant 1 : index
    %c0_28 = arith.constant 0 : index
    %c0_29 = arith.constant 0 : index
    %c0_30 = arith.constant 0 : index
    %33 = vector.load %arg4[%c0_26, %c1_27, %c0_28, %c0_29, %c0_30] : memref<1x3x3x16x16xf32, #tpu.memory_space<vmem>>, vector<1x1x1x16x16xf32>
    %34 = vector.shape_cast %33 : vector<1x1x1x16x16xf32> to vector<16x16xf32>
    %cst_31 = arith.constant dense<0.000000e+00> : vector<64x16xf32>
    %35 = tpu.matmul %32, %34, %cst_31 {dimension_numbers = #tpu.dot_dimension_numbers<[1], [0], [0], [1], [0, 0, 1, 1], [], []>} : vector<64x16xf32>, vector<16x16xf32>, vector<64x16xf32> -> vector<64x16xf32>
    %36 = arith.addf %30, %35 : vector<64x16xf32>
    %37 = vector.extract_strided_slice %11 {offsets = [1, 1, 0], sizes = [8, 8, 16], strides = [1, 1, 1]} : vector<10x10x16xf32> to vector<8x8x16xf32>
    %38 = vector.shape_cast %37 : vector<8x8x16xf32> to vector<64x16xf32>
    %c0_32 = arith.constant 0 : index
    %c1_33 = arith.constant 1 : index
    %c1_34 = arith.constant 1 : index
    %c0_35 = arith.constant 0 : index
    %c0_36 = arith.constant 0 : index
    %39 = vector.load %arg4[%c0_32, %c1_33, %c1_34, %c0_35, %c0_36] : memref<1x3x3x16x16xf32, #tpu.memory_space<vmem>>, vector<1x1x1x16x16xf32>
    %40 = vector.shape_cast %39 : vector<1x1x1x16x16xf32> to vector<16x16xf32>
    %cst_37 = arith.constant dense<0.000000e+00> : vector<64x16xf32>
    %41 = tpu.matmul %38, %40, %cst_37 {dimension_numbers = #tpu.dot_dimension_numbers<[1], [0], [0], [1], [0, 0, 1, 1], [], []>} : vector<64x16xf32>, vector<16x16xf32>, vector<64x16xf32> -> vector<64x16xf32>
    %42 = arith.addf %36, %41 : vector<64x16xf32>
    %43 = vector.extract_strided_slice %11 {offsets = [1, 2, 0], sizes = [8, 8, 16], strides = [1, 1, 1]} : vector<10x10x16xf32> to vector<8x8x16xf32>
    %44 = vector.shape_cast %43 : vector<8x8x16xf32> to vector<64x16xf32>
    %c0_38 = arith.constant 0 : index
    %c1_39 = arith.constant 1 : index
    %c2_40 = arith.constant 2 : index
    %c0_41 = arith.constant 0 : index
    %c0_42 = arith.constant 0 : index
    %45 = vector.load %arg4[%c0_38, %c1_39, %c2_40, %c0_41, %c0_42] : memref<1x3x3x16x16xf32, #tpu.memory_space<vmem>>, vector<1x1x1x16x16xf32>
    %46 = vector.shape_cast %45 : vector<1x1x1x16x16xf32> to vector<16x16xf32>
    %cst_43 = arith.constant dense<0.000000e+00> : vector<64x16xf32>
    %47 = tpu.matmul %44, %46, %cst_43 {dimension_numbers = #tpu.dot_dimension_numbers<[1], [0], [0], [1], [0, 0, 1, 1], [], []>} : vector<64x16xf32>, vector<16x16xf32>, vector<64x16xf32> -> vector<64x16xf32>
    %48 = arith.addf %42, %47 : vector<64x16xf32>
    %49 = vector.extract_strided_slice %11 {offsets = [2, 0, 0], sizes = [8, 8, 16], strides = [1, 1, 1]} : vector<10x10x16xf32> to vector<8x8x16xf32>
    %50 = vector.shape_cast %49 : vector<8x8x16xf32> to vector<64x16xf32>
    %c0_44 = arith.constant 0 : index
    %c2_45 = arith.constant 2 : index
    %c0_46 = arith.constant 0 : index
    %c0_47 = arith.constant 0 : index
    %c0_48 = arith.constant 0 : index
    %51 = vector.load %arg4[%c0_44, %c2_45, %c0_46, %c0_47, %c0_48] : memref<1x3x3x16x16xf32, #tpu.memory_space<vmem>>, vector<1x1x1x16x16xf32>
    %52 = vector.shape_cast %51 : vector<1x1x1x16x16xf32> to vector<16x16xf32>
    %cst_49 = arith.constant dense<0.000000e+00> : vector<64x16xf32>
    %53 = tpu.matmul %50, %52, %cst_49 {dimension_numbers = #tpu.dot_dimension_numbers<[1], [0], [0], [1], [0, 0, 1, 1], [], []>} : vector<64x16xf32>, vector<16x16xf32>, vector<64x16xf32> -> vector<64x16xf32>
    %54 = arith.addf %48, %53 : vector<64x16xf32>
    %55 = vector.extract_strided_slice %11 {offsets = [2, 1, 0], sizes = [8, 8, 16], strides = [1, 1, 1]} : vector<10x10x16xf32> to vector<8x8x16xf32>
    %56 = vector.shape_cast %55 : vector<8x8x16xf32> to vector<64x16xf32>
    %c0_50 = arith.constant 0 : index
    %c2_51 = arith.constant 2 : index
    %c1_52 = arith.constant 1 : index
    %c0_53 = arith.constant 0 : index
    %c0_54 = arith.constant 0 : index
    %57 = vector.load %arg4[%c0_50, %c2_51, %c1_52, %c0_53, %c0_54] : memref<1x3x3x16x16xf32, #tpu.memory_space<vmem>>, vector<1x1x1x16x16xf32>
    %58 = vector.shape_cast %57 : vector<1x1x1x16x16xf32> to vector<16x16xf32>
    %cst_55 = arith.constant dense<0.000000e+00> : vector<64x16xf32>
    %59 = tpu.matmul %56, %58, %cst_55 {dimension_numbers = #tpu.dot_dimension_numbers<[1], [0], [0], [1], [0, 0, 1, 1], [], []>} : vector<64x16xf32>, vector<16x16xf32>, vector<64x16xf32> -> vector<64x16xf32>
    %60 = arith.addf %54, %59 : vector<64x16xf32>
    %61 = vector.extract_strided_slice %11 {offsets = [2, 2, 0], sizes = [8, 8, 16], strides = [1, 1, 1]} : vector<10x10x16xf32> to vector<8x8x16xf32>
    %62 = vector.shape_cast %61 : vector<8x8x16xf32> to vector<64x16xf32>
    %c0_56 = arith.constant 0 : index
    %c2_57 = arith.constant 2 : index
    %c2_58 = arith.constant 2 : index
    %c0_59 = arith.constant 0 : index
    %c0_60 = arith.constant 0 : index
    %63 = vector.load %arg4[%c0_56, %c2_57, %c2_58, %c0_59, %c0_60] : memref<1x3x3x16x16xf32, #tpu.memory_space<vmem>>, vector<1x1x1x16x16xf32>
    %64 = vector.shape_cast %63 : vector<1x1x1x16x16xf32> to vector<16x16xf32>
    %cst_61 = arith.constant dense<0.000000e+00> : vector<64x16xf32>
    %65 = tpu.matmul %62, %64, %cst_61 {dimension_numbers = #tpu.dot_dimension_numbers<[1], [0], [0], [1], [0, 0, 1, 1], [], []>} : vector<64x16xf32>, vector<16x16xf32>, vector<64x16xf32> -> vector<64x16xf32>
    %66 = arith.addf %60, %65 : vector<64x16xf32>
    %c0_62 = arith.constant 0 : index
    %c0_63 = arith.constant 0 : index
    %67 = vector.load %arg9[%c0_62, %c0_63] : memref<64x16xf32, #tpu.memory_space<vmem>>, vector<64x16xf32>
    tpu.vector_store %arg9[%c0_62, %c0_63], %66 {strides = array<i32>} : memref<64x16xf32, #tpu.memory_space<vmem>>, vector<64x16xf32>,
    %c2_i32 = arith.constant 2 : i32
    %68 = arith.cmpi eq, %arg2, %c2_i32 : i32
    %69 = arith.extui %68 : i1 to i32
    %c0_i32_64 = arith.constant 0 : i32
    %70 = arith.cmpi ne, %69, %c0_i32_64 : i32
    scf.if %70 {
      %c0_65 = arith.constant 0 : index
      %c0_66 = arith.constant 0 : index
      %71 = vector.load %arg9[%c0_65, %c0_66] : memref<64x16xf32, #tpu.memory_space<vmem>>, vector<64x16xf32>
      %c0_67 = arith.constant 0 : index
      %c0_68 = arith.constant 0 : index
      %72 = vector.load %arg5[%c0_67, %c0_68] : memref<1x16xf32, #tpu.memory_space<vmem>>, vector<1x16xf32>
      %73 = vector.broadcast %72 : vector<1x16xf32> to vector<64x16xf32>
      %74 = arith.addf %71, %73 : vector<64x16xf32>
      %c0_69 = arith.constant 0 : index
      %c0_70 = arith.constant 0 : index
      %c0_71 = arith.constant 0 : index
      %c0_72 = arith.constant 0 : index
      %75 = vector.load %arg6[%c0_69, %c0_70, %c0_71, %c0_72] : memref<1x1x64x16xf32, #tpu.memory_space<vmem>>, vector<1x1x64x16xf32>
      %76 = vector.shape_cast %75 : vector<1x1x64x16xf32> to vector<64x16xf32>
      %77 = vector.shape_cast %74 : vector<64x16xf32> to vector<1x1x64x16xf32>
      tpu.vector_store %arg6[%c0_69, %c0_70, %c0_71, %c0_72], %77 {strides = array<i32>} : memref<1x1x64x16xf32, #tpu.memory_space<vmem>>, vector<1x1x64x16xf32>,
      %c0_73 = arith.constant 0 : index
      %c0_74 = arith.constant 0 : index
      %78 = vector.load %arg7[%c0_73, %c0_74] : memref<1x16xf32, #tpu.memory_space<vmem>>, vector<1x16xf32>
      %cst_75 = arith.constant dense<0.000000e+00> : vector<16xf32>
      %79 = vector.multi_reduction <add>, %74, %cst_75 [0] : vector<64x16xf32> to vector<16xf32>
      %80 = vector.shape_cast %79 : vector<16xf32> to vector<1x16xf32>
      %81 = arith.addf %78, %80 : vector<1x16xf32>
      %c0_76 = arith.constant 0 : index
      %c0_77 = arith.constant 0 : index
      %82 = vector.load %arg7[%c0_76, %c0_77] : memref<1x16xf32, #tpu.memory_space<vmem>>, vector<1x16xf32>
      tpu.vector_store %arg7[%c0_76, %c0_77], %81 {strides = array<i32>} : memref<1x16xf32, #tpu.memory_space<vmem>>, vector<1x16xf32>,
      %c0_78 = arith.constant 0 : index
      %c0_79 = arith.constant 0 : index
      %83 = vector.load %arg8[%c0_78, %c0_79] : memref<1x16xf32, #tpu.memory_space<vmem>>, vector<1x16xf32>
      %84 = arith.mulf %74, %74 : vector<64x16xf32>
      %cst_80 = arith.constant dense<0.000000e+00> : vector<16xf32>
      %85 = vector.multi_reduction <add>, %84, %cst_80 [0] : vector<64x16xf32> to vector<16xf32>
      %86 = vector.shape_cast %85 : vector<16xf32> to vector<1x16xf32>
      %87 = arith.addf %83, %86 : vector<1x16xf32>
      %c0_81 = arith.constant 0 : index
      %c0_82 = arith.constant 0 : index
      %88 = vector.load %arg8[%c0_81, %c0_82] : memref<1x16xf32, #tpu.memory_space<vmem>>, vector<1x16xf32>
      tpu.vector_store %arg8[%c0_81, %c0_82], %87 {strides = array<i32>} : memref<1x16xf32, #tpu.memory_space<vmem>>, vector<1x16xf32>,
    } else {
    }
    return
  }
  func.func @transform_0(%arg0: i32, %arg1: i32, %arg2: i32) -> (i32, i32, i32, i32, i32) {
    %0 = arith.addi %arg1, %arg2 : i32
    %c0_i32 = arith.constant 0 : i32
    %c0_i32_0 = arith.constant 0 : i32
    %c0_i32_1 = arith.constant 0 : i32
    %c0_i32_2 = arith.constant 0 : i32
    return %arg0, %0, %c0_i32, %c0_i32_0, %c0_i32_1 : i32, i32, i32, i32, i32
  }
  func.func @transform_1(%arg0: i32, %arg1: i32, %arg2: i32) -> (i32, i32, i32, i32, i32) {
    %c0_i32 = arith.constant 0 : i32
    %c0_i32_0 = arith.constant 0 : i32
    %c0_i32_1 = arith.constant 0 : i32
    %c0_i32_2 = arith.constant 0 : i32
    %c0_i32_3 = arith.constant 0 : i32
    return %arg2, %c0_i32, %c0_i32_0, %c0_i32_1, %c0_i32_2 : i32, i32, i32, i32, i32
  }
  func.func @transform_2(%arg0: i32, %arg1: i32, %arg2: i32) -> (i32, i32) {
    %c0_i32 = arith.constant 0 : i32
    %c0_i32_0 = arith.constant 0 : i32
    %c0_i32_1 = arith.constant 0 : i32
    return %c0_i32, %c0_i32_0 : i32, i32
  }
  func.func @transform_3(%arg0: i32, %arg1: i32, %arg2: i32) -> (i32, i32, i32, i32) {
    %c0_i32 = arith.constant 0 : i32
    %c0_i32_0 = arith.constant 0 : i32
    %c0_i32_1 = arith.constant 0 : i32
    return %arg0, %arg1, %c0_i32, %c0_i32_0 : i32, i32, i32, i32
  }
  func.func @transform_4(%arg0: i32, %arg1: i32, %arg2: i32) -> (i32, i32) {
    %c0_i32 = arith.constant 0 : i32
    %c0_i32_0 = arith.constant 0 : i32
    %c0_i32_1 = arith.constant 0 : i32
    return %c0_i32, %c0_i32_0 : i32, i32
  }
  func.func @transform_5(%arg0: i32, %arg1: i32, %arg2: i32) -> (i32, i32) {
    %c0_i32 = arith.constant 0 : i32
    %c0_i32_0 = arith.constant 0 : i32
    %c0_i32_1 = arith.constant 0 : i32
    return %c0_i32, %c0_i32_0 : i32, i32
  }
}

module attributes {stable_mosaic.version = 11 : i64} {
  func.func @_bn_relu_add_kernel(%arg0: i32, %arg1: memref<128x128xf32, #tpu.memory_space<vmem>>, %arg2: memref<128x128xf32, #tpu.memory_space<vmem>>, %arg3: memref<1x128xf32, #tpu.memory_space<vmem>>, %arg4: memref<1x128xf32, #tpu.memory_space<vmem>>, %arg5: memref<1x128xf32, #tpu.memory_space<vmem>>, %arg6: memref<1x128xf32, #tpu.memory_space<vmem>>, %arg7: memref<128x128xf32, #tpu.memory_space<vmem>>) attributes {dimension_semantics = [#tpu.dimension_semantics<parallel>], iteration_bounds = array<i64: 1>, scalar_prefetch = 0 : i64, scratch_operands = 0 : i64, tpu.core_type = #tpu.core_type<tc>, window_params = [{transform_indices = @transform_0, window_bounds = array<i64: 128, 128>}, {transform_indices = @transform_1, window_bounds = array<i64: 128, 128>}, {pipeline_mode = #tpu.pipeline_mode<synchronous>, transform_indices = @transform_2, window_bounds = array<i64: 1, 128>}, {pipeline_mode = #tpu.pipeline_mode<synchronous>, transform_indices = @transform_3, window_bounds = array<i64: 1, 128>}, {pipeline_mode = #tpu.pipeline_mode<synchronous>, transform_indices = @transform_4, window_bounds = array<i64: 1, 128>}, {pipeline_mode = #tpu.pipeline_mode<synchronous>, transform_indices = @transform_5, window_bounds = array<i64: 1, 128>}, {transform_indices = @transform_6, window_bounds = array<i64: 128, 128>}]} {
    %c0 = arith.constant 0 : index
    %c0_0 = arith.constant 0 : index
    %0 = vector.load %arg1[%c0, %c0_0] : memref<128x128xf32, #tpu.memory_space<vmem>>, vector<128x128xf32>
    %c0_1 = arith.constant 0 : index
    %c0_2 = arith.constant 0 : index
    %1 = vector.load %arg3[%c0_1, %c0_2] : memref<1x128xf32, #tpu.memory_space<vmem>>, vector<1x128xf32>
    %2 = vector.broadcast %1 : vector<1x128xf32> to vector<128x128xf32>
    %3 = arith.mulf %0, %2 : vector<128x128xf32>
    %c0_3 = arith.constant 0 : index
    %c0_4 = arith.constant 0 : index
    %4 = vector.load %arg4[%c0_3, %c0_4] : memref<1x128xf32, #tpu.memory_space<vmem>>, vector<1x128xf32>
    %5 = vector.broadcast %4 : vector<1x128xf32> to vector<128x128xf32>
    %6 = arith.addf %3, %5 : vector<128x128xf32>
    %cst = arith.constant 0.000000e+00 : f32
    %7 = vector.broadcast %cst : f32 to vector<128x128xf32>
    %8 = arith.maximumf %6, %7 : vector<128x128xf32>
    %c0_5 = arith.constant 0 : index
    %c0_6 = arith.constant 0 : index
    %9 = vector.load %arg2[%c0_5, %c0_6] : memref<128x128xf32, #tpu.memory_space<vmem>>, vector<128x128xf32>
    %c0_7 = arith.constant 0 : index
    %c0_8 = arith.constant 0 : index
    %10 = vector.load %arg5[%c0_7, %c0_8] : memref<1x128xf32, #tpu.memory_space<vmem>>, vector<1x128xf32>
    %11 = vector.broadcast %10 : vector<1x128xf32> to vector<128x128xf32>
    %12 = arith.mulf %9, %11 : vector<128x128xf32>
    %c0_9 = arith.constant 0 : index
    %c0_10 = arith.constant 0 : index
    %13 = vector.load %arg6[%c0_9, %c0_10] : memref<1x128xf32, #tpu.memory_space<vmem>>, vector<1x128xf32>
    %14 = vector.broadcast %13 : vector<1x128xf32> to vector<128x128xf32>
    %15 = arith.addf %12, %14 : vector<128x128xf32>
    %cst_11 = arith.constant 0.000000e+00 : f32
    %16 = vector.broadcast %cst_11 : f32 to vector<128x128xf32>
    %17 = arith.maximumf %15, %16 : vector<128x128xf32>
    %18 = arith.addf %8, %17 : vector<128x128xf32>
    %c0_12 = arith.constant 0 : index
    %c0_13 = arith.constant 0 : index
    %19 = vector.load %arg7[%c0_12, %c0_13] : memref<128x128xf32, #tpu.memory_space<vmem>>, vector<128x128xf32>
    tpu.vector_store %arg7[%c0_12, %c0_13], %18 {strides = array<i32>} : memref<128x128xf32, #tpu.memory_space<vmem>>, vector<128x128xf32>,
    return
  }
  func.func @transform_0(%arg0: i32) -> (i32, i32) {
    %c0_i32 = arith.constant 0 : i32
    %c0_i32_0 = arith.constant 0 : i32
    return %arg0, %c0_i32 : i32, i32
  }
  func.func @transform_1(%arg0: i32) -> (i32, i32) {
    %c0_i32 = arith.constant 0 : i32
    %c0_i32_0 = arith.constant 0 : i32
    return %arg0, %c0_i32 : i32, i32
  }
  func.func @transform_2(%arg0: i32) -> (i32, i32) {
    %c0_i32 = arith.constant 0 : i32
    %c0_i32_0 = arith.constant 0 : i32
    %c0_i32_1 = arith.constant 0 : i32
    return %c0_i32, %c0_i32_0 : i32, i32
  }
  func.func @transform_3(%arg0: i32) -> (i32, i32) {
    %c0_i32 = arith.constant 0 : i32
    %c0_i32_0 = arith.constant 0 : i32
    %c0_i32_1 = arith.constant 0 : i32
    return %c0_i32, %c0_i32_0 : i32, i32
  }
  func.func @transform_4(%arg0: i32) -> (i32, i32) {
    %c0_i32 = arith.constant 0 : i32
    %c0_i32_0 = arith.constant 0 : i32
    %c0_i32_1 = arith.constant 0 : i32
    return %c0_i32, %c0_i32_0 : i32, i32
  }
  func.func @transform_5(%arg0: i32) -> (i32, i32) {
    %c0_i32 = arith.constant 0 : i32
    %c0_i32_0 = arith.constant 0 : i32
    %c0_i32_1 = arith.constant 0 : i32
    return %c0_i32, %c0_i32_0 : i32, i32
  }
  func.func @transform_6(%arg0: i32) -> (i32, i32) {
    %c0_i32 = arith.constant 0 : i32
    %c0_i32_0 = arith.constant 0 : i32
    return %arg0, %c0_i32 : i32, i32
  }
}

</mosaic_0001>

<llo_original>
// kernel: res_conv_forward.3
$region0: #{res_conv_forward.3}
  #allocation0 [shape = 'u32[]', space=smem, size = 0x4, offset = 0x4, fixed_abs, tag = 'smem constant byte address 0x4 - core index']
  #allocation1 [shape = 'u32[144,128]{1,0:T(1,128)}', space=vmem, size = 0x12000, scoped, tag = 'internal scratch']
  #allocation2 [shape = 'f32[64,16]{1,0:T(8,128)}', space=vmem, size = 0x8000, scoped, tag = 'scratch operand']
  %s0 = inlined_call_operand.vmem [shape: f32[2,10,10,10,3], index: 0, kind: input, shape index: {}]
  %s1 = inlined_call_operand.vmem [shape: f32[3,3,3,3,16], index: 1, kind: input, shape index: {}]
  %s2 = inlined_call_operand.vmem [shape: f32[1,16], index: 2, kind: input, shape index: {}]
  %s3 = inlined_call_operand.vmem [shape: f32[2,8,64,16], index: 3, kind: output, shape index: {0}]
  %s4 = inlined_call_operand.vmem [shape: f32[1,16], index: 4, kind: output, shape index: {1}]
  %s5 = inlined_call_operand.vmem [shape: f32[1,16], index: 5, kind: output, shape index: {2}]
  %6 = xla_tuple %s3, %s4, %s5
  %s7 = sld [smem:[#allocation0]]
  $region73: #{res_conv_forward.3} parent=0
    _
  %s9 = ssub.s32 1, %s7
  %s10 = scalar_select 0, %s9, %s7
  loop: start=0, step=1, limit=50
  $region2: #{res_conv_forward.3} parent=0 // loop_pre_header
    _
  $region3: #{res_conv_forward.3} parent=0 // loop_header
    %s12 = sphi 0, %s16
    %p13 = scmp.ge.s32.totalorder %s12, 50
    %s19 = sphi 0, %s38
    %s20 = sphi 0, %s34
    %s21 = sphi 0, %s30
    %s22 = sphi 0, %s19
    %s23 = sphi 0, %s20
    %s24 = sphi 0, %s21
    %s25 = sphi 0, %s22
    %s26 = sphi 0, %s23
    %s27 = sphi 0, %s24
    %s45 = sphi 0, %s47
    %s48 = sphi 0, %s45
    %s49 = sphi 0, %s48
    %s65 = sphi 0, %s49
    %s71 = sphi 0, %s73
    %s74 = sphi 0, %s71
    %s75 = sphi 0, %s74
    %s91 = sphi 0, %s75
    %s95 = sphi 0, %s95
    %s97 = sphi 0, %s95
    %s98 = sphi 0, %s97
    %s112 = sphi 0, %s98
    %s120 = sphi 0, %s122
    %s123 = sphi 0, %s120
    %s124 = sphi 0, %s123
    %s140 = sphi 0, %s124
    %s144 = sphi 0, %s144
    %s146 = sphi 0, %s144
    %s147 = sphi 0, %s146
    %s161 = sphi 0, %s147
    %s165 = sphi 0, %s165
    %s167 = sphi 0, %s165
    %s168 = sphi 0, %s167
    %s182 = sphi 0, %s168
  $region4: #{res_conv_forward.3} parent=0 // loop_header_branch
    %15 = sbr.rel (%p13) target = $region8
  $region5: #{res_conv_forward.3} parent=0 // loop_body
    %s17 = ssub.s32 %s12, 1
    %s18 = ssub.s32 %s12, 2
    %s28 = sadd.s32 1, %s21
    %p29 = scmp.ge.s32.totalorder %s28, 3
    %s30 = scalar_select %p29, 0, %s28
    %s31 = sadd.s32 1, %s20
    %s32 = scalar_select %p29, %s31, %s20
    %p33 = scmp.ge.s32.totalorder %s32, 8
    %s34 = scalar_select %p33, 0, %s32
    %s35 = sadd.s32 1, %s19
    %s36 = scalar_select %p33, %s35, %s19
    %p37 = scmp.ge.s32.totalorder %s36, 2
    %s38 = scalar_select %p37, 0, %s36
    %s39 = sadd.s32 %s20, %s21
    %s40 = sadd.s32 %s34, %s30
    %s41 = ssub.s32 %s19, %s38
    %s42 = ssub.s32 %s39, %s40
    %s43 = sor.u32 %s41, %s42
    %p44 = scmp.eq.s32.totalorder %s43, 0
    %s46 = sadd.s32 %s45, 1
    %s47 = scalar_select %p44, %s45, %s46
    %p50 = pneg %p44
    %p51 = scmp.eq.s32.totalorder %s12, 47
    %p52 = por %p50, %p51
    %p53 = scmp.ne.s32.totalorder %s45, %s48
    %p54 = scmp.eq.s32.totalorder %s12, 0
    %p55 = por %p53, %p54
    %p56 = scmp.ne.s32.totalorder %s45, %s48
    %p57 = scmp.eq.s32.totalorder %s17, 47
    %p58 = por %p56, %p57
    %p59 = scmp.ne.s32.totalorder %s48, %s49
    %p60 = scmp.eq.s32.totalorder %s17, 0
    %p61 = por %p59, %p60
    %p62 = scmp.ne.s32.totalorder %s48, %s49
    %p63 = scmp.eq.s32.totalorder %s18, 47
    %p64 = por %p62, %p63
    %p66 = scmp.ne.s32.totalorder %s49, %s65
    %p67 = scmp.eq.s32.totalorder %s18, 0
    %p68 = por %p66, %p67
    %s69 = ssub.s32 %s21, %s30
    %p70 = scmp.eq.s32.totalorder %s69, 0
    %s72 = sadd.s32 %s71, 1
    %s73 = scalar_select %p70, %s71, %s72
    %p76 = pneg %p70
    %p77 = scmp.eq.s32.totalorder %s12, 47
    %p78 = por %p76, %p77
    %p79 = scmp.ne.s32.totalorder %s71, %s74
    %p80 = scmp.eq.s32.totalorder %s12, 0
    %p81 = por %p79, %p80
    %p82 = scmp.ne.s32.totalorder %s71, %s74
    %p83 = scmp.eq.s32.totalorder %s17, 47
    %p84 = por %p82, %p83
    %p85 = scmp.ne.s32.totalorder %s74, %s75
    %p86 = scmp.eq.s32.totalorder %s17, 0
    %p87 = por %p85, %p86
    %p88 = scmp.ne.s32.totalorder %s74, %s75
    %p89 = scmp.eq.s32.totalorder %s18, 47
    %p90 = por %p88, %p89
    %p92 = scmp.ne.s32.totalorder %s75, %s91
    %p93 = scmp.eq.s32.totalorder %s18, 0
    %p94 = por %p92, %p93
    %s96 = sadd.s32 %s95, 1
    %p99 = scmp.eq.s32.totalorder %s12, 47
    %p100 = scmp.ne.s32.totalorder %s95, %s97
    %p101 = scmp.eq.s32.totalorder %s12, 0
    %p102 = por %p100, %p101
    %p103 = scmp.ne.s32.totalorder %s95, %s97
    %p104 = scmp.eq.s32.totalorder %s17, 47
    %p105 = por %p103, %p104
    %p106 = scmp.ne.s32.totalorder %s97, %s98
    %p107 = scmp.eq.s32.totalorder %s17, 0
    %p108 = por %p106, %p107
    %p109 = scmp.ne.s32.totalorder %s97, %s98
    %p110 = scmp.eq.s32.totalorder %s18, 47
    %p111 = por %p109, %p110
    %p113 = scmp.ne.s32.totalorder %s98, %s112
    %p114 = scmp.eq.s32.totalorder %s18, 0
    %p115 = por %p113, %p114
    %s116 = ssub.s32 %s19, %s38
    %s117 = ssub.s32 %s20, %s34
    %s118 = sor.u32 %s116, %s117
    %p119 = scmp.eq.s32.totalorder %s118, 0
    %s121 = sadd.s32 %s120, 1
    %s122 = scalar_select %p119, %s120, %s121
    %p125 = pneg %p119
    %p126 = scmp.eq.s32.totalorder %s12, 47
    %p127 = por %p125, %p126
    %p128 = scmp.ne.s32.totalorder %s120, %s123
    %p129 = scmp.eq.s32.totalorder %s12, 0
    %p130 = por %p128, %p129
    %p131 = scmp.ne.s32.totalorder %s120, %s123
    %p132 = scmp.eq.s32.totalorder %s17, 47
    %p133 = por %p131, %p132
    %p134 = scmp.ne.s32.totalorder %s123, %s124
    %p135 = scmp.eq.s32.totalorder %s17, 0
    %p136 = por %p134, %p135
    %p137 = scmp.ne.s32.totalorder %s123, %s124
    %p138 = scmp.eq.s32.totalorder %s18, 47
    %p139 = por %p137, %p138
    %p141 = scmp.ne.s32.totalorder %s124, %s140
    %p142 = scmp.eq.s32.totalorder %s18, 0
    %p143 = por %p141, %p142
    %s145 = sadd.s32 %s144, 1
    %p148 = scmp.eq.s32.totalorder %s12, 47
    %p149 = scmp.ne.s32.totalorder %s144, %s146
    %p150 = scmp.eq.s32.totalorder %s12, 0
    %p151 = por %p149, %p150
    %p152 = scmp.ne.s32.totalorder %s144, %s146
    %p153 = scmp.eq.s32.totalorder %s17, 47
    %p154 = por %p152, %p153
    %p155 = scmp.ne.s32.totalorder %s146, %s147
    %p156 = scmp.eq.s32.totalorder %s17, 0
    %p157 = por %p155, %p156
    %p158 = scmp.ne.s32.totalorder %s146, %s147
    %p159 = scmp.eq.s32.totalorder %s18, 47
    %p160 = por %p158, %p159
    %p162 = scmp.ne.s32.totalorder %s147, %s161
    %p163 = scmp.eq.s32.totalorder %s18, 0
    %p164 = por %p162, %p163
    %s166 = sadd.s32 %s165, 1
    %p169 = scmp.eq.s32.totalorder %s12, 47
    %p170 = scmp.ne.s32.totalorder %s165, %s167
    %p171 = scmp.eq.s32.totalorder %s12, 0
    %p172 = por %p170, %p171
    %p173 = scmp.ne.s32.totalorder %s165, %s167
    %p174 = scmp.eq.s32.totalorder %s17, 47
    %p175 = por %p173, %p174
    %p176 = scmp.ne.s32.totalorder %s167, %s168
    %p177 = scmp.eq.s32.totalorder %s17, 0
    %p178 = por %p176, %p177
    %p179 = scmp.ne.s32.totalorder %s167, %s168
    %p180 = scmp.eq.s32.totalorder %s18, 47
    %p181 = por %p179, %p180
    %p183 = scmp.ne.s32.totalorder %s168, %s182
    %p184 = scmp.eq.s32.totalorder %s18, 0
    %p185 = por %p183, %p184
    %p186 = scmp.le.s32.totalorder 1, %s12
    %p187 = scmp.lt.s32.totalorder %s12, 49
    %p188 = pnand %p186, %p187
    %p189 = pneg %p188
    // Predicated region
    $region9: #{res_conv_forward.3} parent=5 // pred_check
      _
    $region10: #{res_conv_forward.3} parent=5 // pred_check_branch
      %191 = sbr.rel (%p188) target = $region12
    $region11: #{res_conv_forward.3} parent=5 // pred_region
      %s192 = ssub.s32 %s12, 1
      // Predicated region
      $region13: #{res_conv_forward.3} parent=11 // pred_check
        %p193 = pneg %p108
      $region14: #{res_conv_forward.3} parent=11 // pred_check_branch
        %195 = sbr.rel (%p193) target = $region16
      $region15: #{res_conv_forward.3} parent=11 // pred_region
        _
      $region16: #{res_conv_forward.3} parent=11 // pred_fallthru
        _
    $region12: #{res_conv_forward.3} parent=5 // pred_fallthru
      _
    %p196 = scmp.lt.s32.totalorder %s12, 48
    // Predicated region
    $region17: #{res_conv_forward.3} parent=5 // pred_check
      %p197 = pneg %p196
    $region18: #{res_conv_forward.3} parent=5 // pred_check_branch
      %199 = sbr.rel (%p197) target = $region20
    $region19: #{res_conv_forward.3} parent=5 // pred_region
      // Predicated region
      $region21: #{res_conv_forward.3} parent=19 // pred_check
        %p200 = pneg %p55
      $region22: #{res_conv_forward.3} parent=19 // pred_check_branch
        %202 = sbr.rel (%p200) target = $region24
      $region23: #{res_conv_forward.3} parent=19 // pred_region
        %s203 = sadd.s32 %s20, %s21
        %p204 = scmp.lt.s32.totalorder %s19, 1
        %s205 = scalar_select %p204, %s19, 1
        %p206 = scmp.lt.s32.totalorder %s203, 9
        %s207 = scalar_select %p206, %s203, 9
        %s208 = smul.addr %s207, 20
        %s209 = smul.addr %s205, 200
        %s210 = sadd.s32 %s208, %s209
        %s211 = smul.addr %s210, 8
        %s212 = scalar_lea.vmem %s0, %s211
        %s213 = sadd.s32 %s20, %s21
      $region24: #{res_conv_forward.3} parent=19 // pred_fallthru
        _
      // Predicated region
      $region25: #{res_conv_forward.3} parent=19 // pred_check
        %p214 = pneg %p81
      $region26: #{res_conv_forward.3} parent=19 // pred_check_branch
        %216 = sbr.rel (%p214) target = $region28
      $region27: #{res_conv_forward.3} parent=19 // pred_region
        %p217 = scmp.lt.s32.totalorder %s21, 2
        %s218 = scalar_select %p217, %s21, 2
        %s219 = smul.addr %s218, 9
        %s220 = smul.addr %s219, 4
        %s221 = scalar_lea.vmem %s1, %s220
      $region28: #{res_conv_forward.3} parent=19 // pred_fallthru
        _
    $region20: #{res_conv_forward.3} parent=5 // pred_fallthru
      _
    %p222 = scmp.le.s32.totalorder 1, %s12
    %p223 = scmp.lt.s32.totalorder %s12, 49
    %p224 = pnand %p222, %p223
    %p225 = pneg %p224
    // Predicated region
    $region29: #{res_conv_forward.3} parent=5 // pred_check
      _
    $region30: #{res_conv_forward.3} parent=5 // pred_check_branch
      %227 = sbr.rel (%p224) target = $region32
    $region31: #{res_conv_forward.3} parent=5 // pred_region
      %s228 = ssub.s32 %s12, 1
      %s229 = sadd.s32 %s23, %s24
      %p230 = scmp.lt.s32.totalorder %s22, 1
      %s231 = scalar_select %p230, %s22, 1
      %p232 = scmp.lt.s32.totalorder %s229, 9
      %s233 = scalar_select %p232, %s229, 9
      %s234 = smul.addr %s233, 20
      %s235 = smul.addr %s231, 200
      %s236 = sadd.s32 %s234, %s235
      %s237 = smul.addr %s236, 8
      %s238 = scalar_lea.vmem %s0, %s237
      %p239 = pneg %p61
      %p240 = pneg %p58
      %p241 = scmp.lt.s32.totalorder %s24, 2
      %s242 = scalar_select %p241, %s24, 2
      %s243 = smul.addr %s242, 9
      %s244 = smul.addr %s243, 4
      %s245 = scalar_lea.vmem %s1, %s244
      %p246 = pneg %p87
      %p247 = pneg %p84
      %p248 = pneg %p108
      %p249 = pneg %p105
      %p250 = pneg %p136
      %p251 = pneg %p133
      %p252 = scmp.lt.s32.totalorder %s22, 1
      %s253 = scalar_select %p252, %s22, 1
      %p254 = scmp.lt.s32.totalorder %s23, 7
      %s255 = scalar_select %p254, %s23, 7
      %s256 = smul.addr %s255, 8
      %s257 = smul.addr %s253, 64
      %s258 = sadd.s32 %s256, %s257
      %s259 = smul.addr %s258, 8
      %s260 = scalar_lea.vmem %s3, %s259
      %p261 = pneg %p157
      %p262 = pneg %p154
      %p263 = pneg %p178
      %p264 = pneg %p175
      %s265 = sadd.s32 %s23, %s24
      %p266 = scmp.lt.s32.totalorder %s22, 1
      %s267 = scalar_select %p266, %s22, 1
      %p268 = scmp.lt.s32.totalorder %s265, 9
      %s269 = scalar_select %p268, %s265, 9
      %s270 = smul.addr %s269, 20
      %s271 = smul.addr %s267, 200
      %s272 = sadd.s32 %s270, %s271
      %s273 = smul.addr %s272, 8
      %s274 = scalar_lea.vmem %s0, %s273
      %s275 = sadd.s32 %s23, %s24
      %p276 = scmp.lt.s32.totalorder %s24, 2
      %s277 = scalar_select %p276, %s24, 2
      %s278 = smul.addr %s277, 9
      %s279 = smul.addr %s278, 4
      %s280 = scalar_lea.vmem %s1, %s279
      %p281 = scmp.lt.s32.totalorder %s22, 1
      %s282 = scalar_select %p281, %s22, 1
      %p283 = scmp.lt.s32.totalorder %s23, 7
      %s284 = scalar_select %p283, %s23, 7
      %s285 = smul.addr %s284, 8
      %s286 = smul.addr %s282, 64
      %s287 = sadd.s32 %s285, %s286
      %s288 = smul.addr %s287, 8
      %s289 = scalar_lea.vmem %s3, %s288
      %p290 = scmp.eq.s32.totalorder %s22, 0
      %p291 = scmp.eq.s32.totalorder %s23, 0
      %p292 = pnand %p290, %p291
      %p293 = pneg %p292
      %p294 = scmp.eq.s32.totalorder %s24, 0
      %p295 = pnand %p293, %p294
      %p296 = pneg %p295
      // Predicated region
      $region33: #{res_conv_forward.3} parent=31 // pred_check
        _
      $region34: #{res_conv_forward.3} parent=31 // pred_check_branch
        %298 = sbr.rel (%p295) target = $region36
      $region35: #{res_conv_forward.3} parent=31 // pred_region
        %vm299 = vcmask 122880
        %300 = vst.msk [vmem:[%s4] sm:$0x1] %vm299, 0.0
        %301 = vst.msk [vmem:[%s5] sm:$0x1] %vm299, 0.0
      $region36: #{res_conv_forward.3} parent=31 // pred_fallthru
        _
      // Predicated region
      $region37: #{res_conv_forward.3} parent=31 // pred_check
        %p302 = pneg %p294
      $region38: #{res_conv_forward.3} parent=31 // pred_check_branch
        %304 = sbr.rel (%p302) target = $region40
      $region39: #{res_conv_forward.3} parent=31 // pred_region
        %vm305 = vcmask 130048
        %306 = vst.msk [vmem:[#allocation2] sm:$0xff] %vm305, 0.0
        %307 = vst.msk [vmem:[#allocation2 + $0x8] sm:$0xff] %vm305, 0.0
        %308 = vst.msk [vmem:[#allocation2 + $0x10] sm:$0xff] %vm305, 0.0
        %309 = vst.msk [vmem:[#allocation2 + $0x18] sm:$0xff] %vm305, 0.0
        %310 = vst.msk [vmem:[#allocation2 + $0x20] sm:$0xff] %vm305, 0.0
        %311 = vst.msk [vmem:[#allocation2 + $0x28] sm:$0xff] %vm305, 0.0
        %312 = vst.msk [vmem:[#allocation2 + $0x30] sm:$0xff] %vm305, 0.0
        %313 = vst.msk [vmem:[#allocation2 + $0x38] sm:$0xff] %vm305, 0.0
      $region40: #{res_conv_forward.3} parent=31 // pred_fallthru
        _
      %v314 = vld [vmem:[%s274] sm:$0xff]
      %v315 = vld [vmem:[%s274 + $0x8] sm:$0x3]
      %v316 = vld [vmem:[%s274 + $0x10] sm:$0xff]
      %v317 = vld [vmem:[%s274 + $0x18] sm:$0x3]
      %v318 = vld [vmem:[%s274 + $0x20] sm:$0xff]
      %v319 = vld [vmem:[%s274 + $0x28] sm:$0x3]
      %v320 = vld [vmem:[%s274 + $0x30] sm:$0xff]
      %v321 = vld [vmem:[%s274 + $0x38] sm:$0x3]
      %v322 = vld [vmem:[%s274 + $0x40] sm:$0xff]
      %v323 = vld [vmem:[%s274 + $0x48] sm:$0x3]
      %v324 = vld [vmem:[%s274 + $0x50] sm:$0xff]
      %v325 = vld [vmem:[%s274 + $0x58] sm:$0x3]
      %v326 = vld [vmem:[%s274 + $0x60] sm:$0xff]
      %v327 = vld [vmem:[%s274 + $0x68] sm:$0x3]
      %v328 = vld [vmem:[%s274 + $0x70] sm:$0xff]
      %v329 = vld [vmem:[%s274 + $0x78] sm:$0x3]
      %v330 = vld [vmem:[%s274 + $0x80] sm:$0xff]
      %v331 = vld [vmem:[%s274 + $0x88] sm:$0x3]
      %v332 = vld [vmem:[%s274 + $0x90] sm:$0xff]
      %v333 = vld [vmem:[%s274 + $0x98] sm:$0x3]
      %v334 = vld [vmem:[#allocation2] sm:$0xff]
      %v335 = vld [vmem:[#allocation2 + $0x8] sm:$0xff]
      %v336 = vld [vmem:[#allocation2 + $0x10] sm:$0xff]
      %v337 = vld [vmem:[#allocation2 + $0x18] sm:$0xff]
      %v338 = vld [vmem:[#allocation2 + $0x20] sm:$0xff]
      %v339 = vld [vmem:[#allocation2 + $0x28] sm:$0xff]
      %v340 = vld [vmem:[#allocation2 + $0x30] sm:$0xff]
      %v341 = vld [vmem:[#allocation2 + $0x38] sm:$0xff]
      %v342 = vld [vmem:[%s280] sm:$0x7]
      %vm343 = vcmask 23552
      %v345 = vsel %vm343, %v314, 0
      %v348 = vsel %vm343, %v316, 0
      %v351 = vsel %vm343, %v318, 0
      %v354 = vsel %vm343, %v320, 0
      %v357 = vsel %vm343, %v322, 0
      %v360 = vsel %vm343, %v324, 0
      %v363 = vsel %vm343, %v326, 0
      %v366 = vsel %vm343, %v328, 0
      %vm368 = vcmask 1042432
      %v370 = vsel %vm368, %v342, 0
      %372 = vmatprep.subr.mxu0 0.0
      %373 = vmatpush1.msra.mxu0 %v370
      %374 = vmatprep.subr.mxu0 0.0
      %375 = vmatpush1.msra.mxu0 0.0
      %376 = vmatprep.subr.mxu0 0.0
      %377 = vmatpush1.msra.mxu0 0.0
      %378 = vmatprep.subr.mxu0 0.0
      %379 = vmatpush1.msra.mxu0 0.0
      %380 = vmatprep.subr.mxu0 0.0
      %381 = vmatpush1.msra.mxu0 0.0
      %382 = vmatprep.subr.mxu0 0.0
      %383 = vmatpush1.msra.mxu0 0.0
      %384 = vmatprep.subr.mxu0 0.0
      %385 = vmatpush1.msra.mxu0 0.0
      %386 = vmatprep.subr.mxu0 0.0
      %387 = vmatpush1.msra.mxu0 0.0
      %388 = vmatprep.subr.mxu0 0.0
      %389 = vmatpush1.msra.mxu0 0.0
      %390 = vmatprep.subr.mxu0 0.0
      %391 = vmatpush1.msra.mxu0 0.0
      %392 = vmatprep.subr.mxu0 0.0
      %393 = vmatpush1.msra.mxu0 0.0
      %394 = vmatprep.subr.mxu0 0.0
      %395 = vmatpush1.msra.mxu0 0.0
      %396 = vmatprep.subr.mxu0 0.0
      %397 = vmatpush1.msra.mxu0 0.0
      %398 = vmatprep.subr.mxu0 0.0
      %399 = vmatpush1.msra.mxu0 0.0
      %400 = vmatprep.subr.mxu0 0.0
      %401 = vmatpush1.msra.mxu0 0.0
      %402 = vmatprep.subr.mxu0 0.0
      %403 = vmatpush1.msra.mxu0 0.0
      %404 = vmatprep.subr.mxu0 0.0
      %405 = vmatpush1.msra.mxu0 0.0
      %406 = vmatprep.subr.mxu0 0.0
      %407 = vmatpush1.msra.mxu0 0.0
      %408 = vmatprep.subr.mxu0 0.0
      %409 = vmatpush1.msra.mxu0 0.0
      %410 = vmatprep.subr.mxu0 0.0
      %411 = vmatpush1.msra.mxu0 0.0
      %412 = vmatprep.subr.mxu0 0.0
      %413 = vmatpush1.msra.mxu0 0.0
      %414 = vmatprep.subr.mxu0 0.0
      %415 = vmatpush1.msra.mxu0 0.0
      %416 = vmatprep.subr.mxu0 0.0
      %417 = vmatpush1.msra.mxu0 0.0
      %418 = vmatprep.subr.mxu0 0.0
      %419 = vmatpush1.msra.mxu0 0.0
      %420 = vmatprep.subr.mxu0 0.0
      %421 = vmatpush1.msra.mxu0 0.0
      %422 = vmatprep.subr.mxu0 0.0
      %423 = vmatpush1.msra.mxu0 0.0
      %424 = vmatprep.subr.mxu0 0.0
      %425 = vmatpush1.msra.mxu0 0.0
      %426 = vmatprep.subr.mxu0 0.0
      %427 = vmatpush1.msra.mxu0 0.0
      %428 = vmatprep.subr.mxu0 0.0
      %429 = vmatpush1.msra.mxu0 0.0
      %430 = vmatprep.subr.mxu0 0.0
      %431 = vmatpush1.msra.mxu0 0.0
      %432 = vmatprep.subr.mxu0 0.0
      %433 = vmatpush1.msra.mxu0 0.0
      %434 = vmatprep.subr.mxu0 0.0
      %435 = vmatpush1.msra.mxu0 0.0
      %436 = vmatprep.mubr.f32.mxu0 0.0
      %437 = vmatmul.mubr.f32.gmra.mrb[0].mxu0 %v345
      %v438 = vpop.f32.mrb[0].mxu0
      %v439 = vadd.f32 0.0, %v438
      %v440 = vpop.f32.mrb[0].mxu0
      %441 = vmatprep.mubr.f32.mxu0 0.0
      %442 = vmatmul.mubr.f32.gmra.mrb[0].mxu0 %v348
      %v443 = vpop.f32.mrb[0].mxu0
      %v444 = vadd.f32 0.0, %v443
      %v445 = vpop.f32.mrb[0].mxu0
      %446 = vmatprep.mubr.f32.mxu0 0.0
      %447 = vmatmul.mubr.f32.gmra.mrb[0].mxu0 %v351
      %v448 = vpop.f32.mrb[0].mxu0
      %v449 = vadd.f32 0.0, %v448
      %v450 = vpop.f32.mrb[0].mxu0
      %451 = vmatprep.mubr.f32.mxu0 0.0
      %452 = vmatmul.mubr.f32.gmra.mrb[0].mxu0 %v354
      %v453 = vpop.f32.mrb[0].mxu0
      %v454 = vadd.f32 0.0, %v453
      %v455 = vpop.f32.mrb[0].mxu0
      %456 = vmatprep.mubr.f32.mxu0 0.0
      %457 = vmatmul.mubr.f32.gmra.mrb[0].mxu0 %v357
      %v458 = vpop.f32.mrb[0].mxu0
      %v459 = vadd.f32 0.0, %v458
      %v460 = vpop.f32.mrb[0].mxu0
      %461 = vmatprep.mubr.f32.mxu0 0.0
      %462 = vmatmul.mubr.f32.gmra.mrb[0].mxu0 %v360
      %v463 = vpop.f32.mrb[0].mxu0
      %v464 = vadd.f32 0.0, %v463
      %v465 = vpop.f32.mrb[0].mxu0
      %466 = vmatprep.mubr.f32.mxu0 0.0
      %467 = vmatmul.mubr.f32.gmra.mrb[0].mxu0 %v363
      %v468 = vpop.f32.mrb[0].mxu0
      %v469 = vadd.f32 0.0, %v468
      %v470 = vpop.f32.mrb[0].mxu0
      %471 = vmatprep.mubr.f32.mxu0 0.0
      %472 = vmatmul.mubr.f32.gmra.mrb[0].mxu0 %v366
      %v473 = vpop.f32.mrb[0].mxu0
      %v474 = vadd.f32 0.0, %v473
      %v475 = vpop.f32.mrb[0].mxu0
      %476 = vdwg.mxu0
      %v477 = vadd.f32 %v334, %v439
      %v478 = vadd.f32 %v335, %v444
      %v479 = vadd.f32 %v336, %v449
      %v480 = vadd.f32 %v337, %v454
      %v481 = vadd.f32 %v338, %v459
      %v482 = vadd.f32 %v339, %v464
      %v483 = vadd.f32 %v340, %v469
      %v484 = vadd.f32 %v341, %v474
      %vm493 = vcmask 1046528
      %v494 = vrot.slane %v314, 1
      %v495 = vrot.slane %v315, 1
      %v496 = vsel %vm493, %v494, %v495
      %v497 = vrot.slane %v316, 1
      %v498 = vrot.slane %v317, 1
      %v499 = vsel %vm493, %v497, %v498
      %v500 = vrot.slane %v318, 1
      %v501 = vrot.slane %v319, 1
      %v502 = vsel %vm493, %v500, %v501
      %v503 = vrot.slane %v320, 1
      %v504 = vrot.slane %v321, 1
      %v505 = vsel %vm493, %v503, %v504
      %v506 = vrot.slane %v322, 1
      %v507 = vrot.slane %v323, 1
      %v508 = vsel %vm493, %v506, %v507
      %v509 = vrot.slane %v324, 1
      %v510 = vrot.slane %v325, 1
      %v511 = vsel %vm493, %v509, %v510
      %v512 = vrot.slane %v326, 1
      %v513 = vrot.slane %v327, 1
      %v514 = vsel %vm493, %v512, %v513
      %v515 = vrot.slane %v328, 1
      %v516 = vrot.slane %v329, 1
      %v517 = vsel %vm493, %v515, %v516
      %s518 = scalar_lea.vmem %s280, 4
      %v519 = vld [vmem:[%s518] sm:$0x7]
      %v520 = vsel %vm343, %v496, 0
      %v522 = vsel %vm343, %v499, 0
      %v524 = vsel %vm343, %v502, 0
      %v526 = vsel %vm343, %v505, 0
      %v528 = vsel %vm343, %v508, 0
      %v530 = vsel %vm343, %v511, 0
      %v532 = vsel %vm343, %v514, 0
      %v534 = vsel %vm343, %v517, 0
      %v537 = vsel %vm368, %v519, 0
      %539 = vmatprep.subr.mxu0 0.0
      %540 = vmatpush1.msra.mxu0 %v537
      %541 = vmatprep.subr.mxu0 0.0
      %542 = vmatpush1.msra.mxu0 0.0
      %543 = vmatprep.subr.mxu0 0.0
      %544 = vmatpush1.msra.mxu0 0.0
      %545 = vmatprep.subr.mxu0 0.0
      %546 = vmatpush1.msra.mxu0 0.0
      %547 = vmatprep.subr.mxu0 0.0
      %548 = vmatpush1.msra.mxu0 0.0
      %549 = vmatprep.subr.mxu0 0.0
      %550 = vmatpush1.msra.mxu0 0.0
      %551 = vmatprep.subr.mxu0 0.0
      %552 = vmatpush1.msra.mxu0 0.0
      %553 = vmatprep.subr.mxu0 0.0
      %554 = vmatpush1.msra.mxu0 0.0
      %555 = vmatprep.subr.mxu0 0.0
      %556 = vmatpush1.msra.mxu0 0.0
      %557 = vmatprep.subr.mxu0 0.0
      %558 = vmatpush1.msra.mxu0 0.0
      %559 = vmatprep.subr.mxu0 0.0
      %560 = vmatpush1.msra.mxu0 0.0
      %561 = vmatprep.subr.mxu0 0.0
      %562 = vmatpush1.msra.mxu0 0.0
      %563 = vmatprep.subr.mxu0 0.0
      %564 = vmatpush1.msra.mxu0 0.0
      %565 = vmatprep.subr.mxu0 0.0
      %566 = vmatpush1.msra.mxu0 0.0
      %567 = vmatprep.subr.mxu0 0.0
      %568 = vmatpush1.msra.mxu0 0.0
      %569 = vmatprep.subr.mxu0 0.0
      %570 = vmatpush1.msra.mxu0 0.0
      %571 = vmatprep.subr.mxu0 0.0
      %572 = vmatpush1.msra.mxu0 0.0
      %573 = vmatprep.subr.mxu0 0.0
      %574 = vmatpush1.msra.mxu0 0.0
      %575 = vmatprep.subr.mxu0 0.0
      %576 = vmatpush1.msra.mxu0 0.0
      %577 = vmatprep.subr.mxu0 0.0
      %578 = vmatpush1.msra.mxu0 0.0
      %579 = vmatprep.subr.mxu0 0.0
      %580 = vmatpush1.msra.mxu0 0.0
      %581 = vmatprep.subr.mxu0 0.0
      %582 = vmatpush1.msra.mxu0 0.0
      %583 = vmatprep.subr.mxu0 0.0
      %584 = vmatpush1.msra.mxu0 0.0
      %585 = vmatprep.subr.mxu0 0.0
      %586 = vmatpush1.msra.mxu0 0.0
      %587 = vmatprep.subr.mxu0 0.0
      %588 = vmatpush1.msra.mxu0 0.0
      %589 = vmatprep.subr.mxu0 0.0
      %590 = vmatpush1.msra.mxu0 0.0
      %591 = vmatprep.subr.mxu0 0.0
      %592 = vmatpush1.msra.mxu0 0.0
      %593 = vmatprep.subr.mxu0 0.0
      %594 = vmatpush1.msra.mxu0 0.0
      %595 = vmatprep.subr.mxu0 0.0
      %596 = vmatpush1.msra.mxu0 0.0
      %597 = vmatprep.subr.mxu0 0.0
      %598 = vmatpush1.msra.mxu0 0.0
      %599 = vmatprep.subr.mxu0 0.0
      %600 = vmatpush1.msra.mxu0 0.0
      %601 = vmatprep.subr.mxu0 0.0
      %602 = vmatpush1.msra.mxu0 0.0
      %603 = vmatprep.mubr.f32.mxu0 0.0
      %604 = vmatmul.mubr.f32.gmra.mrb[0].mxu0 %v520
      %v605 = vpop.f32.mrb[0].mxu0
      %v606 = vadd.f32 0.0, %v605
      %v607 = vpop.f32.mrb[0].mxu0
      %608 = vmatprep.mubr.f32.mxu0 0.0
      %609 = vmatmul.mubr.f32.gmra.mrb[0].mxu0 %v522
      %v610 = vpop.f32.mrb[0].mxu0
      %v611 = vadd.f32 0.0, %v610
      %v612 = vpop.f32.mrb[0].mxu0
      %613 = vmatprep.mubr.f32.mxu0 0.0
      %614 = vmatmul.mubr.f32.gmra.mrb[0].mxu0 %v524
      %v615 = vpop.f32.mrb[0].mxu0
      %v616 = vadd.f32 0.0, %v615
      %v617 = vpop.f32.mrb[0].mxu0
      %618 = vmatprep.mubr.f32.mxu0 0.0
      %619 = vmatmul.mubr.f32.gmra.mrb[0].mxu0 %v526
      %v620 = vpop.f32.mrb[0].mxu0
      %v621 = vadd.f32 0.0, %v620
      %v622 = vpop.f32.mrb[0].mxu0
      %623 = vmatprep.mubr.f32.mxu0 0.0
      %624 = vmatmul.mubr.f32.gmra.mrb[0].mxu0 %v528
      %v625 = vpop.f32.mrb[0].mxu0
      %v626 = vadd.f32 0.0, %v625
      %v627 = vpop.f32.mrb[0].mxu0
      %628 = vmatprep.mubr.f32.mxu0 0.0
      %629 = vmatmul.mubr.f32.gmra.mrb[0].mxu0 %v530
      %v630 = vpop.f32.mrb[0].mxu0
      %v631 = vadd.f32 0.0, %v630
      %v632 = vpop.f32.mrb[0].mxu0
      %633 = vmatprep.mubr.f32.mxu0 0.0
      %634 = vmatmul.mubr.f32.gmra.mrb[0].mxu0 %v532
      %v635 = vpop.f32.mrb[0].mxu0
      %v636 = vadd.f32 0.0, %v635
      %v637 = vpop.f32.mrb[0].mxu0
      %638 = vmatprep.mubr.f32.mxu0 0.0
      %639 = vmatmul.mubr.f32.gmra.mrb[0].mxu0 %v534
      %v640 = vpop.f32.mrb[0].mxu0
      %v641 = vadd.f32 0.0, %v640
      %v642 = vpop.f32.mrb[0].mxu0
      %643 = vdwg.mxu0
      %v644 = vadd.f32 %v477, %v606
      %v645 = vadd.f32 %v478, %v611
      %v646 = vadd.f32 %v479, %v616
      %v647 = vadd.f32 %v480, %v621
      %v648 = vadd.f32 %v481, %v626
      %v649 = vadd.f32 %v482, %v631
      %v650 = vadd.f32 %v483, %v636
      %v651 = vadd.f32 %v484, %v641
      %vm652 = vcmask 1045504
      %v653 = vrot.slane %v314, 2
      %v654 = vrot.slane %v315, 2
      %v655 = vsel %vm652, %v653, %v654
      %v656 = vrot.slane %v316, 2
      %v657 = vrot.slane %v317, 2
      %v658 = vsel %vm652, %v656, %v657
      %v659 = vrot.slane %v318, 2
      %v660 = vrot.slane %v319, 2
      %v661 = vsel %vm652, %v659, %v660
      %v662 = vrot.slane %v320, 2
      %v663 = vrot.slane %v321, 2
      %v664 = vsel %vm652, %v662, %v663
      %v665 = vrot.slane %v322, 2
      %v666 = vrot.slane %v323, 2
      %v667 = vsel %vm652, %v665, %v666
      %v668 = vrot.slane %v324, 2
      %v669 = vrot.slane %v325, 2
      %v670 = vsel %vm652, %v668, %v669
      %v671 = vrot.slane %v326, 2
      %v672 = vrot.slane %v327, 2
      %v673 = vsel %vm652, %v671, %v672
      %v674 = vrot.slane %v328, 2
      %v675 = vrot.slane %v329, 2
      %v676 = vsel %vm652, %v674, %v675
      %s677 = scalar_lea.vmem %s280, 8
      %v678 = vld [vmem:[%s677] sm:$0x7]
      %v679 = vsel %vm343, %v655, 0
      %v681 = vsel %vm343, %v658, 0
      %v683 = vsel %vm343, %v661, 0
      %v685 = vsel %vm343, %v664, 0
      %v687 = vsel %vm343, %v667, 0
      %v689 = vsel %vm343, %v670, 0
      %v691 = vsel %vm343, %v673, 0
      %v693 = vsel %vm343, %v676, 0
      %v696 = vsel %vm368, %v678, 0
      %698 = vmatprep.subr.mxu0 0.0
      %699 = vmatpush1.msra.mxu0 %v696
      %700 = vmatprep.subr.mxu0 0.0
      %701 = vmatpush1.msra.mxu0 0.0
      %702 = vmatprep.subr.mxu0 0.0
      %703 = vmatpush1.msra.mxu0 0.0
      %704 = vmatprep.subr.mxu0 0.0
      %705 = vmatpush1.msra.mxu0 0.0
      %706 = vmatprep.subr.mxu0 0.0
      %707 = vmatpush1.msra.mxu0 0.0
      %708 = vmatprep.subr.mxu0 0.0
      %709 = vmatpush1.msra.mxu0 0.0
      %710 = vmatprep.subr.mxu0 0.0
      %711 = vmatpush1.msra.mxu0 0.0
      %712 = vmatprep.subr.mxu0 0.0
      %713 = vmatpush1.msra.mxu0 0.0
      %714 = vmatprep.subr.mxu0 0.0
      %715 = vmatpush1.msra.mxu0 0.0
      %716 = vmatprep.subr.mxu0 0.0
      %717 = vmatpush1.msra.mxu0 0.0
      %718 = vmatprep.subr.mxu0 0.0
      %719 = vmatpush1.msra.mxu0 0.0
      %720 = vmatprep.subr.mxu0 0.0
      %721 = vmatpush1.msra.mxu0 0.0
      %722 = vmatprep.subr.mxu0 0.0
      %723 = vmatpush1.msra.mxu0 0.0
      %724 = vmatprep.subr.mxu0 0.0
      %725 = vmatpush1.msra.mxu0 0.0
      %726 = vmatprep.subr.mxu0 0.0
      %727 = vmatpush1.msra.mxu0 0.0
      %728 = vmatprep.subr.mxu0 0.0
      %729 = vmatpush1.msra.mxu0 0.0
      %730 = vmatprep.subr.mxu0 0.0
      %731 = vmatpush1.msra.mxu0 0.0
      %732 = vmatprep.subr.mxu0 0.0
      %733 = vmatpush1.msra.mxu0 0.0
      %734 = vmatprep.subr.mxu0 0.0
      %735 = vmatpush1.msra.mxu0 0.0
      %736 = vmatprep.subr.mxu0 0.0
      %737 = vmatpush1.msra.mxu0 0.0
      %738 = vmatprep.subr.mxu0 0.0
      %739 = vmatpush1.msra.mxu0 0.0
      %740 = vmatprep.subr.mxu0 0.0
      %741 = vmatpush1.msra.mxu0 0.0
      %742 = vmatprep.subr.mxu0 0.0
      %743 = vmatpush1.msra.mxu0 0.0
      %744 = vmatprep.subr.mxu0 0.0
      %745 = vmatpush1.msra.mxu0 0.0
      %746 = vmatprep.subr.mxu0 0.0
      %747 = vmatpush1.msra.mxu0 0.0
      %748 = vmatprep.subr.mxu0 0.0
      %749 = vmatpush1.msra.mxu0 0.0
      %750 = vmatprep.subr.mxu0 0.0
      %751 = vmatpush1.msra.mxu0 0.0
      %752 = vmatprep.subr.mxu0 0.0
      %753 = vmatpush1.msra.mxu0 0.0
      %754 = vmatprep.subr.mxu0 0.0
      %755 = vmatpush1.msra.mxu0 0.0
      %756 = vmatprep.subr.mxu0 0.0
      %757 = vmatpush1.msra.mxu0 0.0
      %758 = vmatprep.subr.mxu0 0.0
      %759 = vmatpush1.msra.mxu0 0.0
      %760 = vmatprep.subr.mxu0 0.0
      %761 = vmatpush1.msra.mxu0 0.0
      %762 = vmatprep.mubr.f32.mxu0 0.0
      %763 = vmatmul.mubr.f32.gmra.mrb[0].mxu0 %v679
      %v764 = vpop.f32.mrb[0].mxu0
      %v765 = vadd.f32 0.0, %v764
      %v766 = vpop.f32.mrb[0].mxu0
      %767 = vmatprep.mubr.f32.mxu0 0.0
      %768 = vmatmul.mubr.f32.gmra.mrb[0].mxu0 %v681
      %v769 = vpop.f32.mrb[0].mxu0
      %v770 = vadd.f32 0.0, %v769
      %v771 = vpop.f32.mrb[0].mxu0
      %772 = vmatprep.mubr.f32.mxu0 0.0
      %773 = vmatmul.mubr.f32.gmra.mrb[0].mxu0 %v683
      %v774 = vpop.f32.mrb[0].mxu0
      %v775 = vadd.f32 0.0, %v774
      %v776 = vpop.f32.mrb[0].mxu0
      %777 = vmatprep.mubr.f32.mxu0 0.0
      %778 = vmatmul.mubr.f32.gmra.mrb[0].mxu0 %v685
      %v779 = vpop.f32.mrb[0].mxu0
      %v780 = vadd.f32 0.0, %v779
      %v781 = vpop.f32.mrb[0].mxu0
      %782 = vmatprep.mubr.f32.mxu0 0.0
      %783 = vmatmul.mubr.f32.gmra.mrb[0].mxu0 %v687
      %v784 = vpop.f32.mrb[0].mxu0
      %v785 = vadd.f32 0.0, %v784
      %v786 = vpop.f32.mrb[0].mxu0
      %787 = vmatprep.mubr.f32.mxu0 0.0
      %788 = vmatmul.mubr.f32.gmra.mrb[0].mxu0 %v689
      %v789 = vpop.f32.mrb[0].mxu0
      %v790 = vadd.f32 0.0, %v789
      %v791 = vpop.f32.mrb[0].mxu0
      %792 = vmatprep.mubr.f32.mxu0 0.0
      %793 = vmatmul.mubr.f32.gmra.mrb[0].mxu0 %v691
      %v794 = vpop.f32.mrb[0].mxu0
      %v795 = vadd.f32 0.0, %v794
      %v796 = vpop.f32.mrb[0].mxu0
      %797 = vmatprep.mubr.f32.mxu0 0.0
      %798 = vmatmul.mubr.f32.gmra.mrb[0].mxu0 %v693
      %v799 = vpop.f32.mrb[0].mxu0
      %v800 = vadd.f32 0.0, %v799
      %v801 = vpop.f32.mrb[0].mxu0
      %802 = vdwg.mxu0
      %v803 = vadd.f32 %v644, %v765
      %v804 = vadd.f32 %v645, %v770
      %v805 = vadd.f32 %v646, %v775
      %v806 = vadd.f32 %v647, %v780
      %v807 = vadd.f32 %v648, %v785
      %v808 = vadd.f32 %v649, %v790
      %v809 = vadd.f32 %v650, %v795
      %v810 = vadd.f32 %v651, %v800
      %s811 = scalar_lea.vmem %s280, 12
      %v812 = vld [vmem:[%s811] sm:$0x7]
      %v814 = vsel %vm343, %v330, 0
      %v817 = vsel %vm368, %v812, 0
      %819 = vmatprep.subr.mxu0 0.0
      %820 = vmatpush1.msra.mxu0 %v817
      %821 = vmatprep.subr.mxu0 0.0
      %822 = vmatpush1.msra.mxu0 0.0
      %823 = vmatprep.subr.mxu0 0.0
      %824 = vmatpush1.msra.mxu0 0.0
      %825 = vmatprep.subr.mxu0 0.0
      %826 = vmatpush1.msra.mxu0 0.0
      %827 = vmatprep.subr.mxu0 0.0
      %828 = vmatpush1.msra.mxu0 0.0
      %829 = vmatprep.subr.mxu0 0.0
      %830 = vmatpush1.msra.mxu0 0.0
      %831 = vmatprep.subr.mxu0 0.0
      %832 = vmatpush1.msra.mxu0 0.0
      %833 = vmatprep.subr.mxu0 0.0
      %834 = vmatpush1.msra.mxu0 0.0
      %835 = vmatprep.subr.mxu0 0.0
      %836 = vmatpush1.msra.mxu0 0.0
      %837 = vmatprep.subr.mxu0 0.0
      %838 = vmatpush1.msra.mxu0 0.0
      %839 = vmatprep.subr.mxu0 0.0
      %840 = vmatpush1.msra.mxu0 0.0
      %841 = vmatprep.subr.mxu0 0.0
      %842 = vmatpush1.msra.mxu0 0.0
      %843 = vmatprep.subr.mxu0 0.0
      %844 = vmatpush1.msra.mxu0 0.0
      %845 = vmatprep.subr.mxu0 0.0
      %846 = vmatpush1.msra.mxu0 0.0
      %847 = vmatprep.subr.mxu0 0.0
      %848 = vmatpush1.msra.mxu0 0.0
      %849 = vmatprep.subr.mxu0 0.0
      %850 = vmatpush1.msra.mxu0 0.0
      %851 = vmatprep.subr.mxu0 0.0
      %852 = vmatpush1.msra.mxu0 0.0
      %853 = vmatprep.subr.mxu0 0.0
      %854 = vmatpush1.msra.mxu0 0.0
      %855 = vmatprep.subr.mxu0 0.0
      %856 = vmatpush1.msra.mxu0 0.0
      %857 = vmatprep.subr.mxu0 0.0
      %858 = vmatpush1.msra.mxu0 0.0
      %859 = vmatprep.subr.mxu0 0.0
      %860 = vmatpush1.msra.mxu0 0.0
      %861 = vmatprep.subr.mxu0 0.0
      %862 = vmatpush1.msra.mxu0 0.0
      %863 = vmatprep.subr.mxu0 0.0
      %864 = vmatpush1.msra.mxu0 0.0
      %865 = vmatprep.subr.mxu0 0.0
      %866 = vmatpush1.msra.mxu0 0.0
      %867 = vmatprep.subr.mxu0 0.0
      %868 = vmatpush1.msra.mxu0 0.0
      %869 = vmatprep.subr.mxu0 0.0
      %870 = vmatpush1.msra.mxu0 0.0
      %871 = vmatprep.subr.mxu0 0.0
      %872 = vmatpush1.msra.mxu0 0.0
      %873 = vmatprep.subr.mxu0 0.0
      %874 = vmatpush1.msra.mxu0 0.0
      %875 = vmatprep.subr.mxu0 0.0
      %876 = vmatpush1.msra.mxu0 0.0
      %877 = vmatprep.subr.mxu0 0.0
      %878 = vmatpush1.msra.mxu0 0.0
      %879 = vmatprep.subr.mxu0 0.0
      %880 = vmatpush1.msra.mxu0 0.0
      %881 = vmatprep.subr.mxu0 0.0
      %882 = vmatpush1.msra.mxu0 0.0
      %883 = vmatprep.mubr.f32.mxu0 0.0
      %884 = vmatmul.mubr.f32.gmra.mrb[0].mxu0 %v348
      %v885 = vpop.f32.mrb[0].mxu0
      %v886 = vadd.f32 0.0, %v885
      %v887 = vpop.f32.mrb[0].mxu0
      %888 = vmatprep.mubr.f32.mxu0 0.0
      %889 = vmatmul.mubr.f32.gmra.mrb[0].mxu0 %v351
      %v890 = vpop.f32.mrb[0].mxu0
      %v891 = vadd.f32 0.0, %v890
      %v892 = vpop.f32.mrb[0].mxu0
      %893 = vmatprep.mubr.f32.mxu0 0.0
      %894 = vmatmul.mubr.f32.gmra.mrb[0].mxu0 %v354
      %v895 = vpop.f32.mrb[0].mxu0
      %v896 = vadd.f32 0.0, %v895
      %v897 = vpop.f32.mrb[0].mxu0
      %898 = vmatprep.mubr.f32.mxu0 0.0
      %899 = vmatmul.mubr.f32.gmra.mrb[0].mxu0 %v357
      %v900 = vpop.f32.mrb[0].mxu0
      %v901 = vadd.f32 0.0, %v900
      %v902 = vpop.f32.mrb[0].mxu0
      %903 = vmatprep.mubr.f32.mxu0 0.0
      %904 = vmatmul.mubr.f32.gmra.mrb[0].mxu0 %v360
      %v905 = vpop.f32.mrb[0].mxu0
      %v906 = vadd.f32 0.0, %v905
      %v907 = vpop.f32.mrb[0].mxu0
      %908 = vmatprep.mubr.f32.mxu0 0.0
      %909 = vmatmul.mubr.f32.gmra.mrb[0].mxu0 %v363
      %v910 = vpop.f32.mrb[0].mxu0
      %v911 = vadd.f32 0.0, %v910
      %v912 = vpop.f32.mrb[0].mxu0
      %913 = vmatprep.mubr.f32.mxu0 0.0
      %914 = vmatmul.mubr.f32.gmra.mrb[0].mxu0 %v366
      %v915 = vpop.f32.mrb[0].mxu0
      %v916 = vadd.f32 0.0, %v915
      %v917 = vpop.f32.mrb[0].mxu0
      %918 = vmatprep.mubr.f32.mxu0 0.0
      %919 = vmatmul.mubr.f32.gmra.mrb[0].mxu0 %v814
      %v920 = vpop.f32.mrb[0].mxu0
      %v921 = vadd.f32 0.0, %v920
      %v922 = vpop.f32.mrb[0].mxu0
      %923 = vdwg.mxu0
      %v924 = vadd.f32 %v803, %v886
      %v925 = vadd.f32 %v804, %v891
      %v926 = vadd.f32 %v805, %v896
      %v927 = vadd.f32 %v806, %v901
      %v928 = vadd.f32 %v807, %v906
      %v929 = vadd.f32 %v808, %v911
      %v930 = vadd.f32 %v809, %v916
      %v931 = vadd.f32 %v810, %v921
      %v933 = vrot.slane %v330, 1
      %v934 = vrot.slane %v331, 1
      %v935 = vsel %vm493, %v933, %v934
      %s936 = scalar_lea.vmem %s280, 16
      %v937 = vld [vmem:[%s936] sm:$0x7]
      %v938 = vsel %vm343, %v935, 0
      %v941 = vsel %vm368, %v937, 0
      %943 = vmatprep.subr.mxu0 0.0
      %944 = vmatpush1.msra.mxu0 %v941
      %945 = vmatprep.subr.mxu0 0.0
      %946 = vmatpush1.msra.mxu0 0.0
      %947 = vmatprep.subr.mxu0 0.0
      %948 = vmatpush1.msra.mxu0 0.0
      %949 = vmatprep.subr.mxu0 0.0
      %950 = vmatpush1.msra.mxu0 0.0
      %951 = vmatprep.subr.mxu0 0.0
      %952 = vmatpush1.msra.mxu0 0.0
      %953 = vmatprep.subr.mxu0 0.0
      %954 = vmatpush1.msra.mxu0 0.0
      %955 = vmatprep.subr.mxu0 0.0
      %956 = vmatpush1.msra.mxu0 0.0
      %957 = vmatprep.subr.mxu0 0.0
      %958 = vmatpush1.msra.mxu0 0.0
      %959 = vmatprep.subr.mxu0 0.0
      %960 = vmatpush1.msra.mxu0 0.0
      %961 = vmatprep.subr.mxu0 0.0
      %962 = vmatpush1.msra.mxu0 0.0
      %963 = vmatprep.subr.mxu0 0.0
      %964 = vmatpush1.msra.mxu0 0.0
      %965 = vmatprep.subr.mxu0 0.0
      %966 = vmatpush1.msra.mxu0 0.0
      %967 = vmatprep.subr.mxu0 0.0
      %968 = vmatpush1.msra.mxu0 0.0
      %969 = vmatprep.subr.mxu0 0.0
      %970 = vmatpush1.msra.mxu0 0.0
      %971 = vmatprep.subr.mxu0 0.0
      %972 = vmatpush1.msra.mxu0 0.0
      %973 = vmatprep.subr.mxu0 0.0
      %974 = vmatpush1.msra.mxu0 0.0
      %975 = vmatprep.subr.mxu0 0.0
      %976 = vmatpush1.msra.mxu0 0.0
      %977 = vmatprep.subr.mxu0 0.0
      %978 = vmatpush1.msra.mxu0 0.0
      %979 = vmatprep.subr.mxu0 0.0
      %980 = vmatpush1.msra.mxu0 0.0
      %981 = vmatprep.subr.mxu0 0.0
      %982 = vmatpush1.msra.mxu0 0.0
      %983 = vmatprep.subr.mxu0 0.0
      %984 = vmatpush1.msra.mxu0 0.0
      %985 = vmatprep.subr.mxu0 0.0
      %986 = vmatpush1.msra.mxu0 0.0
      %987 = vmatprep.subr.mxu0 0.0
      %988 = vmatpush1.msra.mxu0 0.0
      %989 = vmatprep.subr.mxu0 0.0
      %990 = vmatpush1.msra.mxu0 0.0
      %991 = vmatprep.subr.mxu0 0.0
      %992 = vmatpush1.msra.mxu0 0.0
      %993 = vmatprep.subr.mxu0 0.0
      %994 = vmatpush1.msra.mxu0 0.0
      %995 = vmatprep.subr.mxu0 0.0
      %996 = vmatpush1.msra.mxu0 0.0
      %997 = vmatprep.subr.mxu0 0.0
      %998 = vmatpush1.msra.mxu0 0.0
      %999 = vmatprep.subr.mxu0 0.0
      %1000 = vmatpush1.msra.mxu0 0.0
      %1001 = vmatprep.subr.mxu0 0.0
      %1002 = vmatpush1.msra.mxu0 0.0
      %1003 = vmatprep.subr.mxu0 0.0
      %1004 = vmatpush1.msra.mxu0 0.0
      %1005 = vmatprep.subr.mxu0 0.0
      %1006 = vmatpush1.msra.mxu0 0.0
      %1007 = vmatprep.mubr.f32.mxu0 0.0
      %1008 = vmatmul.mubr.f32.gmra.mrb[0].mxu0 %v522
      %v1009 = vpop.f32.mrb[0].mxu0
      %v1010 = vadd.f32 0.0, %v1009
      %v1011 = vpop.f32.mrb[0].mxu0
      %1012 = vmatprep.mubr.f32.mxu0 0.0
      %1013 = vmatmul.mubr.f32.gmra.mrb[0].mxu0 %v524
      %v1014 = vpop.f32.mrb[0].mxu0
      %v1015 = vadd.f32 0.0, %v1014
      %v1016 = vpop.f32.mrb[0].mxu0
      %1017 = vmatprep.mubr.f32.mxu0 0.0
      %1018 = vmatmul.mubr.f32.gmra.mrb[0].mxu0 %v526
      %v1019 = vpop.f32.mrb[0].mxu0
      %v1020 = vadd.f32 0.0, %v1019
      %v1021 = vpop.f32.mrb[0].mxu0
      %1022 = vmatprep.mubr.f32.mxu0 0.0
      %1023 = vmatmul.mubr.f32.gmra.mrb[0].mxu0 %v528
      %v1024 = vpop.f32.mrb[0].mxu0
      %v1025 = vadd.f32 0.0, %v1024
      %v1026 = vpop.f32.mrb[0].mxu0
      %1027 = vmatprep.mubr.f32.mxu0 0.0
      %1028 = vmatmul.mubr.f32.gmra.mrb[0].mxu0 %v530
      %v1029 = vpop.f32.mrb[0].mxu0
      %v1030 = vadd.f32 0.0, %v1029
      %v1031 = vpop.f32.mrb[0].mxu0
      %1032 = vmatprep.mubr.f32.mxu0 0.0
      %1033 = vmatmul.mubr.f32.gmra.mrb[0].mxu0 %v532
      %v1034 = vpop.f32.mrb[0].mxu0
      %v1035 = vadd.f32 0.0, %v1034
      %v1036 = vpop.f32.mrb[0].mxu0
      %1037 = vmatprep.mubr.f32.mxu0 0.0
      %1038 = vmatmul.mubr.f32.gmra.mrb[0].mxu0 %v534
      %v1039 = vpop.f32.mrb[0].mxu0
      %v1040 = vadd.f32 0.0, %v1039
      %v1041 = vpop.f32.mrb[0].mxu0
      %1042 = vmatprep.mubr.f32.mxu0 0.0
      %1043 = vmatmul.mubr.f32.gmra.mrb[0].mxu0 %v938
      %v1044 = vpop.f32.mrb[0].mxu0
      %v1045 = vadd.f32 0.0, %v1044
      %v1046 = vpop.f32.mrb[0].mxu0
      %1047 = vdwg.mxu0
      %v1048 = vadd.f32 %v924, %v1010
      %v1049 = vadd.f32 %v925, %v1015
      %v1050 = vadd.f32 %v926, %v1020
      %v1051 = vadd.f32 %v927, %v1025
      %v1052 = vadd.f32 %v928, %v1030
      %v1053 = vadd.f32 %v929, %v1035
      %v1054 = vadd.f32 %v930, %v1040
      %v1055 = vadd.f32 %v931, %v1045
      %v1056 = vrot.slane %v330, 2
      %v1057 = vrot.slane %v331, 2
      %v1058 = vsel %vm652, %v1056, %v1057
      %s1059 = scalar_lea.vmem %s280, 20
      %v1060 = vld [vmem:[%s1059] sm:$0x7]
      %v1061 = vsel %vm343, %v1058, 0
      %v1064 = vsel %vm368, %v1060, 0
      %1066 = vmatprep.subr.mxu0 0.0
      %1067 = vmatpush1.msra.mxu0 %v1064
      %1068 = vmatprep.subr.mxu0 0.0
      %1069 = vmatpush1.msra.mxu0 0.0
      %1070 = vmatprep.subr.mxu0 0.0
      %1071 = vmatpush1.msra.mxu0 0.0
      %1072 = vmatprep.subr.mxu0 0.0
      %1073 = vmatpush1.msra.mxu0 0.0
      %1074 = vmatprep.subr.mxu0 0.0
      %1075 = vmatpush1.msra.mxu0 0.0
      %1076 = vmatprep.subr.mxu0 0.0
      %1077 = vmatpush1.msra.mxu0 0.0
      %1078 = vmatprep.subr.mxu0 0.0
      %1079 = vmatpush1.msra.mxu0 0.0
      %1080 = vmatprep.subr.mxu0 0.0
      %1081 = vmatpush1.msra.mxu0 0.0
      %1082 = vmatprep.subr.mxu0 0.0
      %1083 = vmatpush1.msra.mxu0 0.0
      %1084 = vmatprep.subr.mxu0 0.0
      %1085 = vmatpush1.msra.mxu0 0.0
      %1086 = vmatprep.subr.mxu0 0.0
      %1087 = vmatpush1.msra.mxu0 0.0
      %1088 = vmatprep.subr.mxu0 0.0
      %1089 = vmatpush1.msra.mxu0 0.0
      %1090 = vmatprep.subr.mxu0 0.0
      %1091 = vmatpush1.msra.mxu0 0.0
      %1092 = vmatprep.subr.mxu0 0.0
      %1093 = vmatpush1.msra.mxu0 0.0
      %1094 = vmatprep.subr.mxu0 0.0
      %1095 = vmatpush1.msra.mxu0 0.0
      %1096 = vmatprep.subr.mxu0 0.0
      %1097 = vmatpush1.msra.mxu0 0.0
      %1098 = vmatprep.subr.mxu0 0.0
      %1099 = vmatpush1.msra.mxu0 0.0
      %1100 = vmatprep.subr.mxu0 0.0
      %1101 = vmatpush1.msra.mxu0 0.0
      %1102 = vmatprep.subr.mxu0 0.0
      %1103 = vmatpush1.msra.mxu0 0.0
      %1104 = vmatprep.subr.mxu0 0.0
      %1105 = vmatpush1.msra.mxu0 0.0
      %1106 = vmatprep.subr.mxu0 0.0
      %1107 = vmatpush1.msra.mxu0 0.0
      %1108 = vmatprep.subr.mxu0 0.0
      %1109 = vmatpush1.msra.mxu0 0.0
      %1110 = vmatprep.subr.mxu0 0.0
      %1111 = vmatpush1.msra.mxu0 0.0
      %1112 = vmatprep.subr.mxu0 0.0
      %1113 = vmatpush1.msra.mxu0 0.0
      %1114 = vmatprep.subr.mxu0 0.0
      %1115 = vmatpush1.msra.mxu0 0.0
      %1116 = vmatprep.subr.mxu0 0.0
      %1117 = vmatpush1.msra.mxu0 0.0
      %1118 = vmatprep.subr.mxu0 0.0
      %1119 = vmatpush1.msra.mxu0 0.0
      %1120 = vmatprep.subr.mxu0 0.0
      %1121 = vmatpush1.msra.mxu0 0.0
      %1122 = vmatprep.subr.mxu0 0.0
      %1123 = vmatpush1.msra.mxu0 0.0
      %1124 = vmatprep.subr.mxu0 0.0
      %1125 = vmatpush1.msra.mxu0 0.0
      %1126 = vmatprep.subr.mxu0 0.0
      %1127 = vmatpush1.msra.mxu0 0.0
      %1128 = vmatprep.subr.mxu0 0.0
      %1129 = vmatpush1.msra.mxu0 0.0
      %1130 = vmatprep.mubr.f32.mxu0 0.0
      %1131 = vmatmul.mubr.f32.gmra.mrb[0].mxu0 %v681
      %v1132 = vpop.f32.mrb[0].mxu0
      %v1133 = vadd.f32 0.0, %v1132
      %v1134 = vpop.f32.mrb[0].mxu0
      %1135 = vmatprep.mubr.f32.mxu0 0.0
      %1136 = vmatmul.mubr.f32.gmra.mrb[0].mxu0 %v683
      %v1137 = vpop.f32.mrb[0].mxu0
      %v1138 = vadd.f32 0.0, %v1137
      %v1139 = vpop.f32.mrb[0].mxu0
      %1140 = vmatprep.mubr.f32.mxu0 0.0
      %1141 = vmatmul.mubr.f32.gmra.mrb[0].mxu0 %v685
      %v1142 = vpop.f32.mrb[0].mxu0
      %v1143 = vadd.f32 0.0, %v1142
      %v1144 = vpop.f32.mrb[0].mxu0
      %1145 = vmatprep.mubr.f32.mxu0 0.0
      %1146 = vmatmul.mubr.f32.gmra.mrb[0].mxu0 %v687
      %v1147 = vpop.f32.mrb[0].mxu0
      %v1148 = vadd.f32 0.0, %v1147
      %v1149 = vpop.f32.mrb[0].mxu0
      %1150 = vmatprep.mubr.f32.mxu0 0.0
      %1151 = vmatmul.mubr.f32.gmra.mrb[0].mxu0 %v689
      %v1152 = vpop.f32.mrb[0].mxu0
      %v1153 = vadd.f32 0.0, %v1152
      %v1154 = vpop.f32.mrb[0].mxu0
      %1155 = vmatprep.mubr.f32.mxu0 0.0
      %1156 = vmatmul.mubr.f32.gmra.mrb[0].mxu0 %v691
      %v1157 = vpop.f32.mrb[0].mxu0
      %v1158 = vadd.f32 0.0, %v1157
      %v1159 = vpop.f32.mrb[0].mxu0
      %1160 = vmatprep.mubr.f32.mxu0 0.0
      %1161 = vmatmul.mubr.f32.gmra.mrb[0].mxu0 %v693
      %v1162 = vpop.f32.mrb[0].mxu0
      %v1163 = vadd.f32 0.0, %v1162
      %v1164 = vpop.f32.mrb[0].mxu0
      %1165 = vmatprep.mubr.f32.mxu0 0.0
      %1166 = vmatmul.mubr.f32.gmra.mrb[0].mxu0 %v1061
      %v1167 = vpop.f32.mrb[0].mxu0
      %v1168 = vadd.f32 0.0, %v1167
      %v1169 = vpop.f32.mrb[0].mxu0
      %1170 = vdwg.mxu0
      %v1171 = vadd.f32 %v1048, %v1133
      %v1172 = vadd.f32 %v1049, %v1138
      %v1173 = vadd.f32 %v1050, %v1143
      %v1174 = vadd.f32 %v1051, %v1148
      %v1175 = vadd.f32 %v1052, %v1153
      %v1176 = vadd.f32 %v1053, %v1158
      %v1177 = vadd.f32 %v1054, %v1163
      %v1178 = vadd.f32 %v1055, %v1168
      %s1179 = scalar_lea.vmem %s280, 24
      %v1180 = vld [vmem:[%s1179] sm:$0x7]
      %v1182 = vsel %vm343, %v332, 0
      %v1185 = vsel %vm368, %v1180, 0
      %1187 = vmatprep.subr.mxu0 0.0
      %1188 = vmatpush1.msra.mxu0 %v1185
      %1189 = vmatprep.subr.mxu0 0.0
      %1190 = vmatpush1.msra.mxu0 0.0
      %1191 = vmatprep.subr.mxu0 0.0
      %1192 = vmatpush1.msra.mxu0 0.0
      %1193 = vmatprep.subr.mxu0 0.0
      %1194 = vmatpush1.msra.mxu0 0.0
      %1195 = vmatprep.subr.mxu0 0.0
      %1196 = vmatpush1.msra.mxu0 0.0
      %1197 = vmatprep.subr.mxu0 0.0
      %1198 = vmatpush1.msra.mxu0 0.0
      %1199 = vmatprep.subr.mxu0 0.0
      %1200 = vmatpush1.msra.mxu0 0.0
      %1201 = vmatprep.subr.mxu0 0.0
      %1202 = vmatpush1.msra.mxu0 0.0
      %1203 = vmatprep.subr.mxu0 0.0
      %1204 = vmatpush1.msra.mxu0 0.0
      %1205 = vmatprep.subr.mxu0 0.0
      %1206 = vmatpush1.msra.mxu0 0.0
      %1207 = vmatprep.subr.mxu0 0.0
      %1208 = vmatpush1.msra.mxu0 0.0
      %1209 = vmatprep.subr.mxu0 0.0
      %1210 = vmatpush1.msra.mxu0 0.0
      %1211 = vmatprep.subr.mxu0 0.0
      %1212 = vmatpush1.msra.mxu0 0.0
      %1213 = vmatprep.subr.mxu0 0.0
      %1214 = vmatpush1.msra.mxu0 0.0
      %1215 = vmatprep.subr.mxu0 0.0
      %1216 = vmatpush1.msra.mxu0 0.0
      %1217 = vmatprep.subr.mxu0 0.0
      %1218 = vmatpush1.msra.mxu0 0.0
      %1219 = vmatprep.subr.mxu0 0.0
      %1220 = vmatpush1.msra.mxu0 0.0
      %1221 = vmatprep.subr.mxu0 0.0
      %1222 = vmatpush1.msra.mxu0 0.0
      %1223 = vmatprep.subr.mxu0 0.0
      %1224 = vmatpush1.msra.mxu0 0.0
      %1225 = vmatprep.subr.mxu0 0.0
      %1226 = vmatpush1.msra.mxu0 0.0
      %1227 = vmatprep.subr.mxu0 0.0
      %1228 = vmatpush1.msra.mxu0 0.0
      %1229 = vmatprep.subr.mxu0 0.0
      %1230 = vmatpush1.msra.mxu0 0.0
      %1231 = vmatprep.subr.mxu0 0.0
      %1232 = vmatpush1.msra.mxu0 0.0
      %1233 = vmatprep.subr.mxu0 0.0
      %1234 = vmatpush1.msra.mxu0 0.0
      %1235 = vmatprep.subr.mxu0 0.0
      %1236 = vmatpush1.msra.mxu0 0.0
      %1237 = vmatprep.subr.mxu0 0.0
      %1238 = vmatpush1.msra.mxu0 0.0
      %1239 = vmatprep.subr.mxu0 0.0
      %1240 = vmatpush1.msra.mxu0 0.0
      %1241 = vmatprep.subr.mxu0 0.0
      %1242 = vmatpush1.msra.mxu0 0.0
      %1243 = vmatprep.subr.mxu0 0.0
      %1244 = vmatpush1.msra.mxu0 0.0
      %1245 = vmatprep.subr.mxu0 0.0
      %1246 = vmatpush1.msra.mxu0 0.0
      %1247 = vmatprep.subr.mxu0 0.0
      %1248 = vmatpush1.msra.mxu0 0.0
      %1249 = vmatprep.subr.mxu0 0.0
      %1250 = vmatpush1.msra.mxu0 0.0
      %1251 = vmatprep.mubr.f32.mxu0 0.0
      %1252 = vmatmul.mubr.f32.gmra.mrb[0].mxu0 %v351
      %v1253 = vpop.f32.mrb[0].mxu0
      %v1254 = vadd.f32 0.0, %v1253
      %v1255 = vpop.f32.mrb[0].mxu0
      %1256 = vmatprep.mubr.f32.mxu0 0.0
      %1257 = vmatmul.mubr.f32.gmra.mrb[0].mxu0 %v354
      %v1258 = vpop.f32.mrb[0].mxu0
      %v1259 = vadd.f32 0.0, %v1258
      %v1260 = vpop.f32.mrb[0].mxu0
      %1261 = vmatprep.mubr.f32.mxu0 0.0
      %1262 = vmatmul.mubr.f32.gmra.mrb[0].mxu0 %v357
      %v1263 = vpop.f32.mrb[0].mxu0
      %v1264 = vadd.f32 0.0, %v1263
      %v1265 = vpop.f32.mrb[0].mxu0
      %1266 = vmatprep.mubr.f32.mxu0 0.0
      %1267 = vmatmul.mubr.f32.gmra.mrb[0].mxu0 %v360
      %v1268 = vpop.f32.mrb[0].mxu0
      %v1269 = vadd.f32 0.0, %v1268
      %v1270 = vpop.f32.mrb[0].mxu0
      %1271 = vmatprep.mubr.f32.mxu0 0.0
      %1272 = vmatmul.mubr.f32.gmra.mrb[0].mxu0 %v363
      %v1273 = vpop.f32.mrb[0].mxu0
      %v1274 = vadd.f32 0.0, %v1273
      %v1275 = vpop.f32.mrb[0].mxu0
      %1276 = vmatprep.mubr.f32.mxu0 0.0
      %1277 = vmatmul.mubr.f32.gmra.mrb[0].mxu0 %v366
      %v1278 = vpop.f32.mrb[0].mxu0
      %v1279 = vadd.f32 0.0, %v1278
      %v1280 = vpop.f32.mrb[0].mxu0
      %1281 = vmatprep.mubr.f32.mxu0 0.0
      %1282 = vmatmul.mubr.f32.gmra.mrb[0].mxu0 %v814
      %v1283 = vpop.f32.mrb[0].mxu0
      %v1284 = vadd.f32 0.0, %v1283
      %v1285 = vpop.f32.mrb[0].mxu0
      %1286 = vmatprep.mubr.f32.mxu0 0.0
      %1287 = vmatmul.mubr.f32.gmra.mrb[0].mxu0 %v1182
      %v1288 = vpop.f32.mrb[0].mxu0
      %v1289 = vadd.f32 0.0, %v1288
      %v1290 = vpop.f32.mrb[0].mxu0
      %1291 = vdwg.mxu0
      %v1292 = vadd.f32 %v1171, %v1254
      %v1293 = vadd.f32 %v1172, %v1259
      %v1294 = vadd.f32 %v1173, %v1264
      %v1295 = vadd.f32 %v1174, %v1269
      %v1296 = vadd.f32 %v1175, %v1274
      %v1297 = vadd.f32 %v1176, %v1279
      %v1298 = vadd.f32 %v1177, %v1284
      %v1299 = vadd.f32 %v1178, %v1289
      %v1301 = vrot.slane %v332, 1
      %v1302 = vrot.slane %v333, 1
      %v1303 = vsel %vm493, %v1301, %v1302
      %s1304 = scalar_lea.vmem %s280, 28
      %v1305 = vld [vmem:[%s1304] sm:$0x7]
      %v1306 = vsel %vm343, %v1303, 0
      %v1309 = vsel %vm368, %v1305, 0
      %1311 = vmatprep.subr.mxu0 0.0
      %1312 = vmatpush1.msra.mxu0 %v1309
      %1313 = vmatprep.subr.mxu0 0.0
      %1314 = vmatpush1.msra.mxu0 0.0
      %1315 = vmatprep.subr.mxu0 0.0
      %1316 = vmatpush1.msra.mxu0 0.0
      %1317 = vmatprep.subr.mxu0 0.0
      %1318 = vmatpush1.msra.mxu0 0.0
      %1319 = vmatprep.subr.mxu0 0.0
      %1320 = vmatpush1.msra.mxu0 0.0
      %1321 = vmatprep.subr.mxu0 0.0
      %1322 = vmatpush1.msra.mxu0 0.0
      %1323 = vmatprep.subr.mxu0 0.0
      %1324 = vmatpush1.msra.mxu0 0.0
      %1325 = vmatprep.subr.mxu0 0.0
      %1326 = vmatpush1.msra.mxu0 0.0
      %1327 = vmatprep.subr.mxu0 0.0
      %1328 = vmatpush1.msra.mxu0 0.0
      %1329 = vmatprep.subr.mxu0 0.0
      %1330 = vmatpush1.msra.mxu0 0.0
      %1331 = vmatprep.subr.mxu0 0.0
      %1332 = vmatpush1.msra.mxu0 0.0
      %1333 = vmatprep.subr.mxu0 0.0
      %1334 = vmatpush1.msra.mxu0 0.0
      %1335 = vmatprep.subr.mxu0 0.0
      %1336 = vmatpush1.msra.mxu0 0.0
      %1337 = vmatprep.subr.mxu0 0.0
      %1338 = vmatpush1.msra.mxu0 0.0
      %1339 = vmatprep.subr.mxu0 0.0
      %1340 = vmatpush1.msra.mxu0 0.0
      %1341 = vmatprep.subr.mxu0 0.0
      %1342 = vmatpush1.msra.mxu0 0.0
      %1343 = vmatprep.subr.mxu0 0.0
      %1344 = vmatpush1.msra.mxu0 0.0
      %1345 = vmatprep.subr.mxu0 0.0
      %1346 = vmatpush1.msra.mxu0 0.0
      %1347 = vmatprep.subr.mxu0 0.0
      %1348 = vmatpush1.msra.mxu0 0.0
      %1349 = vmatprep.subr.mxu0 0.0
      %1350 = vmatpush1.msra.mxu0 0.0
      %1351 = vmatprep.subr.mxu0 0.0
      %1352 = vmatpush1.msra.mxu0 0.0
      %1353 = vmatprep.subr.mxu0 0.0
      %1354 = vmatpush1.msra.mxu0 0.0
      %1355 = vmatprep.subr.mxu0 0.0
      %1356 = vmatpush1.msra.mxu0 0.0
      %1357 = vmatprep.subr.mxu0 0.0
      %1358 = vmatpush1.msra.mxu0 0.0
      %1359 = vmatprep.subr.mxu0 0.0
      %1360 = vmatpush1.msra.mxu0 0.0
      %1361 = vmatprep.subr.mxu0 0.0
      %1362 = vmatpush1.msra.mxu0 0.0
      %1363 = vmatprep.subr.mxu0 0.0
      %1364 = vmatpush1.msra.mxu0 0.0
      %1365 = vmatprep.subr.mxu0 0.0
      %1366 = vmatpush1.msra.mxu0 0.0
      %1367 = vmatprep.subr.mxu0 0.0
      %1368 = vmatpush1.msra.mxu0 0.0
      %1369 = vmatprep.subr.mxu0 0.0
      %1370 = vmatpush1.msra.mxu0 0.0
      %1371 = vmatprep.subr.mxu0 0.0
      %1372 = vmatpush1.msra.mxu0 0.0
      %1373 = vmatprep.subr.mxu0 0.0
      %1374 = vmatpush1.msra.mxu0 0.0
      %1375 = vmatprep.mubr.f32.mxu0 0.0
      %1376 = vmatmul.mubr.f32.gmra.mrb[0].mxu0 %v524
      %v1377 = vpop.f32.mrb[0].mxu0
      %v1378 = vadd.f32 0.0, %v1377
      %v1379 = vpop.f32.mrb[0].mxu0
      %1380 = vmatprep.mubr.f32.mxu0 0.0
      %1381 = vmatmul.mubr.f32.gmra.mrb[0].mxu0 %v526
      %v1382 = vpop.f32.mrb[0].mxu0
      %v1383 = vadd.f32 0.0, %v1382
      %v1384 = vpop.f32.mrb[0].mxu0
      %1385 = vmatprep.mubr.f32.mxu0 0.0
      %1386 = vmatmul.mubr.f32.gmra.mrb[0].mxu0 %v528
      %v1387 = vpop.f32.mrb[0].mxu0
      %v1388 = vadd.f32 0.0, %v1387
      %v1389 = vpop.f32.mrb[0].mxu0
      %1390 = vmatprep.mubr.f32.mxu0 0.0
      %1391 = vmatmul.mubr.f32.gmra.mrb[0].mxu0 %v530
      %v1392 = vpop.f32.mrb[0].mxu0
      %v1393 = vadd.f32 0.0, %v1392
      %v1394 = vpop.f32.mrb[0].mxu0
      %1395 = vmatprep.mubr.f32.mxu0 0.0
      %1396 = vmatmul.mubr.f32.gmra.mrb[0].mxu0 %v532
      %v1397 = vpop.f32.mrb[0].mxu0
      %v1398 = vadd.f32 0.0, %v1397
      %v1399 = vpop.f32.mrb[0].mxu0
      %1400 = vmatprep.mubr.f32.mxu0 0.0
      %1401 = vmatmul.mubr.f32.gmra.mrb[0].mxu0 %v534
      %v1402 = vpop.f32.mrb[0].mxu0
      %v1403 = vadd.f32 0.0, %v1402
      %v1404 = vpop.f32.mrb[0].mxu0
      %1405 = vmatprep.mubr.f32.mxu0 0.0
      %1406 = vmatmul.mubr.f32.gmra.mrb[0].mxu0 %v938
      %v1407 = vpop.f32.mrb[0].mxu0
      %v1408 = vadd.f32 0.0, %v1407
      %v1409 = vpop.f32.mrb[0].mxu0
      %1410 = vmatprep.mubr.f32.mxu0 0.0
      %1411 = vmatmul.mubr.f32.gmra.mrb[0].mxu0 %v1306
      %v1412 = vpop.f32.mrb[0].mxu0
      %v1413 = vadd.f32 0.0, %v1412
      %v1414 = vpop.f32.mrb[0].mxu0
      %1415 = vdwg.mxu0
      %v1416 = vadd.f32 %v1292, %v1378
      %v1417 = vadd.f32 %v1293, %v1383
      %v1418 = vadd.f32 %v1294, %v1388
      %v1419 = vadd.f32 %v1295, %v1393
      %v1420 = vadd.f32 %v1296, %v1398
      %v1421 = vadd.f32 %v1297, %v1403
      %v1422 = vadd.f32 %v1298, %v1408
      %v1423 = vadd.f32 %v1299, %v1413
      %v1424 = vrot.slane %v332, 2
      %v1425 = vrot.slane %v333, 2
      %v1426 = vsel %vm652, %v1424, %v1425
      %s1427 = scalar_lea.vmem %s280, 32
      %v1428 = vld [vmem:[%s1427] sm:$0x7]
      %v1429 = vsel %vm343, %v1426, 0
      %v1432 = vsel %vm368, %v1428, 0
      %1434 = vmatprep.subr.mxu0 0.0
      %1435 = vmatpush1.msra.mxu0 %v1432
      %1436 = vmatprep.subr.mxu0 0.0
      %1437 = vmatpush1.msra.mxu0 0.0
      %1438 = vmatprep.subr.mxu0 0.0
      %1439 = vmatpush1.msra.mxu0 0.0
      %1440 = vmatprep.subr.mxu0 0.0
      %1441 = vmatpush1.msra.mxu0 0.0
      %1442 = vmatprep.subr.mxu0 0.0
      %1443 = vmatpush1.msra.mxu0 0.0
      %1444 = vmatprep.subr.mxu0 0.0
      %1445 = vmatpush1.msra.mxu0 0.0
      %1446 = vmatprep.subr.mxu0 0.0
      %1447 = vmatpush1.msra.mxu0 0.0
      %1448 = vmatprep.subr.mxu0 0.0
      %1449 = vmatpush1.msra.mxu0 0.0
      %1450 = vmatprep.subr.mxu0 0.0
      %1451 = vmatpush1.msra.mxu0 0.0
      %1452 = vmatprep.subr.mxu0 0.0
      %1453 = vmatpush1.msra.mxu0 0.0
      %1454 = vmatprep.subr.mxu0 0.0
      %1455 = vmatpush1.msra.mxu0 0.0
      %1456 = vmatprep.subr.mxu0 0.0
      %1457 = vmatpush1.msra.mxu0 0.0
      %1458 = vmatprep.subr.mxu0 0.0
      %1459 = vmatpush1.msra.mxu0 0.0
      %1460 = vmatprep.subr.mxu0 0.0
      %1461 = vmatpush1.msra.mxu0 0.0
      %1462 = vmatprep.subr.mxu0 0.0
      %1463 = vmatpush1.msra.mxu0 0.0
      %1464 = vmatprep.subr.mxu0 0.0
      %1465 = vmatpush1.msra.mxu0 0.0
      %1466 = vmatprep.subr.mxu0 0.0
      %1467 = vmatpush1.msra.mxu0 0.0
      %1468 = vmatprep.subr.mxu0 0.0
      %1469 = vmatpush1.msra.mxu0 0.0
      %1470 = vmatprep.subr.mxu0 0.0
      %1471 = vmatpush1.msra.mxu0 0.0
      %1472 = vmatprep.subr.mxu0 0.0
      %1473 = vmatpush1.msra.mxu0 0.0
      %1474 = vmatprep.subr.mxu0 0.0
      %1475 = vmatpush1.msra.mxu0 0.0
      %1476 = vmatprep.subr.mxu0 0.0
      %1477 = vmatpush1.msra.mxu0 0.0
      %1478 = vmatprep.subr.mxu0 0.0
      %1479 = vmatpush1.msra.mxu0 0.0
      %1480 = vmatprep.subr.mxu0 0.0
      %1481 = vmatpush1.msra.mxu0 0.0
      %1482 = vmatprep.subr.mxu0 0.0
      %1483 = vmatpush1.msra.mxu0 0.0
      %1484 = vmatprep.subr.mxu0 0.0
      %1485 = vmatpush1.msra.mxu0 0.0
      %1486 = vmatprep.subr.mxu0 0.0
      %1487 = vmatpush1.msra.mxu0 0.0
      %1488 = vmatprep.subr.mxu0 0.0
      %1489 = vmatpush1.msra.mxu0 0.0
      %1490 = vmatprep.subr.mxu0 0.0
      %1491 = vmatpush1.msra.mxu0 0.0
      %1492 = vmatprep.subr.mxu0 0.0
      %1493 = vmatpush1.msra.mxu0 0.0
      %1494 = vmatprep.subr.mxu0 0.0
      %1495 = vmatpush1.msra.mxu0 0.0
      %1496 = vmatprep.subr.mxu0 0.0
      %1497 = vmatpush1.msra.mxu0 0.0
      %1498 = vmatprep.mubr.f32.mxu0 0.0
      %1499 = vmatmul.mubr.f32.gmra.mrb[0].mxu0 %v683
      %v1500 = vpop.f32.mrb[0].mxu0
      %v1501 = vadd.f32 0.0, %v1500
      %v1502 = vpop.f32.mrb[0].mxu0
      %1503 = vmatprep.mubr.f32.mxu0 0.0
      %1504 = vmatmul.mubr.f32.gmra.mrb[0].mxu0 %v685
      %v1505 = vpop.f32.mrb[0].mxu0
      %v1506 = vadd.f32 0.0, %v1505
      %v1507 = vpop.f32.mrb[0].mxu0
      %1508 = vmatprep.mubr.f32.mxu0 0.0
      %1509 = vmatmul.mubr.f32.gmra.mrb[0].mxu0 %v687
      %v1510 = vpop.f32.mrb[0].mxu0
      %v1511 = vadd.f32 0.0, %v1510
      %v1512 = vpop.f32.mrb[0].mxu0
      %1513 = vmatprep.mubr.f32.mxu0 0.0
      %1514 = vmatmul.mubr.f32.gmra.mrb[0].mxu0 %v689
      %v1515 = vpop.f32.mrb[0].mxu0
      %v1516 = vadd.f32 0.0, %v1515
      %v1517 = vpop.f32.mrb[0].mxu0
      %1518 = vmatprep.mubr.f32.mxu0 0.0
      %1519 = vmatmul.mubr.f32.gmra.mrb[0].mxu0 %v691
      %v1520 = vpop.f32.mrb[0].mxu0
      %v1521 = vadd.f32 0.0, %v1520
      %v1522 = vpop.f32.mrb[0].mxu0
      %1523 = vmatprep.mubr.f32.mxu0 0.0
      %1524 = vmatmul.mubr.f32.gmra.mrb[0].mxu0 %v693
      %v1525 = vpop.f32.mrb[0].mxu0
      %v1526 = vadd.f32 0.0, %v1525
      %v1527 = vpop.f32.mrb[0].mxu0
      %1528 = vmatprep.mubr.f32.mxu0 0.0
      %1529 = vmatmul.mubr.f32.gmra.mrb[0].mxu0 %v1061
      %v1530 = vpop.f32.mrb[0].mxu0
      %v1531 = vadd.f32 0.0, %v1530
      %v1532 = vpop.f32.mrb[0].mxu0
      %1533 = vmatprep.mubr.f32.mxu0 0.0
      %1534 = vmatmul.mubr.f32.gmra.mrb[0].mxu0 %v1429
      %v1535 = vpop.f32.mrb[0].mxu0
      %v1536 = vadd.f32 0.0, %v1535
      %v1537 = vpop.f32.mrb[0].mxu0
      %1538 = vdwg.mxu0
      %v1539 = vadd.f32 %v1416, %v1501
      %v1540 = vadd.f32 %v1417, %v1506
      %v1541 = vadd.f32 %v1418, %v1511
      %v1542 = vadd.f32 %v1419, %v1516
      %v1543 = vadd.f32 %v1420, %v1521
      %v1544 = vadd.f32 %v1421, %v1526
      %v1545 = vadd.f32 %v1422, %v1531
      %v1546 = vadd.f32 %v1423, %v1536
      %vm1547 = vcmask 130048
      %1548 = vst.msk [vmem:[#allocation2] sm:$0xff] %vm1547, %v1539
      %1549 = vst.msk [vmem:[#allocation2 + $0x8] sm:$0xff] %vm1547, %v1540
      %1550 = vst.msk [vmem:[#allocation2 + $0x10] sm:$0xff] %vm1547, %v1541
      %1551 = vst.msk [vmem:[#allocation2 + $0x18] sm:$0xff] %vm1547, %v1542
      %1552 = vst.msk [vmem:[#allocation2 + $0x20] sm:$0xff] %vm1547, %v1543
      %1553 = vst.msk [vmem:[#allocation2 + $0x28] sm:$0xff] %vm1547, %v1544
      %1554 = vst.msk [vmem:[#allocation2 + $0x30] sm:$0xff] %vm1547, %v1545
      %1555 = vst.msk [vmem:[#allocation2 + $0x38] sm:$0xff] %vm1547, %v1546
      %p1556 = scmp.eq.s32.totalorder %s24, 2
      // Predicated region
      $region41: #{res_conv_forward.3} parent=31 // pred_check
        %p1557 = pneg %p1556
      $region42: #{res_conv_forward.3} parent=31 // pred_check_branch
        %1559 = sbr.rel (%p1557) target = $region44
      $region43: #{res_conv_forward.3} parent=31 // pred_region
        %v1560 = vld [vmem:[#allocation2] sm:$0xff]
        %v1561 = vld [vmem:[#allocation2 + $0x8] sm:$0xff]
        %v1562 = vld [vmem:[#allocation2 + $0x10] sm:$0xff]
        %v1563 = vld [vmem:[#allocation2 + $0x18] sm:$0xff]
        %v1564 = vld [vmem:[#allocation2 + $0x20] sm:$0xff]
        %v1565 = vld [vmem:[#allocation2 + $0x28] sm:$0xff]
        %v1566 = vld [vmem:[#allocation2 + $0x30] sm:$0xff]
        %v1567 = vld [vmem:[#allocation2 + $0x38] sm:$0xff]
        %v1568 = vld [vmem:[%s2] sm:$0x1]
        %v1570 = vlaneseq
        %v1571 = vshrl.u32 %v1570, 7
        %v1572 = vsub.s32 0, %v1571
        %v1573 = vrot.slane %v1568, %v1572
        %v1575 = vadd.f32 %v1560, %v1573
        %v1576 = vadd.f32 %v1561, %v1573
        %v1577 = vadd.f32 %v1562, %v1573
        %v1578 = vadd.f32 %v1563, %v1573
        %v1579 = vadd.f32 %v1564, %v1573
        %v1580 = vadd.f32 %v1565, %v1573
        %v1581 = vadd.f32 %v1566, %v1573
        %v1582 = vadd.f32 %v1567, %v1573
        %1583 = vst.msk [vmem:[%s289] sm:$0xff] %vm1547, %v1575
        %1584 = vst.msk [vmem:[%s289 + $0x8] sm:$0xff] %vm1547, %v1576
        %1585 = vst.msk [vmem:[%s289 + $0x10] sm:$0xff] %vm1547, %v1577
        %1586 = vst.msk [vmem:[%s289 + $0x18] sm:$0xff] %vm1547, %v1578
        %1587 = vst.msk [vmem:[%s289 + $0x20] sm:$0xff] %vm1547, %v1579
        %1588 = vst.msk [vmem:[%s289 + $0x28] sm:$0xff] %vm1547, %v1580
        %1589 = vst.msk [vmem:[%s289 + $0x30] sm:$0xff] %vm1547, %v1581
        %1590 = vst.msk [vmem:[%s289 + $0x38] sm:$0xff] %vm1547, %v1582
        %v1591 = vld [vmem:[%s4] sm:$0x1]
        %v1592 = vsel %vm1547, %v1575, 0.0
        %v1593 = vsel %vm1547, %v1576, 0.0
        %v1594 = vadd.f32 %v1592, %v1593
        %v1595 = vsel %vm1547, %v1577, 0.0
        %v1596 = vadd.f32 %v1594, %v1595
        %v1597 = vsel %vm1547, %v1578, 0.0
        %v1598 = vadd.f32 %v1596, %v1597
        %v1599 = vsel %vm1547, %v1579, 0.0
        %v1600 = vadd.f32 %v1598, %v1599
        %v1601 = vsel %vm1547, %v1580, 0.0
        %v1602 = vadd.f32 %v1600, %v1601
        %v1603 = vsel %vm1547, %v1581, 0.0
        %v1604 = vadd.f32 %v1602, %v1603
        %v1605 = vsel %vm1547, %v1582, 0.0
        %v1606 = vadd.f32 %v1604, %v1605
        %v1607 = vrot.slane %v1606, 4
        %v1608 = vadd.f32 %v1606, %v1607
        %v1609 = vrot.slane %v1608, 2
        %v1610 = vadd.f32 %v1608, %v1609
        %v1611 = vrot.slane %v1610, 1
        %v1612 = vadd.f32 %v1610, %v1611
        %v1613 = vadd.f32 %v1591, %v1612
        %vm1614 = vcmask 122880
        %1615 = vst.msk [vmem:[%s4] sm:$0x1] %vm1614, %v1613
        %v1616 = vld [vmem:[%s5] sm:$0x1]
        %v1617 = vmul.f32 %v1575, %v1575
        %v1618 = vmul.f32 %v1576, %v1576
        %v1619 = vmul.f32 %v1577, %v1577
        %v1620 = vmul.f32 %v1578, %v1578
        %v1621 = vmul.f32 %v1579, %v1579
        %v1622 = vmul.f32 %v1580, %v1580
        %v1623 = vmul.f32 %v1581, %v1581
        %v1624 = vmul.f32 %v1582, %v1582
        %v1625 = vsel %vm1547, %v1617, 0.0
        %v1626 = vsel %vm1547, %v1618, 0.0
        %v1627 = vadd.f32 %v1625, %v1626
        %v1628 = vsel %vm1547, %v1619, 0.0
        %v1629 = vadd.f32 %v1627, %v1628
        %v1630 = vsel %vm1547, %v1620, 0.0
        %v1631 = vadd.f32 %v1629, %v1630
        %v1632 = vsel %vm1547, %v1621, 0.0
        %v1633 = vadd.f32 %v1631, %v1632
        %v1634 = vsel %vm1547, %v1622, 0.0
        %v1635 = vadd.f32 %v1633, %v1634
        %v1636 = vsel %vm1547, %v1623, 0.0
        %v1637 = vadd.f32 %v1635, %v1636
        %v1638 = vsel %vm1547, %v1624, 0.0
        %v1639 = vadd.f32 %v1637, %v1638
        %v1640 = vrot.slane %v1639, 4
        %v1641 = vadd.f32 %v1639, %v1640
        %v1642 = vrot.slane %v1641, 2
        %v1643 = vadd.f32 %v1641, %v1642
        %v1644 = vrot.slane %v1643, 1
        %v1645 = vadd.f32 %v1643, %v1644
        %v1646 = vadd.f32 %v1616, %v1645
        %1647 = vst.msk [vmem:[%s5] sm:$0x1] %vm1614, %v1646
      $region44: #{res_conv_forward.3} parent=31 // pred_fallthru
        _
      %p1648 = scmp.lt.s32.totalorder %s22, 1
      %s1649 = scalar_select %p1648, %s22, 1
      %p1650 = scmp.lt.s32.totalorder %s23, 7
      %s1651 = scalar_select %p1650, %s23, 7
      %s1652 = smul.addr %s1651, 8
      %s1653 = smul.addr %s1649, 64
      %s1654 = sadd.s32 %s1652, %s1653
      %s1655 = smul.addr %s1654, 8
      %s1656 = scalar_lea.vmem %s3, %s1655
      // Predicated region
      $region45: #{res_conv_forward.3} parent=31 // pred_check
        %p1657 = pneg %p133
      $region46: #{res_conv_forward.3} parent=31 // pred_check_branch
        %1659 = sbr.rel (%p1657) target = $region48
      $region47: #{res_conv_forward.3} parent=31 // pred_region
        _
      $region48: #{res_conv_forward.3} parent=31 // pred_fallthru
        _
      // Predicated region
      $region49: #{res_conv_forward.3} parent=31 // pred_check
        %p1660 = pneg %p154
      $region50: #{res_conv_forward.3} parent=31 // pred_check_branch
        %1662 = sbr.rel (%p1660) target = $region52
      $region51: #{res_conv_forward.3} parent=31 // pred_region
        _
      $region52: #{res_conv_forward.3} parent=31 // pred_fallthru
        _
      // Predicated region
      $region53: #{res_conv_forward.3} parent=31 // pred_check
        %p1663 = pneg %p175
      $region54: #{res_conv_forward.3} parent=31 // pred_check_branch
        %1665 = sbr.rel (%p1663) target = $region56
      $region55: #{res_conv_forward.3} parent=31 // pred_region
        _
      $region56: #{res_conv_forward.3} parent=31 // pred_fallthru
        _
      // Predicated region
      $region57: #{res_conv_forward.3} parent=31 // pred_check
        %p1666 = pneg %p154
      $region58: #{res_conv_forward.3} parent=31 // pred_check_branch
        %1668 = sbr.rel (%p1666) target = $region60
      $region59: #{res_conv_forward.3} parent=31 // pred_region
        _
      $region60: #{res_conv_forward.3} parent=31 // pred_fallthru
        _
      // Predicated region
      $region61: #{res_conv_forward.3} parent=31 // pred_check
        %p1669 = pneg %p175
      $region62: #{res_conv_forward.3} parent=31 // pred_check_branch
        %1671 = sbr.rel (%p1669) target = $region64
      $region63: #{res_conv_forward.3} parent=31 // pred_region
        _
      $region64: #{res_conv_forward.3} parent=31 // pred_fallthru
        _
    $region32: #{res_conv_forward.3} parent=5 // pred_fallthru
      _
    %p1672 = scmp.le.s32.totalorder 2, %s12
    // Predicated region
    $region65: #{res_conv_forward.3} parent=5 // pred_check
      %p1673 = pneg %p1672
    $region66: #{res_conv_forward.3} parent=5 // pred_check_branch
      %1675 = sbr.rel (%p1673) target = $region68
    $region67: #{res_conv_forward.3} parent=5 // pred_region
      %s1676 = ssub.s32 %s12, 2
      // Predicated region
      $region69: #{res_conv_forward.3} parent=67 // pred_check
        %p1677 = pneg %p139
      $region70: #{res_conv_forward.3} parent=67 // pred_check_branch
        %1679 = sbr.rel (%p1677) target = $region72
      $region71: #{res_conv_forward.3} parent=67 // pred_region
        %p1680 = scmp.lt.s32.totalorder %s25, 1
        %s1681 = scalar_select %p1680, %s25, 1
        %p1682 = scmp.lt.s32.totalorder %s26, 7
        %s1683 = scalar_select %p1682, %s26, 7
        %s1684 = smul.addr %s1683, 8
        %s1685 = smul.addr %s1681, 64
        %s1686 = sadd.s32 %s1684, %s1685
        %s1687 = smul.addr %s1686, 8
        %s1688 = scalar_lea.vmem %s3, %s1687
      $region72: #{res_conv_forward.3} parent=67 // pred_fallthru
        _
    $region68: #{res_conv_forward.3} parent=5 // pred_fallthru
      _
  $region6: #{res_conv_forward.3} parent=0 // loop_footer
    %s16 = sadd.s32 1, %s12
  $region7: #{res_conv_forward.3} parent=0 // loop_footer_branch
    %11 = sbr.rel target = $region3
  $region8: #{res_conv_forward.3} parent=0 // loop_exit
    _

// kernel: res_conv_forward.5
$region0: #{res_conv_forward.5}
  #allocation0 [shape = 'u32[]', space=smem, size = 0x4, offset = 0x4, fixed_abs, tag = 'smem constant byte address 0x4 - core index']
  #allocation1 [shape = 'u32[144,128]{1,0:T(1,128)}', space=vmem, size = 0x12000, scoped, tag = 'internal scratch']
  %s0 = inlined_call_operand.vmem [shape: f32[128,128], index: 0, kind: input, shape index: {}]
  %s1 = inlined_call_operand.vmem [shape: f32[128,128], index: 1, kind: input, shape index: {}]
  %s2 = inlined_call_operand.vmem [shape: f32[1,128], index: 2, kind: input, shape index: {}]
  %s3 = inlined_call_operand.vmem [shape: f32[1,128], index: 3, kind: input, shape index: {}]
  %s4 = inlined_call_operand.vmem [shape: f32[1,128], index: 4, kind: input, shape index: {}]
  %s5 = inlined_call_operand.vmem [shape: f32[1,128], index: 5, kind: input, shape index: {}]
  %s6 = inlined_call_operand.vmem [shape: f32[128,128], index: 6, kind: output, shape index: {}]
  %s7 = sld [smem:[#allocation0]]
  $region34: #{res_conv_forward.5} parent=0
    _
  %s9 = ssub.s32 1, %s7
  %s10 = scalar_select 0, %s9, %s7
  // Predicated region
  $region2: #{res_conv_forward.5} parent=0 // pred_check
    _
  $region3: #{res_conv_forward.5} parent=0 // pred_check_branch
    %12 = sbr.rel (0) target = $region5
  $region4: #{res_conv_forward.5} parent=0 // pred_region
    _
  $region5: #{res_conv_forward.5} parent=0 // pred_fallthru
    _
  // Predicated region
  $region6: #{res_conv_forward.5} parent=0 // pred_check
    _
  $region7: #{res_conv_forward.5} parent=0 // pred_check_branch
    %14 = sbr.rel (0) target = $region9
  $region8: #{res_conv_forward.5} parent=0 // pred_region
    _
  $region9: #{res_conv_forward.5} parent=0 // pred_fallthru
    _
  // Predicated region
  $region10: #{res_conv_forward.5} parent=0 // pred_check
    _
  $region11: #{res_conv_forward.5} parent=0 // pred_check_branch
    %16 = sbr.rel (0) target = $region13
  $region12: #{res_conv_forward.5} parent=0 // pred_region
    _
  $region13: #{res_conv_forward.5} parent=0 // pred_fallthru
    _
  // Predicated region
  $region14: #{res_conv_forward.5} parent=0 // pred_check
    _
  $region15: #{res_conv_forward.5} parent=0 // pred_check_branch
    %18 = sbr.rel (0) target = $region17
  $region16: #{res_conv_forward.5} parent=0 // pred_region
    _
  $region17: #{res_conv_forward.5} parent=0 // pred_fallthru
    _
  // Predicated region
  $region18: #{res_conv_forward.5} parent=0 // pred_check
    _
  $region19: #{res_conv_forward.5} parent=0 // pred_check_branch
    %20 = sbr.rel (0) target = $region21
  $region20: #{res_conv_forward.5} parent=0 // pred_region
    _
  $region21: #{res_conv_forward.5} parent=0 // pred_fallthru
    _
  // Predicated region
  $region22: #{res_conv_forward.5} parent=0 // pred_check
    _
  $region23: #{res_conv_forward.5} parent=0 // pred_check_branch
    %22 = sbr.rel (0) target = $region25
  $region24: #{res_conv_forward.5} parent=0 // pred_region
    _
  $region25: #{res_conv_forward.5} parent=0 // pred_fallthru
    _
  %v23 = vld [vmem:[%s0] sm:$0xff]
  %v24 = vld [vmem:[%s0 + $0x8] sm:$0xff]
  %v25 = vld [vmem:[%s0 + $0x10] sm:$0xff]
  %v26 = vld [vmem:[%s0 + $0x18] sm:$0xff]
  %v27 = vld [vmem:[%s0 + $0x20] sm:$0xff]
  %v28 = vld [vmem:[%s0 + $0x28] sm:$0xff]
  %v29 = vld [vmem:[%s0 + $0x30] sm:$0xff]
  %v30 = vld [vmem:[%s0 + $0x38] sm:$0xff]
  %v31 = vld [vmem:[%s0 + $0x40] sm:$0xff]
  %v32 = vld [vmem:[%s0 + $0x48] sm:$0xff]
  %v33 = vld [vmem:[%s0 + $0x50] sm:$0xff]
  %v34 = vld [vmem:[%s0 + $0x58] sm:$0xff]
  %v35 = vld [vmem:[%s0 + $0x60] sm:$0xff]
  %v36 = vld [vmem:[%s0 + $0x68] sm:$0xff]
  %v37 = vld [vmem:[%s0 + $0x70] sm:$0xff]
  %v38 = vld [vmem:[%s0 + $0x78] sm:$0xff]
  %v39 = vld [vmem:[%s2] sm:$0x1]
  %v41 = vlaneseq
  %v42 = vshrl.u32 %v41, 7
  %v43 = vsub.s32 0, %v42
  %v44 = vrot.slane %v39, %v43
  %v46 = vmul.f32 %v23, %v44
  %v47 = vmul.f32 %v24, %v44
  %v48 = vmul.f32 %v25, %v44
  %v49 = vmul.f32 %v26, %v44
  %v50 = vmul.f32 %v27, %v44
  %v51 = vmul.f32 %v28, %v44
  %v52 = vmul.f32 %v29, %v44
  %v53 = vmul.f32 %v30, %v44
  %v54 = vmul.f32 %v31, %v44
  %v55 = vmul.f32 %v32, %v44
  %v56 = vmul.f32 %v33, %v44
  %v57 = vmul.f32 %v34, %v44
  %v58 = vmul.f32 %v35, %v44
  %v59 = vmul.f32 %v36, %v44
  %v60 = vmul.f32 %v37, %v44
  %v61 = vmul.f32 %v38, %v44
  %v62 = vld [vmem:[%s3] sm:$0x1]
  %v64 = vlaneseq
  %v65 = vshrl.u32 %v64, 7
  %v66 = vsub.s32 0, %v65
  %v67 = vrot.slane %v62, %v66
  %v69 = vadd.f32 %v46, %v67
  %v70 = vadd.f32 %v47, %v67
  %v71 = vadd.f32 %v48, %v67
  %v72 = vadd.f32 %v49, %v67
  %v73 = vadd.f32 %v50, %v67
  %v74 = vadd.f32 %v51, %v67
  %v75 = vadd.f32 %v52, %v67
  %v76 = vadd.f32 %v53, %v67
  %v77 = vadd.f32 %v54, %v67
  %v78 = vadd.f32 %v55, %v67
  %v79 = vadd.f32 %v56, %v67
  %v80 = vadd.f32 %v57, %v67
  %v81 = vadd.f32 %v58, %v67
  %v82 = vadd.f32 %v59, %v67
  %v83 = vadd.f32 %v60, %v67
  %v84 = vadd.f32 %v61, %v67
  %v85 = vmax.f32 %v69, 0.0
  %v86 = vmax.f32 %v70, 0.0
  %v87 = vmax.f32 %v71, 0.0
  %v88 = vmax.f32 %v72, 0.0
  %v89 = vmax.f32 %v73, 0.0
  %v90 = vmax.f32 %v74, 0.0
  %v91 = vmax.f32 %v75, 0.0
  %v92 = vmax.f32 %v76, 0.0
  %v93 = vmax.f32 %v77, 0.0
  %v94 = vmax.f32 %v78, 0.0
  %v95 = vmax.f32 %v79, 0.0
  %v96 = vmax.f32 %v80, 0.0
  %v97 = vmax.f32 %v81, 0.0
  %v98 = vmax.f32 %v82, 0.0
  %v99 = vmax.f32 %v83, 0.0
  %v100 = vmax.f32 %v84, 0.0
  %v101 = vld [vmem:[%s1] sm:$0xff]
  %v102 = vld [vmem:[%s1 + $0x8] sm:$0xff]
  %v103 = vld [vmem:[%s1 + $0x10] sm:$0xff]
  %v104 = vld [vmem:[%s1 + $0x18] sm:$0xff]
  %v105 = vld [vmem:[%s1 + $0x20] sm:$0xff]
  %v106 = vld [vmem:[%s1 + $0x28] sm:$0xff]
  %v107 = vld [vmem:[%s1 + $0x30] sm:$0xff]
  %v108 = vld [vmem:[%s1 + $0x38] sm:$0xff]
  %v109 = vld [vmem:[%s1 + $0x40] sm:$0xff]
  %v110 = vld [vmem:[%s1 + $0x48] sm:$0xff]
  %v111 = vld [vmem:[%s1 + $0x50] sm:$0xff]
  %v112 = vld [vmem:[%s1 + $0x58] sm:$0xff]
  %v113 = vld [vmem:[%s1 + $0x60] sm:$0xff]
  %v114 = vld [vmem:[%s1 + $0x68] sm:$0xff]
  %v115 = vld [vmem:[%s1 + $0x70] sm:$0xff]
  %v116 = vld [vmem:[%s1 + $0x78] sm:$0xff]
  %v117 = vld [vmem:[%s4] sm:$0x1]
  %v119 = vlaneseq
  %v120 = vshrl.u32 %v119, 7
  %v121 = vsub.s32 0, %v120
  %v122 = vrot.slane %v117, %v121
  %v124 = vmul.f32 %v101, %v122
  %v125 = vmul.f32 %v102, %v122
  %v126 = vmul.f32 %v103, %v122
  %v127 = vmul.f32 %v104, %v122
  %v128 = vmul.f32 %v105, %v122
  %v129 = vmul.f32 %v106, %v122
  %v130 = vmul.f32 %v107, %v122
  %v131 = vmul.f32 %v108, %v122
  %v132 = vmul.f32 %v109, %v122
  %v133 = vmul.f32 %v110, %v122
  %v134 = vmul.f32 %v111, %v122
  %v135 = vmul.f32 %v112, %v122
  %v136 = vmul.f32 %v113, %v122
  %v137 = vmul.f32 %v114, %v122
  %v138 = vmul.f32 %v115, %v122
  %v139 = vmul.f32 %v116, %v122
  %v140 = vld [vmem:[%s5] sm:$0x1]
  %v142 = vlaneseq
  %v143 = vshrl.u32 %v142, 7
  %v144 = vsub.s32 0, %v143
  %v145 = vrot.slane %v140, %v144
  %v147 = vadd.f32 %v124, %v145
  %v148 = vadd.f32 %v125, %v145
  %v149 = vadd.f32 %v126, %v145
  %v150 = vadd.f32 %v127, %v145
  %v151 = vadd.f32 %v128, %v145
  %v152 = vadd.f32 %v129, %v145
  %v153 = vadd.f32 %v130, %v145
  %v154 = vadd.f32 %v131, %v145
  %v155 = vadd.f32 %v132, %v145
  %v156 = vadd.f32 %v133, %v145
  %v157 = vadd.f32 %v134, %v145
  %v158 = vadd.f32 %v135, %v145
  %v159 = vadd.f32 %v136, %v145
  %v160 = vadd.f32 %v137, %v145
  %v161 = vadd.f32 %v138, %v145
  %v162 = vadd.f32 %v139, %v145
  %v163 = vmax.f32 %v147, 0.0
  %v164 = vmax.f32 %v148, 0.0
  %v165 = vmax.f32 %v149, 0.0
  %v166 = vmax.f32 %v150, 0.0
  %v167 = vmax.f32 %v151, 0.0
  %v168 = vmax.f32 %v152, 0.0
  %v169 = vmax.f32 %v153, 0.0
  %v170 = vmax.f32 %v154, 0.0
  %v171 = vmax.f32 %v155, 0.0
  %v172 = vmax.f32 %v156, 0.0
  %v173 = vmax.f32 %v157, 0.0
  %v174 = vmax.f32 %v158, 0.0
  %v175 = vmax.f32 %v159, 0.0
  %v176 = vmax.f32 %v160, 0.0
  %v177 = vmax.f32 %v161, 0.0
  %v178 = vmax.f32 %v162, 0.0
  %v179 = vadd.f32 %v85, %v163
  %v180 = vadd.f32 %v86, %v164
  %v181 = vadd.f32 %v87, %v165
  %v182 = vadd.f32 %v88, %v166
  %v183 = vadd.f32 %v89, %v167
  %v184 = vadd.f32 %v90, %v168
  %v185 = vadd.f32 %v91, %v169
  %v186 = vadd.f32 %v92, %v170
  %v187 = vadd.f32 %v93, %v171
  %v188 = vadd.f32 %v94, %v172
  %v189 = vadd.f32 %v95, %v173
  %v190 = vadd.f32 %v96, %v174
  %v191 = vadd.f32 %v97, %v175
  %v192 = vadd.f32 %v98, %v176
  %v193 = vadd.f32 %v99, %v177
  %v194 = vadd.f32 %v100, %v178
  %195 = vst [vmem:[%s6] sm:$0xff] %v179
  %196 = vst [vmem:[%s6 + $0x8] sm:$0xff] %v180
  %197 = vst [vmem:[%s6 + $0x10] sm:$0xff] %v181
  %198 = vst [vmem:[%s6 + $0x18] sm:$0xff] %v182
  %199 = vst [vmem:[%s6 + $0x20] sm:$0xff] %v183
  %200 = vst [vmem:[%s6 + $0x28] sm:$0xff] %v184
  %201 = vst [vmem:[%s6 + $0x30] sm:$0xff] %v185
  %202 = vst [vmem:[%s6 + $0x38] sm:$0xff] %v186
  %203 = vst [vmem:[%s6 + $0x40] sm:$0xff] %v187
  %204 = vst [vmem:[%s6 + $0x48] sm:$0xff] %v188
  %205 = vst [vmem:[%s6 + $0x50] sm:$0xff] %v189
  %206 = vst [vmem:[%s6 + $0x58] sm:$0xff] %v190
  %207 = vst [vmem:[%s6 + $0x60] sm:$0xff] %v191
  %208 = vst [vmem:[%s6 + $0x68] sm:$0xff] %v192
  %209 = vst [vmem:[%s6 + $0x70] sm:$0xff] %v193
  %210 = vst [vmem:[%s6 + $0x78] sm:$0xff] %v194
  // Predicated region
  $region26: #{res_conv_forward.5} parent=0 // pred_check
    _
  $region27: #{res_conv_forward.5} parent=0 // pred_check_branch
    %212 = sbr.rel (0) target = $region29
  $region28: #{res_conv_forward.5} parent=0 // pred_region
    _
  $region29: #{res_conv_forward.5} parent=0 // pred_fallthru
    _
  // Predicated region
  $region30: #{res_conv_forward.5} parent=0 // pred_check
    _
  $region31: #{res_conv_forward.5} parent=0 // pred_check_branch
    %214 = sbr.rel (0) target = $region33
  $region32: #{res_conv_forward.5} parent=0 // pred_region
    _
  $region33: #{res_conv_forward.5} parent=0 // pred_fallthru
    _

// kernel: res_conv_forward.4
$region0: #{res_conv_forward.4}
  #allocation0 [shape = 'u32[]', space=smem, size = 0x4, offset = 0x4, fixed_abs, tag = 'smem constant byte address 0x4 - core index']
  #allocation1 [shape = 'u32[144,128]{1,0:T(1,128)}', space=vmem, size = 0x12000, scoped, tag = 'internal scratch']
  #allocation2 [shape = 'f32[64,16]{1,0:T(8,128)}', space=vmem, size = 0x8000, scoped, tag = 'scratch operand']
  %s0 = inlined_call_operand.vmem [shape: f32[2,10,10,10,16], index: 0, kind: input, shape index: {}]
  %s1 = inlined_call_operand.vmem [shape: f32[3,3,3,16,16], index: 1, kind: input, shape index: {}]
  %s2 = inlined_call_operand.vmem [shape: f32[1,16], index: 2, kind: input, shape index: {}]
  %s3 = inlined_call_operand.vmem [shape: f32[2,8,64,16], index: 3, kind: output, shape index: {0}]
  %s4 = inlined_call_operand.vmem [shape: f32[1,16], index: 4, kind: output, shape index: {1}]
  %s5 = inlined_call_operand.vmem [shape: f32[1,16], index: 5, kind: output, shape index: {2}]
  %6 = xla_tuple %s3, %s4, %s5
  %s7 = sld [smem:[#allocation0]]
  $region73: #{res_conv_forward.4} parent=0
    _
  %s9 = ssub.s32 1, %s7
  %s10 = scalar_select 0, %s9, %s7
  loop: start=0, step=1, limit=50
  $region2: #{res_conv_forward.4} parent=0 // loop_pre_header
    _
  $region3: #{res_conv_forward.4} parent=0 // loop_header
    %s12 = sphi 0, %s16
    %p13 = scmp.ge.s32.totalorder %s12, 50
    %s19 = sphi 0, %s38
    %s20 = sphi 0, %s34
    %s21 = sphi 0, %s30
    %s22 = sphi 0, %s19
    %s23 = sphi 0, %s20
    %s24 = sphi 0, %s21
    %s25 = sphi 0, %s22
    %s26 = sphi 0, %s23
    %s27 = sphi 0, %s24
    %s45 = sphi 0, %s47
    %s48 = sphi 0, %s45
    %s49 = sphi 0, %s48
    %s65 = sphi 0, %s49
    %s71 = sphi 0, %s73
    %s74 = sphi 0, %s71
    %s75 = sphi 0, %s74
    %s91 = sphi 0, %s75
    %s95 = sphi 0, %s95
    %s97 = sphi 0, %s95
    %s98 = sphi 0, %s97
    %s112 = sphi 0, %s98
    %s120 = sphi 0, %s122
    %s123 = sphi 0, %s120
    %s124 = sphi 0, %s123
    %s140 = sphi 0, %s124
    %s144 = sphi 0, %s144
    %s146 = sphi 0, %s144
    %s147 = sphi 0, %s146
    %s161 = sphi 0, %s147
    %s165 = sphi 0, %s165
    %s167 = sphi 0, %s165
    %s168 = sphi 0, %s167
    %s182 = sphi 0, %s168
  $region4: #{res_conv_forward.4} parent=0 // loop_header_branch
    %15 = sbr.rel (%p13) target = $region8
  $region5: #{res_conv_forward.4} parent=0 // loop_body
    %s17 = ssub.s32 %s12, 1
    %s18 = ssub.s32 %s12, 2
    %s28 = sadd.s32 1, %s21
    %p29 = scmp.ge.s32.totalorder %s28, 3
    %s30 = scalar_select %p29, 0, %s28
    %s31 = sadd.s32 1, %s20
    %s32 = scalar_select %p29, %s31, %s20
    %p33 = scmp.ge.s32.totalorder %s32, 8
    %s34 = scalar_select %p33, 0, %s32
    %s35 = sadd.s32 1, %s19
    %s36 = scalar_select %p33, %s35, %s19
    %p37 = scmp.ge.s32.totalorder %s36, 2
    %s38 = scalar_select %p37, 0, %s36
    %s39 = sadd.s32 %s20, %s21
    %s40 = sadd.s32 %s34, %s30
    %s41 = ssub.s32 %s19, %s38
    %s42 = ssub.s32 %s39, %s40
    %s43 = sor.u32 %s41, %s42
    %p44 = scmp.eq.s32.totalorder %s43, 0
    %s46 = sadd.s32 %s45, 1
    %s47 = scalar_select %p44, %s45, %s46
    %p50 = pneg %p44
    %p51 = scmp.eq.s32.totalorder %s12, 47
    %p52 = por %p50, %p51
    %p53 = scmp.ne.s32.totalorder %s45, %s48
    %p54 = scmp.eq.s32.totalorder %s12, 0
    %p55 = por %p53, %p54
    %p56 = scmp.ne.s32.totalorder %s45, %s48
    %p57 = scmp.eq.s32.totalorder %s17, 47
    %p58 = por %p56, %p57
    %p59 = scmp.ne.s32.totalorder %s48, %s49
    %p60 = scmp.eq.s32.totalorder %s17, 0
    %p61 = por %p59, %p60
    %p62 = scmp.ne.s32.totalorder %s48, %s49
    %p63 = scmp.eq.s32.totalorder %s18, 47
    %p64 = por %p62, %p63
    %p66 = scmp.ne.s32.totalorder %s49, %s65
    %p67 = scmp.eq.s32.totalorder %s18, 0
    %p68 = por %p66, %p67
    %s69 = ssub.s32 %s21, %s30
    %p70 = scmp.eq.s32.totalorder %s69, 0
    %s72 = sadd.s32 %s71, 1
    %s73 = scalar_select %p70, %s71, %s72
    %p76 = pneg %p70
    %p77 = scmp.eq.s32.totalorder %s12, 47
    %p78 = por %p76, %p77
    %p79 = scmp.ne.s32.totalorder %s71, %s74
    %p80 = scmp.eq.s32.totalorder %s12, 0
    %p81 = por %p79, %p80
    %p82 = scmp.ne.s32.totalorder %s71, %s74
    %p83 = scmp.eq.s32.totalorder %s17, 47
    %p84 = por %p82, %p83
    %p85 = scmp.ne.s32.totalorder %s74, %s75
    %p86 = scmp.eq.s32.totalorder %s17, 0
    %p87 = por %p85, %p86
    %p88 = scmp.ne.s32.totalorder %s74, %s75
    %p89 = scmp.eq.s32.totalorder %s18, 47
    %p90 = por %p88, %p89
    %p92 = scmp.ne.s32.totalorder %s75, %s91
    %p93 = scmp.eq.s32.totalorder %s18, 0
    %p94 = por %p92, %p93
    %s96 = sadd.s32 %s95, 1
    %p99 = scmp.eq.s32.totalorder %s12, 47
    %p100 = scmp.ne.s32.totalorder %s95, %s97
    %p101 = scmp.eq.s32.totalorder %s12, 0
    %p102 = por %p100, %p101
    %p103 = scmp.ne.s32.totalorder %s95, %s97
    %p104 = scmp.eq.s32.totalorder %s17, 47
    %p105 = por %p103, %p104
    %p106 = scmp.ne.s32.totalorder %s97, %s98
    %p107 = scmp.eq.s32.totalorder %s17, 0
    %p108 = por %p106, %p107
    %p109 = scmp.ne.s32.totalorder %s97, %s98
    %p110 = scmp.eq.s32.totalorder %s18, 47
    %p111 = por %p109, %p110
    %p113 = scmp.ne.s32.totalorder %s98, %s112
    %p114 = scmp.eq.s32.totalorder %s18, 0
    %p115 = por %p113, %p114
    %s116 = ssub.s32 %s19, %s38
    %s117 = ssub.s32 %s20, %s34
    %s118 = sor.u32 %s116, %s117
    %p119 = scmp.eq.s32.totalorder %s118, 0
    %s121 = sadd.s32 %s120, 1
    %s122 = scalar_select %p119, %s120, %s121
    %p125 = pneg %p119
    %p126 = scmp.eq.s32.totalorder %s12, 47
    %p127 = por %p125, %p126
    %p128 = scmp.ne.s32.totalorder %s120, %s123
    %p129 = scmp.eq.s32.totalorder %s12, 0
    %p130 = por %p128, %p129
    %p131 = scmp.ne.s32.totalorder %s120, %s123
    %p132 = scmp.eq.s32.totalorder %s17, 47
    %p133 = por %p131, %p132
    %p134 = scmp.ne.s32.totalorder %s123, %s124
    %p135 = scmp.eq.s32.totalorder %s17, 0
    %p136 = por %p134, %p135
    %p137 = scmp.ne.s32.totalorder %s123, %s124
    %p138 = scmp.eq.s32.totalorder %s18, 47
    %p139 = por %p137, %p138
    %p141 = scmp.ne.s32.totalorder %s124, %s140
    %p142 = scmp.eq.s32.totalorder %s18, 0
    %p143 = por %p141, %p142
    %s145 = sadd.s32 %s144, 1
    %p148 = scmp.eq.s32.totalorder %s12, 47
    %p149 = scmp.ne.s32.totalorder %s144, %s146
    %p150 = scmp.eq.s32.totalorder %s12, 0
    %p151 = por %p149, %p150
    %p152 = scmp.ne.s32.totalorder %s144, %s146
    %p153 = scmp.eq.s32.totalorder %s17, 47
    %p154 = por %p152, %p153
    %p155 = scmp.ne.s32.totalorder %s146, %s147
    %p156 = scmp.eq.s32.totalorder %s17, 0
    %p157 = por %p155, %p156
    %p158 = scmp.ne.s32.totalorder %s146, %s147
    %p159 = scmp.eq.s32.totalorder %s18, 47
    %p160 = por %p158, %p159
    %p162 = scmp.ne.s32.totalorder %s147, %s161
    %p163 = scmp.eq.s32.totalorder %s18, 0
    %p164 = por %p162, %p163
    %s166 = sadd.s32 %s165, 1
    %p169 = scmp.eq.s32.totalorder %s12, 47
    %p170 = scmp.ne.s32.totalorder %s165, %s167
    %p171 = scmp.eq.s32.totalorder %s12, 0
    %p172 = por %p170, %p171
    %p173 = scmp.ne.s32.totalorder %s165, %s167
    %p174 = scmp.eq.s32.totalorder %s17, 47
    %p175 = por %p173, %p174
    %p176 = scmp.ne.s32.totalorder %s167, %s168
    %p177 = scmp.eq.s32.totalorder %s17, 0
    %p178 = por %p176, %p177
    %p179 = scmp.ne.s32.totalorder %s167, %s168
    %p180 = scmp.eq.s32.totalorder %s18, 47
    %p181 = por %p179, %p180
    %p183 = scmp.ne.s32.totalorder %s168, %s182
    %p184 = scmp.eq.s32.totalorder %s18, 0
    %p185 = por %p183, %p184
    %p186 = scmp.le.s32.totalorder 1, %s12
    %p187 = scmp.lt.s32.totalorder %s12, 49
    %p188 = pnand %p186, %p187
    %p189 = pneg %p188
    // Predicated region
    $region9: #{res_conv_forward.4} parent=5 // pred_check
      _
    $region10: #{res_conv_forward.4} parent=5 // pred_check_branch
      %191 = sbr.rel (%p188) target = $region12
    $region11: #{res_conv_forward.4} parent=5 // pred_region
      %s192 = ssub.s32 %s12, 1
      // Predicated region
      $region13: #{res_conv_forward.4} parent=11 // pred_check
        %p193 = pneg %p108
      $region14: #{res_conv_forward.4} parent=11 // pred_check_branch
        %195 = sbr.rel (%p193) target = $region16
      $region15: #{res_conv_forward.4} parent=11 // pred_region
        _
      $region16: #{res_conv_forward.4} parent=11 // pred_fallthru
        _
    $region12: #{res_conv_forward.4} parent=5 // pred_fallthru
      _
    %p196 = scmp.lt.s32.totalorder %s12, 48
    // Predicated region
    $region17: #{res_conv_forward.4} parent=5 // pred_check
      %p197 = pneg %p196
    $region18: #{res_conv_forward.4} parent=5 // pred_check_branch
      %199 = sbr.rel (%p197) target = $region20
    $region19: #{res_conv_forward.4} parent=5 // pred_region
      // Predicated region
      $region21: #{res_conv_forward.4} parent=19 // pred_check
        %p200 = pneg %p55
      $region22: #{res_conv_forward.4} parent=19 // pred_check_branch
        %202 = sbr.rel (%p200) target = $region24
      $region23: #{res_conv_forward.4} parent=19 // pred_region
        %s203 = sadd.s32 %s20, %s21
        %p204 = scmp.lt.s32.totalorder %s19, 1
        %s205 = scalar_select %p204, %s19, 1
        %p206 = scmp.lt.s32.totalorder %s203, 9
        %s207 = scalar_select %p206, %s203, 9
        %s208 = smul.addr %s207, 20
        %s209 = smul.addr %s205, 200
        %s210 = sadd.s32 %s208, %s209
        %s211 = smul.addr %s210, 8
        %s212 = scalar_lea.vmem %s0, %s211
        %s213 = sadd.s32 %s20, %s21
      $region24: #{res_conv_forward.4} parent=19 // pred_fallthru
        _
      // Predicated region
      $region25: #{res_conv_forward.4} parent=19 // pred_check
        %p214 = pneg %p81
      $region26: #{res_conv_forward.4} parent=19 // pred_check_branch
        %216 = sbr.rel (%p214) target = $region28
      $region27: #{res_conv_forward.4} parent=19 // pred_region
        %p217 = scmp.lt.s32.totalorder %s21, 2
        %s218 = scalar_select %p217, %s21, 2
        %s219 = smul.addr %s218, 18
        %s220 = smul.addr %s219, 8
        %s221 = scalar_lea.vmem %s1, %s220
      $region28: #{res_conv_forward.4} parent=19 // pred_fallthru
        _
    $region20: #{res_conv_forward.4} parent=5 // pred_fallthru
      _
    %p222 = scmp.le.s32.totalorder 1, %s12
    %p223 = scmp.lt.s32.totalorder %s12, 49
    %p224 = pnand %p222, %p223
    %p225 = pneg %p224
    // Predicated region
    $region29: #{res_conv_forward.4} parent=5 // pred_check
      _
    $region30: #{res_conv_forward.4} parent=5 // pred_check_branch
      %227 = sbr.rel (%p224) target = $region32
    $region31: #{res_conv_forward.4} parent=5 // pred_region
      %s228 = ssub.s32 %s12, 1
      %s229 = sadd.s32 %s23, %s24
      %p230 = scmp.lt.s32.totalorder %s22, 1
      %s231 = scalar_select %p230, %s22, 1
      %p232 = scmp.lt.s32.totalorder %s229, 9
      %s233 = scalar_select %p232, %s229, 9
      %s234 = smul.addr %s233, 20
      %s235 = smul.addr %s231, 200
      %s236 = sadd.s32 %s234, %s235
      %s237 = smul.addr %s236, 8
      %s238 = scalar_lea.vmem %s0, %s237
      %p239 = pneg %p61
      %p240 = pneg %p58
      %p241 = scmp.lt.s32.totalorder %s24, 2
      %s242 = scalar_select %p241, %s24, 2
      %s243 = smul.addr %s242, 18
      %s244 = smul.addr %s243, 8
      %s245 = scalar_lea.vmem %s1, %s244
      %p246 = pneg %p87
      %p247 = pneg %p84
      %p248 = pneg %p108
      %p249 = pneg %p105
      %p250 = pneg %p136
      %p251 = pneg %p133
      %p252 = scmp.lt.s32.totalorder %s22, 1
      %s253 = scalar_select %p252, %s22, 1
      %p254 = scmp.lt.s32.totalorder %s23, 7
      %s255 = scalar_select %p254, %s23, 7
      %s256 = smul.addr %s255, 8
      %s257 = smul.addr %s253, 64
      %s258 = sadd.s32 %s256, %s257
      %s259 = smul.addr %s258, 8
      %s260 = scalar_lea.vmem %s3, %s259
      %p261 = pneg %p157
      %p262 = pneg %p154
      %p263 = pneg %p178
      %p264 = pneg %p175
      %s265 = sadd.s32 %s23, %s24
      %p266 = scmp.lt.s32.totalorder %s22, 1
      %s267 = scalar_select %p266, %s22, 1
      %p268 = scmp.lt.s32.totalorder %s265, 9
      %s269 = scalar_select %p268, %s265, 9
      %s270 = smul.addr %s269, 20
      %s271 = smul.addr %s267, 200
      %s272 = sadd.s32 %s270, %s271
      %s273 = smul.addr %s272, 8
      %s274 = scalar_lea.vmem %s0, %s273
      %s275 = sadd.s32 %s23, %s24
      %p276 = scmp.lt.s32.totalorder %s24, 2
      %s277 = scalar_select %p276, %s24, 2
      %s278 = smul.addr %s277, 18
      %s279 = smul.addr %s278, 8
      %s280 = scalar_lea.vmem %s1, %s279
      %p281 = scmp.lt.s32.totalorder %s22, 1
      %s282 = scalar_select %p281, %s22, 1
      %p283 = scmp.lt.s32.totalorder %s23, 7
      %s284 = scalar_select %p283, %s23, 7
      %s285 = smul.addr %s284, 8
      %s286 = smul.addr %s282, 64
      %s287 = sadd.s32 %s285, %s286
      %s288 = smul.addr %s287, 8
      %s289 = scalar_lea.vmem %s3, %s288
      %p290 = scmp.eq.s32.totalorder %s22, 0
      %p291 = scmp.eq.s32.totalorder %s23, 0
      %p292 = pnand %p290, %p291
      %p293 = pneg %p292
      %p294 = scmp.eq.s32.totalorder %s24, 0
      %p295 = pnand %p293, %p294
      %p296 = pneg %p295
      // Predicated region
      $region33: #{res_conv_forward.4} parent=31 // pred_check
        _
      $region34: #{res_conv_forward.4} parent=31 // pred_check_branch
        %298 = sbr.rel (%p295) target = $region36
      $region35: #{res_conv_forward.4} parent=31 // pred_region
        %vm299 = vcmask 122880
        %300 = vst.msk [vmem:[%s4] sm:$0x1] %vm299, 0.0
        %301 = vst.msk [vmem:[%s5] sm:$0x1] %vm299, 0.0
      $region36: #{res_conv_forward.4} parent=31 // pred_fallthru
        _
      // Predicated region
      $region37: #{res_conv_forward.4} parent=31 // pred_check
        %p302 = pneg %p294
      $region38: #{res_conv_forward.4} parent=31 // pred_check_branch
        %304 = sbr.rel (%p302) target = $region40
      $region39: #{res_conv_forward.4} parent=31 // pred_region
        %vm305 = vcmask 130048
        %306 = vst.msk [vmem:[#allocation2] sm:$0xff] %vm305, 0.0
        %307 = vst.msk [vmem:[#allocation2 + $0x8] sm:$0xff] %vm305, 0.0
        %308 = vst.msk [vmem:[#allocation2 + $0x10] sm:$0xff] %vm305, 0.0
        %309 = vst.msk [vmem:[#allocation2 + $0x18] sm:$0xff] %vm305, 0.0
        %310 = vst.msk [vmem:[#allocation2 + $0x20] sm:$0xff] %vm305, 0.0
        %311 = vst.msk [vmem:[#allocation2 + $0x28] sm:$0xff] %vm305, 0.0
        %312 = vst.msk [vmem:[#allocation2 + $0x30] sm:$0xff] %vm305, 0.0
        %313 = vst.msk [vmem:[#allocation2 + $0x38] sm:$0xff] %vm305, 0.0
      $region40: #{res_conv_forward.4} parent=31 // pred_fallthru
        _
      %v314 = vld [vmem:[%s274] sm:$0xff]
      %v315 = vld [vmem:[%s274 + $0x8] sm:$0x3]
      %v316 = vld [vmem:[%s274 + $0x10] sm:$0xff]
      %v317 = vld [vmem:[%s274 + $0x18] sm:$0x3]
      %v318 = vld [vmem:[%s274 + $0x20] sm:$0xff]
      %v319 = vld [vmem:[%s274 + $0x28] sm:$0x3]
      %v320 = vld [vmem:[%s274 + $0x30] sm:$0xff]
      %v321 = vld [vmem:[%s274 + $0x38] sm:$0x3]
      %v322 = vld [vmem:[%s274 + $0x40] sm:$0xff]
      %v323 = vld [vmem:[%s274 + $0x48] sm:$0x3]
      %v324 = vld [vmem:[%s274 + $0x50] sm:$0xff]
      %v325 = vld [vmem:[%s274 + $0x58] sm:$0x3]
      %v326 = vld [vmem:[%s274 + $0x60] sm:$0xff]
      %v327 = vld [vmem:[%s274 + $0x68] sm:$0x3]
      %v328 = vld [vmem:[%s274 + $0x70] sm:$0xff]
      %v329 = vld [vmem:[%s274 + $0x78] sm:$0x3]
      %v330 = vld [vmem:[%s274 + $0x80] sm:$0xff]
      %v331 = vld [vmem:[%s274 + $0x88] sm:$0x3]
      %v332 = vld [vmem:[%s274 + $0x90] sm:$0xff]
      %v333 = vld [vmem:[%s274 + $0x98] sm:$0x3]
      %v334 = vld [vmem:[#allocation2] sm:$0xff]
      %v335 = vld [vmem:[#allocation2 + $0x8] sm:$0xff]
      %v336 = vld [vmem:[#allocation2 + $0x10] sm:$0xff]
      %v337 = vld [vmem:[#allocation2 + $0x18] sm:$0xff]
      %v338 = vld [vmem:[#allocation2 + $0x20] sm:$0xff]
      %v339 = vld [vmem:[#allocation2 + $0x28] sm:$0xff]
      %v340 = vld [vmem:[#allocation2 + $0x30] sm:$0xff]
      %v341 = vld [vmem:[#allocation2 + $0x38] sm:$0xff]
      %v342 = vld [vmem:[%s280] sm:$0xff]
      %v343 = vld [vmem:[%s280 + $0x8] sm:$0xff]
      %vm344 = vcmask 130048
      %v346 = vsel %vm344, %v314, 0
      %v349 = vsel %vm344, %v316, 0
      %v352 = vsel %vm344, %v318, 0
      %v355 = vsel %vm344, %v320, 0
      %v358 = vsel %vm344, %v322, 0
      %v361 = vsel %vm344, %v324, 0
      %v364 = vsel %vm344, %v326, 0
      %v367 = vsel %vm344, %v328, 0
      %369 = vmatprep.subr.mxu0 0.0
      %370 = vmatpush1.msra.mxu0 %v342
      %371 = vmatprep.subr.mxu0 0.0
      %372 = vmatpush1.msra.mxu0 %v343
      %373 = vmatprep.subr.mxu0 0.0
      %374 = vmatpush1.msra.mxu0 0.0
      %375 = vmatprep.subr.mxu0 0.0
      %376 = vmatpush1.msra.mxu0 0.0
      %377 = vmatprep.subr.mxu0 0.0
      %378 = vmatpush1.msra.mxu0 0.0
      %379 = vmatprep.subr.mxu0 0.0
      %380 = vmatpush1.msra.mxu0 0.0
      %381 = vmatprep.subr.mxu0 0.0
      %382 = vmatpush1.msra.mxu0 0.0
      %383 = vmatprep.subr.mxu0 0.0
      %384 = vmatpush1.msra.mxu0 0.0
      %385 = vmatprep.subr.mxu0 0.0
      %386 = vmatpush1.msra.mxu0 0.0
      %387 = vmatprep.subr.mxu0 0.0
      %388 = vmatpush1.msra.mxu0 0.0
      %389 = vmatprep.subr.mxu0 0.0
      %390 = vmatpush1.msra.mxu0 0.0
      %391 = vmatprep.subr.mxu0 0.0
      %392 = vmatpush1.msra.mxu0 0.0
      %393 = vmatprep.subr.mxu0 0.0
      %394 = vmatpush1.msra.mxu0 0.0
      %395 = vmatprep.subr.mxu0 0.0
      %396 = vmatpush1.msra.mxu0 0.0
      %397 = vmatprep.subr.mxu0 0.0
      %398 = vmatpush1.msra.mxu0 0.0
      %399 = vmatprep.subr.mxu0 0.0
      %400 = vmatpush1.msra.mxu0 0.0
      %401 = vmatprep.subr.mxu0 0.0
      %402 = vmatpush1.msra.mxu0 0.0
      %403 = vmatprep.subr.mxu0 0.0
      %404 = vmatpush1.msra.mxu0 0.0
      %405 = vmatprep.subr.mxu0 0.0
      %406 = vmatpush1.msra.mxu0 0.0
      %407 = vmatprep.subr.mxu0 0.0
      %408 = vmatpush1.msra.mxu0 0.0
      %409 = vmatprep.subr.mxu0 0.0
      %410 = vmatpush1.msra.mxu0 0.0
      %411 = vmatprep.subr.mxu0 0.0
      %412 = vmatpush1.msra.mxu0 0.0
      %413 = vmatprep.subr.mxu0 0.0
      %414 = vmatpush1.msra.mxu0 0.0
      %415 = vmatprep.subr.mxu0 0.0
      %416 = vmatpush1.msra.mxu0 0.0
      %417 = vmatprep.subr.mxu0 0.0
      %418 = vmatpush1.msra.mxu0 0.0
      %419 = vmatprep.subr.mxu0 0.0
      %420 = vmatpush1.msra.mxu0 0.0
      %421 = vmatprep.subr.mxu0 0.0
      %422 = vmatpush1.msra.mxu0 0.0
      %423 = vmatprep.subr.mxu0 0.0
      %424 = vmatpush1.msra.mxu0 0.0
      %425 = vmatprep.subr.mxu0 0.0
      %426 = vmatpush1.msra.mxu0 0.0
      %427 = vmatprep.subr.mxu0 0.0
      %428 = vmatpush1.msra.mxu0 0.0
      %429 = vmatprep.subr.mxu0 0.0
      %430 = vmatpush1.msra.mxu0 0.0
      %431 = vmatprep.subr.mxu0 0.0
      %432 = vmatpush1.msra.mxu0 0.0
      %433 = vmatprep.mubr.f32.mxu0 0.0
      %434 = vmatmul.mubr.f32.gmra.mrb[0].mxu0 %v346
      %v435 = vpop.f32.mrb[0].mxu0
      %v436 = vadd.f32 0.0, %v435
      %v437 = vpop.f32.mrb[0].mxu0
      %438 = vmatprep.mubr.f32.mxu0 0.0
      %439 = vmatmul.mubr.f32.gmra.mrb[0].mxu0 %v349
      %v440 = vpop.f32.mrb[0].mxu0
      %v441 = vadd.f32 0.0, %v440
      %v442 = vpop.f32.mrb[0].mxu0
      %443 = vmatprep.mubr.f32.mxu0 0.0
      %444 = vmatmul.mubr.f32.gmra.mrb[0].mxu0 %v352
      %v445 = vpop.f32.mrb[0].mxu0
      %v446 = vadd.f32 0.0, %v445
      %v447 = vpop.f32.mrb[0].mxu0
      %448 = vmatprep.mubr.f32.mxu0 0.0
      %449 = vmatmul.mubr.f32.gmra.mrb[0].mxu0 %v355
      %v450 = vpop.f32.mrb[0].mxu0
      %v451 = vadd.f32 0.0, %v450
      %v452 = vpop.f32.mrb[0].mxu0
      %453 = vmatprep.mubr.f32.mxu0 0.0
      %454 = vmatmul.mubr.f32.gmra.mrb[0].mxu0 %v358
      %v455 = vpop.f32.mrb[0].mxu0
      %v456 = vadd.f32 0.0, %v455
      %v457 = vpop.f32.mrb[0].mxu0
      %458 = vmatprep.mubr.f32.mxu0 0.0
      %459 = vmatmul.mubr.f32.gmra.mrb[0].mxu0 %v361
      %v460 = vpop.f32.mrb[0].mxu0
      %v461 = vadd.f32 0.0, %v460
      %v462 = vpop.f32.mrb[0].mxu0
      %463 = vmatprep.mubr.f32.mxu0 0.0
      %464 = vmatmul.mubr.f32.gmra.mrb[0].mxu0 %v364
      %v465 = vpop.f32.mrb[0].mxu0
      %v466 = vadd.f32 0.0, %v465
      %v467 = vpop.f32.mrb[0].mxu0
      %468 = vmatprep.mubr.f32.mxu0 0.0
      %469 = vmatmul.mubr.f32.gmra.mrb[0].mxu0 %v367
      %v470 = vpop.f32.mrb[0].mxu0
      %v471 = vadd.f32 0.0, %v470
      %v472 = vpop.f32.mrb[0].mxu0
      %473 = vdwg.mxu0
      %v474 = vadd.f32 %v334, %v436
      %v475 = vadd.f32 %v335, %v441
      %v476 = vadd.f32 %v336, %v446
      %v477 = vadd.f32 %v337, %v451
      %v478 = vadd.f32 %v338, %v456
      %v479 = vadd.f32 %v339, %v461
      %v480 = vadd.f32 %v340, %v466
      %v481 = vadd.f32 %v341, %v471
      %vm490 = vcmask 1046528
      %v491 = vrot.slane %v314, 1
      %v492 = vrot.slane %v315, 1
      %v493 = vsel %vm490, %v491, %v492
      %v494 = vrot.slane %v316, 1
      %v495 = vrot.slane %v317, 1
      %v496 = vsel %vm490, %v494, %v495
      %v497 = vrot.slane %v318, 1
      %v498 = vrot.slane %v319, 1
      %v499 = vsel %vm490, %v497, %v498
      %v500 = vrot.slane %v320, 1
      %v501 = vrot.slane %v321, 1
      %v502 = vsel %vm490, %v500, %v501
      %v503 = vrot.slane %v322, 1
      %v504 = vrot.slane %v323, 1
      %v505 = vsel %vm490, %v503, %v504
      %v506 = vrot.slane %v324, 1
      %v507 = vrot.slane %v325, 1
      %v508 = vsel %vm490, %v506, %v507
      %v509 = vrot.slane %v326, 1
      %v510 = vrot.slane %v327, 1
      %v511 = vsel %vm490, %v509, %v510
      %v512 = vrot.slane %v328, 1
      %v513 = vrot.slane %v329, 1
      %v514 = vsel %vm490, %v512, %v513
      %s515 = scalar_lea.vmem %s280, 16
      %v516 = vld [vmem:[%s515] sm:$0xff]
      %v517 = vld [vmem:[%s515 + $0x8] sm:$0xff]
      %v518 = vsel %vm344, %v493, 0
      %v520 = vsel %vm344, %v496, 0
      %v522 = vsel %vm344, %v499, 0
      %v524 = vsel %vm344, %v502, 0
      %v526 = vsel %vm344, %v505, 0
      %v528 = vsel %vm344, %v508, 0
      %v530 = vsel %vm344, %v511, 0
      %v532 = vsel %vm344, %v514, 0
      %534 = vmatprep.subr.mxu0 0.0
      %535 = vmatpush1.msra.mxu0 %v516
      %536 = vmatprep.subr.mxu0 0.0
      %537 = vmatpush1.msra.mxu0 %v517
      %538 = vmatprep.subr.mxu0 0.0
      %539 = vmatpush1.msra.mxu0 0.0
      %540 = vmatprep.subr.mxu0 0.0
      %541 = vmatpush1.msra.mxu0 0.0
      %542 = vmatprep.subr.mxu0 0.0
      %543 = vmatpush1.msra.mxu0 0.0
      %544 = vmatprep.subr.mxu0 0.0
      %545 = vmatpush1.msra.mxu0 0.0
      %546 = vmatprep.subr.mxu0 0.0
      %547 = vmatpush1.msra.mxu0 0.0
      %548 = vmatprep.subr.mxu0 0.0
      %549 = vmatpush1.msra.mxu0 0.0
      %550 = vmatprep.subr.mxu0 0.0
      %551 = vmatpush1.msra.mxu0 0.0
      %552 = vmatprep.subr.mxu0 0.0
      %553 = vmatpush1.msra.mxu0 0.0
      %554 = vmatprep.subr.mxu0 0.0
      %555 = vmatpush1.msra.mxu0 0.0
      %556 = vmatprep.subr.mxu0 0.0
      %557 = vmatpush1.msra.mxu0 0.0
      %558 = vmatprep.subr.mxu0 0.0
      %559 = vmatpush1.msra.mxu0 0.0
      %560 = vmatprep.subr.mxu0 0.0
      %561 = vmatpush1.msra.mxu0 0.0
      %562 = vmatprep.subr.mxu0 0.0
      %563 = vmatpush1.msra.mxu0 0.0
      %564 = vmatprep.subr.mxu0 0.0
      %565 = vmatpush1.msra.mxu0 0.0
      %566 = vmatprep.subr.mxu0 0.0
      %567 = vmatpush1.msra.mxu0 0.0
      %568 = vmatprep.subr.mxu0 0.0
      %569 = vmatpush1.msra.mxu0 0.0
      %570 = vmatprep.subr.mxu0 0.0
      %571 = vmatpush1.msra.mxu0 0.0
      %572 = vmatprep.subr.mxu0 0.0
      %573 = vmatpush1.msra.mxu0 0.0
      %574 = vmatprep.subr.mxu0 0.0
      %575 = vmatpush1.msra.mxu0 0.0
      %576 = vmatprep.subr.mxu0 0.0
      %577 = vmatpush1.msra.mxu0 0.0
      %578 = vmatprep.subr.mxu0 0.0
      %579 = vmatpush1.msra.mxu0 0.0
      %580 = vmatprep.subr.mxu0 0.0
      %581 = vmatpush1.msra.mxu0 0.0
      %582 = vmatprep.subr.mxu0 0.0
      %583 = vmatpush1.msra.mxu0 0.0
      %584 = vmatprep.subr.mxu0 0.0
      %585 = vmatpush1.msra.mxu0 0.0
      %586 = vmatprep.subr.mxu0 0.0
      %587 = vmatpush1.msra.mxu0 0.0
      %588 = vmatprep.subr.mxu0 0.0
      %589 = vmatpush1.msra.mxu0 0.0
      %590 = vmatprep.subr.mxu0 0.0
      %591 = vmatpush1.msra.mxu0 0.0
      %592 = vmatprep.subr.mxu0 0.0
      %593 = vmatpush1.msra.mxu0 0.0
      %594 = vmatprep.subr.mxu0 0.0
      %595 = vmatpush1.msra.mxu0 0.0
      %596 = vmatprep.subr.mxu0 0.0
      %597 = vmatpush1.msra.mxu0 0.0
      %598 = vmatprep.mubr.f32.mxu0 0.0
      %599 = vmatmul.mubr.f32.gmra.mrb[0].mxu0 %v518
      %v600 = vpop.f32.mrb[0].mxu0
      %v601 = vadd.f32 0.0, %v600
      %v602 = vpop.f32.mrb[0].mxu0
      %603 = vmatprep.mubr.f32.mxu0 0.0
      %604 = vmatmul.mubr.f32.gmra.mrb[0].mxu0 %v520
      %v605 = vpop.f32.mrb[0].mxu0
      %v606 = vadd.f32 0.0, %v605
      %v607 = vpop.f32.mrb[0].mxu0
      %608 = vmatprep.mubr.f32.mxu0 0.0
      %609 = vmatmul.mubr.f32.gmra.mrb[0].mxu0 %v522
      %v610 = vpop.f32.mrb[0].mxu0
      %v611 = vadd.f32 0.0, %v610
      %v612 = vpop.f32.mrb[0].mxu0
      %613 = vmatprep.mubr.f32.mxu0 0.0
      %614 = vmatmul.mubr.f32.gmra.mrb[0].mxu0 %v524
      %v615 = vpop.f32.mrb[0].mxu0
      %v616 = vadd.f32 0.0, %v615
      %v617 = vpop.f32.mrb[0].mxu0
      %618 = vmatprep.mubr.f32.mxu0 0.0
      %619 = vmatmul.mubr.f32.gmra.mrb[0].mxu0 %v526
      %v620 = vpop.f32.mrb[0].mxu0
      %v621 = vadd.f32 0.0, %v620
      %v622 = vpop.f32.mrb[0].mxu0
      %623 = vmatprep.mubr.f32.mxu0 0.0
      %624 = vmatmul.mubr.f32.gmra.mrb[0].mxu0 %v528
      %v625 = vpop.f32.mrb[0].mxu0
      %v626 = vadd.f32 0.0, %v625
      %v627 = vpop.f32.mrb[0].mxu0
      %628 = vmatprep.mubr.f32.mxu0 0.0
      %629 = vmatmul.mubr.f32.gmra.mrb[0].mxu0 %v530
      %v630 = vpop.f32.mrb[0].mxu0
      %v631 = vadd.f32 0.0, %v630
      %v632 = vpop.f32.mrb[0].mxu0
      %633 = vmatprep.mubr.f32.mxu0 0.0
      %634 = vmatmul.mubr.f32.gmra.mrb[0].mxu0 %v532
      %v635 = vpop.f32.mrb[0].mxu0
      %v636 = vadd.f32 0.0, %v635
      %v637 = vpop.f32.mrb[0].mxu0
      %638 = vdwg.mxu0
      %v639 = vadd.f32 %v474, %v601
      %v640 = vadd.f32 %v475, %v606
      %v641 = vadd.f32 %v476, %v611
      %v642 = vadd.f32 %v477, %v616
      %v643 = vadd.f32 %v478, %v621
      %v644 = vadd.f32 %v479, %v626
      %v645 = vadd.f32 %v480, %v631
      %v646 = vadd.f32 %v481, %v636
      %vm647 = vcmask 1045504
      %v648 = vrot.slane %v314, 2
      %v649 = vrot.slane %v315, 2
      %v650 = vsel %vm647, %v648, %v649
      %v651 = vrot.slane %v316, 2
      %v652 = vrot.slane %v317, 2
      %v653 = vsel %vm647, %v651, %v652
      %v654 = vrot.slane %v318, 2
      %v655 = vrot.slane %v319, 2
      %v656 = vsel %vm647, %v654, %v655
      %v657 = vrot.slane %v320, 2
      %v658 = vrot.slane %v321, 2
      %v659 = vsel %vm647, %v657, %v658
      %v660 = vrot.slane %v322, 2
      %v661 = vrot.slane %v323, 2
      %v662 = vsel %vm647, %v660, %v661
      %v663 = vrot.slane %v324, 2
      %v664 = vrot.slane %v325, 2
      %v665 = vsel %vm647, %v663, %v664
      %v666 = vrot.slane %v326, 2
      %v667 = vrot.slane %v327, 2
      %v668 = vsel %vm647, %v666, %v667
      %v669 = vrot.slane %v328, 2
      %v670 = vrot.slane %v329, 2
      %v671 = vsel %vm647, %v669, %v670
      %s672 = scalar_lea.vmem %s280, 32
      %v673 = vld [vmem:[%s672] sm:$0xff]
      %v674 = vld [vmem:[%s672 + $0x8] sm:$0xff]
      %v675 = vsel %vm344, %v650, 0
      %v677 = vsel %vm344, %v653, 0
      %v679 = vsel %vm344, %v656, 0
      %v681 = vsel %vm344, %v659, 0
      %v683 = vsel %vm344, %v662, 0
      %v685 = vsel %vm344, %v665, 0
      %v687 = vsel %vm344, %v668, 0
      %v689 = vsel %vm344, %v671, 0
      %691 = vmatprep.subr.mxu0 0.0
      %692 = vmatpush1.msra.mxu0 %v673
      %693 = vmatprep.subr.mxu0 0.0
      %694 = vmatpush1.msra.mxu0 %v674
      %695 = vmatprep.subr.mxu0 0.0
      %696 = vmatpush1.msra.mxu0 0.0
      %697 = vmatprep.subr.mxu0 0.0
      %698 = vmatpush1.msra.mxu0 0.0
      %699 = vmatprep.subr.mxu0 0.0
      %700 = vmatpush1.msra.mxu0 0.0
      %701 = vmatprep.subr.mxu0 0.0
      %702 = vmatpush1.msra.mxu0 0.0
      %703 = vmatprep.subr.mxu0 0.0
      %704 = vmatpush1.msra.mxu0 0.0
      %705 = vmatprep.subr.mxu0 0.0
      %706 = vmatpush1.msra.mxu0 0.0
      %707 = vmatprep.subr.mxu0 0.0
      %708 = vmatpush1.msra.mxu0 0.0
      %709 = vmatprep.subr.mxu0 0.0
      %710 = vmatpush1.msra.mxu0 0.0
      %711 = vmatprep.subr.mxu0 0.0
      %712 = vmatpush1.msra.mxu0 0.0
      %713 = vmatprep.subr.mxu0 0.0
      %714 = vmatpush1.msra.mxu0 0.0
      %715 = vmatprep.subr.mxu0 0.0
      %716 = vmatpush1.msra.mxu0 0.0
      %717 = vmatprep.subr.mxu0 0.0
      %718 = vmatpush1.msra.mxu0 0.0
      %719 = vmatprep.subr.mxu0 0.0
      %720 = vmatpush1.msra.mxu0 0.0
      %721 = vmatprep.subr.mxu0 0.0
      %722 = vmatpush1.msra.mxu0 0.0
      %723 = vmatprep.subr.mxu0 0.0
      %724 = vmatpush1.msra.mxu0 0.0
      %725 = vmatprep.subr.mxu0 0.0
      %726 = vmatpush1.msra.mxu0 0.0
      %727 = vmatprep.subr.mxu0 0.0
      %728 = vmatpush1.msra.mxu0 0.0
      %729 = vmatprep.subr.mxu0 0.0
      %730 = vmatpush1.msra.mxu0 0.0
      %731 = vmatprep.subr.mxu0 0.0
      %732 = vmatpush1.msra.mxu0 0.0
      %733 = vmatprep.subr.mxu0 0.0
      %734 = vmatpush1.msra.mxu0 0.0
      %735 = vmatprep.subr.mxu0 0.0
      %736 = vmatpush1.msra.mxu0 0.0
      %737 = vmatprep.subr.mxu0 0.0
      %738 = vmatpush1.msra.mxu0 0.0
      %739 = vmatprep.subr.mxu0 0.0
      %740 = vmatpush1.msra.mxu0 0.0
      %741 = vmatprep.subr.mxu0 0.0
      %742 = vmatpush1.msra.mxu0 0.0
      %743 = vmatprep.subr.mxu0 0.0
      %744 = vmatpush1.msra.mxu0 0.0
      %745 = vmatprep.subr.mxu0 0.0
      %746 = vmatpush1.msra.mxu0 0.0
      %747 = vmatprep.subr.mxu0 0.0
      %748 = vmatpush1.msra.mxu0 0.0
      %749 = vmatprep.subr.mxu0 0.0
      %750 = vmatpush1.msra.mxu0 0.0
      %751 = vmatprep.subr.mxu0 0.0
      %752 = vmatpush1.msra.mxu0 0.0
      %753 = vmatprep.subr.mxu0 0.0
      %754 = vmatpush1.msra.mxu0 0.0
      %755 = vmatprep.mubr.f32.mxu0 0.0
      %756 = vmatmul.mubr.f32.gmra.mrb[0].mxu0 %v675
      %v757 = vpop.f32.mrb[0].mxu0
      %v758 = vadd.f32 0.0, %v757
      %v759 = vpop.f32.mrb[0].mxu0
      %760 = vmatprep.mubr.f32.mxu0 0.0
      %761 = vmatmul.mubr.f32.gmra.mrb[0].mxu0 %v677
      %v762 = vpop.f32.mrb[0].mxu0
      %v763 = vadd.f32 0.0, %v762
      %v764 = vpop.f32.mrb[0].mxu0
      %765 = vmatprep.mubr.f32.mxu0 0.0
      %766 = vmatmul.mubr.f32.gmra.mrb[0].mxu0 %v679
      %v767 = vpop.f32.mrb[0].mxu0
      %v768 = vadd.f32 0.0, %v767
      %v769 = vpop.f32.mrb[0].mxu0
      %770 = vmatprep.mubr.f32.mxu0 0.0
      %771 = vmatmul.mubr.f32.gmra.mrb[0].mxu0 %v681
      %v772 = vpop.f32.mrb[0].mxu0
      %v773 = vadd.f32 0.0, %v772
      %v774 = vpop.f32.mrb[0].mxu0
      %775 = vmatprep.mubr.f32.mxu0 0.0
      %776 = vmatmul.mubr.f32.gmra.mrb[0].mxu0 %v683
      %v777 = vpop.f32.mrb[0].mxu0
      %v778 = vadd.f32 0.0, %v777
      %v779 = vpop.f32.mrb[0].mxu0
      %780 = vmatprep.mubr.f32.mxu0 0.0
      %781 = vmatmul.mubr.f32.gmra.mrb[0].mxu0 %v685
      %v782 = vpop.f32.mrb[0].mxu0
      %v783 = vadd.f32 0.0, %v782
      %v784 = vpop.f32.mrb[0].mxu0
      %785 = vmatprep.mubr.f32.mxu0 0.0
      %786 = vmatmul.mubr.f32.gmra.mrb[0].mxu0 %v687
      %v787 = vpop.f32.mrb[0].mxu0
      %v788 = vadd.f32 0.0, %v787
      %v789 = vpop.f32.mrb[0].mxu0
      %790 = vmatprep.mubr.f32.mxu0 0.0
      %791 = vmatmul.mubr.f32.gmra.mrb[0].mxu0 %v689
      %v792 = vpop.f32.mrb[0].mxu0
      %v793 = vadd.f32 0.0, %v792
      %v794 = vpop.f32.mrb[0].mxu0
      %795 = vdwg.mxu0
      %v796 = vadd.f32 %v639, %v758
      %v797 = vadd.f32 %v640, %v763
      %v798 = vadd.f32 %v641, %v768
      %v799 = vadd.f32 %v642, %v773
      %v800 = vadd.f32 %v643, %v778
      %v801 = vadd.f32 %v644, %v783
      %v802 = vadd.f32 %v645, %v788
      %v803 = vadd.f32 %v646, %v793
      %s804 = scalar_lea.vmem %s280, 48
      %v805 = vld [vmem:[%s804] sm:$0xff]
      %v806 = vld [vmem:[%s804 + $0x8] sm:$0xff]
      %v808 = vsel %vm344, %v330, 0
      %810 = vmatprep.subr.mxu0 0.0
      %811 = vmatpush1.msra.mxu0 %v805
      %812 = vmatprep.subr.mxu0 0.0
      %813 = vmatpush1.msra.mxu0 %v806
      %814 = vmatprep.subr.mxu0 0.0
      %815 = vmatpush1.msra.mxu0 0.0
      %816 = vmatprep.subr.mxu0 0.0
      %817 = vmatpush1.msra.mxu0 0.0
      %818 = vmatprep.subr.mxu0 0.0
      %819 = vmatpush1.msra.mxu0 0.0
      %820 = vmatprep.subr.mxu0 0.0
      %821 = vmatpush1.msra.mxu0 0.0
      %822 = vmatprep.subr.mxu0 0.0
      %823 = vmatpush1.msra.mxu0 0.0
      %824 = vmatprep.subr.mxu0 0.0
      %825 = vmatpush1.msra.mxu0 0.0
      %826 = vmatprep.subr.mxu0 0.0
      %827 = vmatpush1.msra.mxu0 0.0
      %828 = vmatprep.subr.mxu0 0.0
      %829 = vmatpush1.msra.mxu0 0.0
      %830 = vmatprep.subr.mxu0 0.0
      %831 = vmatpush1.msra.mxu0 0.0
      %832 = vmatprep.subr.mxu0 0.0
      %833 = vmatpush1.msra.mxu0 0.0
      %834 = vmatprep.subr.mxu0 0.0
      %835 = vmatpush1.msra.mxu0 0.0
      %836 = vmatprep.subr.mxu0 0.0
      %837 = vmatpush1.msra.mxu0 0.0
      %838 = vmatprep.subr.mxu0 0.0
      %839 = vmatpush1.msra.mxu0 0.0
      %840 = vmatprep.subr.mxu0 0.0
      %841 = vmatpush1.msra.mxu0 0.0
      %842 = vmatprep.subr.mxu0 0.0
      %843 = vmatpush1.msra.mxu0 0.0
      %844 = vmatprep.subr.mxu0 0.0
      %845 = vmatpush1.msra.mxu0 0.0
      %846 = vmatprep.subr.mxu0 0.0
      %847 = vmatpush1.msra.mxu0 0.0
      %848 = vmatprep.subr.mxu0 0.0
      %849 = vmatpush1.msra.mxu0 0.0
      %850 = vmatprep.subr.mxu0 0.0
      %851 = vmatpush1.msra.mxu0 0.0
      %852 = vmatprep.subr.mxu0 0.0
      %853 = vmatpush1.msra.mxu0 0.0
      %854 = vmatprep.subr.mxu0 0.0
      %855 = vmatpush1.msra.mxu0 0.0
      %856 = vmatprep.subr.mxu0 0.0
      %857 = vmatpush1.msra.mxu0 0.0
      %858 = vmatprep.subr.mxu0 0.0
      %859 = vmatpush1.msra.mxu0 0.0
      %860 = vmatprep.subr.mxu0 0.0
      %861 = vmatpush1.msra.mxu0 0.0
      %862 = vmatprep.subr.mxu0 0.0
      %863 = vmatpush1.msra.mxu0 0.0
      %864 = vmatprep.subr.mxu0 0.0
      %865 = vmatpush1.msra.mxu0 0.0
      %866 = vmatprep.subr.mxu0 0.0
      %867 = vmatpush1.msra.mxu0 0.0
      %868 = vmatprep.subr.mxu0 0.0
      %869 = vmatpush1.msra.mxu0 0.0
      %870 = vmatprep.subr.mxu0 0.0
      %871 = vmatpush1.msra.mxu0 0.0
      %872 = vmatprep.subr.mxu0 0.0
      %873 = vmatpush1.msra.mxu0 0.0
      %874 = vmatprep.mubr.f32.mxu0 0.0
      %875 = vmatmul.mubr.f32.gmra.mrb[0].mxu0 %v349
      %v876 = vpop.f32.mrb[0].mxu0
      %v877 = vadd.f32 0.0, %v876
      %v878 = vpop.f32.mrb[0].mxu0
      %879 = vmatprep.mubr.f32.mxu0 0.0
      %880 = vmatmul.mubr.f32.gmra.mrb[0].mxu0 %v352
      %v881 = vpop.f32.mrb[0].mxu0
      %v882 = vadd.f32 0.0, %v881
      %v883 = vpop.f32.mrb[0].mxu0
      %884 = vmatprep.mubr.f32.mxu0 0.0
      %885 = vmatmul.mubr.f32.gmra.mrb[0].mxu0 %v355
      %v886 = vpop.f32.mrb[0].mxu0
      %v887 = vadd.f32 0.0, %v886
      %v888 = vpop.f32.mrb[0].mxu0
      %889 = vmatprep.mubr.f32.mxu0 0.0
      %890 = vmatmul.mubr.f32.gmra.mrb[0].mxu0 %v358
      %v891 = vpop.f32.mrb[0].mxu0
      %v892 = vadd.f32 0.0, %v891
      %v893 = vpop.f32.mrb[0].mxu0
      %894 = vmatprep.mubr.f32.mxu0 0.0
      %895 = vmatmul.mubr.f32.gmra.mrb[0].mxu0 %v361
      %v896 = vpop.f32.mrb[0].mxu0
      %v897 = vadd.f32 0.0, %v896
      %v898 = vpop.f32.mrb[0].mxu0
      %899 = vmatprep.mubr.f32.mxu0 0.0
      %900 = vmatmul.mubr.f32.gmra.mrb[0].mxu0 %v364
      %v901 = vpop.f32.mrb[0].mxu0
      %v902 = vadd.f32 0.0, %v901
      %v903 = vpop.f32.mrb[0].mxu0
      %904 = vmatprep.mubr.f32.mxu0 0.0
      %905 = vmatmul.mubr.f32.gmra.mrb[0].mxu0 %v367
      %v906 = vpop.f32.mrb[0].mxu0
      %v907 = vadd.f32 0.0, %v906
      %v908 = vpop.f32.mrb[0].mxu0
      %909 = vmatprep.mubr.f32.mxu0 0.0
      %910 = vmatmul.mubr.f32.gmra.mrb[0].mxu0 %v808
      %v911 = vpop.f32.mrb[0].mxu0
      %v912 = vadd.f32 0.0, %v911
      %v913 = vpop.f32.mrb[0].mxu0
      %914 = vdwg.mxu0
      %v915 = vadd.f32 %v796, %v877
      %v916 = vadd.f32 %v797, %v882
      %v917 = vadd.f32 %v798, %v887
      %v918 = vadd.f32 %v799, %v892
      %v919 = vadd.f32 %v800, %v897
      %v920 = vadd.f32 %v801, %v902
      %v921 = vadd.f32 %v802, %v907
      %v922 = vadd.f32 %v803, %v912
      %v924 = vrot.slane %v330, 1
      %v925 = vrot.slane %v331, 1
      %v926 = vsel %vm490, %v924, %v925
      %s927 = scalar_lea.vmem %s280, 64
      %v928 = vld [vmem:[%s927] sm:$0xff]
      %v929 = vld [vmem:[%s927 + $0x8] sm:$0xff]
      %v930 = vsel %vm344, %v926, 0
      %932 = vmatprep.subr.mxu0 0.0
      %933 = vmatpush1.msra.mxu0 %v928
      %934 = vmatprep.subr.mxu0 0.0
      %935 = vmatpush1.msra.mxu0 %v929
      %936 = vmatprep.subr.mxu0 0.0
      %937 = vmatpush1.msra.mxu0 0.0
      %938 = vmatprep.subr.mxu0 0.0
      %939 = vmatpush1.msra.mxu0 0.0
      %940 = vmatprep.subr.mxu0 0.0
      %941 = vmatpush1.msra.mxu0 0.0
      %942 = vmatprep.subr.mxu0 0.0
      %943 = vmatpush1.msra.mxu0 0.0
      %944 = vmatprep.subr.mxu0 0.0
      %945 = vmatpush1.msra.mxu0 0.0
      %946 = vmatprep.subr.mxu0 0.0
      %947 = vmatpush1.msra.mxu0 0.0
      %948 = vmatprep.subr.mxu0 0.0
      %949 = vmatpush1.msra.mxu0 0.0
      %950 = vmatprep.subr.mxu0 0.0
      %951 = vmatpush1.msra.mxu0 0.0
      %952 = vmatprep.subr.mxu0 0.0
      %953 = vmatpush1.msra.mxu0 0.0
      %954 = vmatprep.subr.mxu0 0.0
      %955 = vmatpush1.msra.mxu0 0.0
      %956 = vmatprep.subr.mxu0 0.0
      %957 = vmatpush1.msra.mxu0 0.0
      %958 = vmatprep.subr.mxu0 0.0
      %959 = vmatpush1.msra.mxu0 0.0
      %960 = vmatprep.subr.mxu0 0.0
      %961 = vmatpush1.msra.mxu0 0.0
      %962 = vmatprep.subr.mxu0 0.0
      %963 = vmatpush1.msra.mxu0 0.0
      %964 = vmatprep.subr.mxu0 0.0
      %965 = vmatpush1.msra.mxu0 0.0
      %966 = vmatprep.subr.mxu0 0.0
      %967 = vmatpush1.msra.mxu0 0.0
      %968 = vmatprep.subr.mxu0 0.0
      %969 = vmatpush1.msra.mxu0 0.0
      %970 = vmatprep.subr.mxu0 0.0
      %971 = vmatpush1.msra.mxu0 0.0
      %972 = vmatprep.subr.mxu0 0.0
      %973 = vmatpush1.msra.mxu0 0.0
      %974 = vmatprep.subr.mxu0 0.0
      %975 = vmatpush1.msra.mxu0 0.0
      %976 = vmatprep.subr.mxu0 0.0
      %977 = vmatpush1.msra.mxu0 0.0
      %978 = vmatprep.subr.mxu0 0.0
      %979 = vmatpush1.msra.mxu0 0.0
      %980 = vmatprep.subr.mxu0 0.0
      %981 = vmatpush1.msra.mxu0 0.0
      %982 = vmatprep.subr.mxu0 0.0
      %983 = vmatpush1.msra.mxu0 0.0
      %984 = vmatprep.subr.mxu0 0.0
      %985 = vmatpush1.msra.mxu0 0.0
      %986 = vmatprep.subr.mxu0 0.0
      %987 = vmatpush1.msra.mxu0 0.0
      %988 = vmatprep.subr.mxu0 0.0
      %989 = vmatpush1.msra.mxu0 0.0
      %990 = vmatprep.subr.mxu0 0.0
      %991 = vmatpush1.msra.mxu0 0.0
      %992 = vmatprep.subr.mxu0 0.0
      %993 = vmatpush1.msra.mxu0 0.0
      %994 = vmatprep.subr.mxu0 0.0
      %995 = vmatpush1.msra.mxu0 0.0
      %996 = vmatprep.mubr.f32.mxu0 0.0
      %997 = vmatmul.mubr.f32.gmra.mrb[0].mxu0 %v520
      %v998 = vpop.f32.mrb[0].mxu0
      %v999 = vadd.f32 0.0, %v998
      %v1000 = vpop.f32.mrb[0].mxu0
      %1001 = vmatprep.mubr.f32.mxu0 0.0
      %1002 = vmatmul.mubr.f32.gmra.mrb[0].mxu0 %v522
      %v1003 = vpop.f32.mrb[0].mxu0
      %v1004 = vadd.f32 0.0, %v1003
      %v1005 = vpop.f32.mrb[0].mxu0
      %1006 = vmatprep.mubr.f32.mxu0 0.0
      %1007 = vmatmul.mubr.f32.gmra.mrb[0].mxu0 %v524
      %v1008 = vpop.f32.mrb[0].mxu0
      %v1009 = vadd.f32 0.0, %v1008
      %v1010 = vpop.f32.mrb[0].mxu0
      %1011 = vmatprep.mubr.f32.mxu0 0.0
      %1012 = vmatmul.mubr.f32.gmra.mrb[0].mxu0 %v526
      %v1013 = vpop.f32.mrb[0].mxu0
      %v1014 = vadd.f32 0.0, %v1013
      %v1015 = vpop.f32.mrb[0].mxu0
      %1016 = vmatprep.mubr.f32.mxu0 0.0
      %1017 = vmatmul.mubr.f32.gmra.mrb[0].mxu0 %v528
      %v1018 = vpop.f32.mrb[0].mxu0
      %v1019 = vadd.f32 0.0, %v1018
      %v1020 = vpop.f32.mrb[0].mxu0
      %1021 = vmatprep.mubr.f32.mxu0 0.0
      %1022 = vmatmul.mubr.f32.gmra.mrb[0].mxu0 %v530
      %v1023 = vpop.f32.mrb[0].mxu0
      %v1024 = vadd.f32 0.0, %v1023
      %v1025 = vpop.f32.mrb[0].mxu0
      %1026 = vmatprep.mubr.f32.mxu0 0.0
      %1027 = vmatmul.mubr.f32.gmra.mrb[0].mxu0 %v532
      %v1028 = vpop.f32.mrb[0].mxu0
      %v1029 = vadd.f32 0.0, %v1028
      %v1030 = vpop.f32.mrb[0].mxu0
      %1031 = vmatprep.mubr.f32.mxu0 0.0
      %1032 = vmatmul.mubr.f32.gmra.mrb[0].mxu0 %v930
      %v1033 = vpop.f32.mrb[0].mxu0
      %v1034 = vadd.f32 0.0, %v1033
      %v1035 = vpop.f32.mrb[0].mxu0
      %1036 = vdwg.mxu0
      %v1037 = vadd.f32 %v915, %v999
      %v1038 = vadd.f32 %v916, %v1004
      %v1039 = vadd.f32 %v917, %v1009
      %v1040 = vadd.f32 %v918, %v1014
      %v1041 = vadd.f32 %v919, %v1019
      %v1042 = vadd.f32 %v920, %v1024
      %v1043 = vadd.f32 %v921, %v1029
      %v1044 = vadd.f32 %v922, %v1034
      %v1045 = vrot.slane %v330, 2
      %v1046 = vrot.slane %v331, 2
      %v1047 = vsel %vm647, %v1045, %v1046
      %s1048 = scalar_lea.vmem %s280, 80
      %v1049 = vld [vmem:[%s1048] sm:$0xff]
      %v1050 = vld [vmem:[%s1048 + $0x8] sm:$0xff]
      %v1051 = vsel %vm344, %v1047, 0
      %1053 = vmatprep.subr.mxu0 0.0
      %1054 = vmatpush1.msra.mxu0 %v1049
      %1055 = vmatprep.subr.mxu0 0.0
      %1056 = vmatpush1.msra.mxu0 %v1050
      %1057 = vmatprep.subr.mxu0 0.0
      %1058 = vmatpush1.msra.mxu0 0.0
      %1059 = vmatprep.subr.mxu0 0.0
      %1060 = vmatpush1.msra.mxu0 0.0
      %1061 = vmatprep.subr.mxu0 0.0
      %1062 = vmatpush1.msra.mxu0 0.0
      %1063 = vmatprep.subr.mxu0 0.0
      %1064 = vmatpush1.msra.mxu0 0.0
      %1065 = vmatprep.subr.mxu0 0.0
      %1066 = vmatpush1.msra.mxu0 0.0
      %1067 = vmatprep.subr.mxu0 0.0
      %1068 = vmatpush1.msra.mxu0 0.0
      %1069 = vmatprep.subr.mxu0 0.0
      %1070 = vmatpush1.msra.mxu0 0.0
      %1071 = vmatprep.subr.mxu0 0.0
      %1072 = vmatpush1.msra.mxu0 0.0
      %1073 = vmatprep.subr.mxu0 0.0
      %1074 = vmatpush1.msra.mxu0 0.0
      %1075 = vmatprep.subr.mxu0 0.0
      %1076 = vmatpush1.msra.mxu0 0.0
      %1077 = vmatprep.subr.mxu0 0.0
      %1078 = vmatpush1.msra.mxu0 0.0
      %1079 = vmatprep.subr.mxu0 0.0
      %1080 = vmatpush1.msra.mxu0 0.0
      %1081 = vmatprep.subr.mxu0 0.0
      %1082 = vmatpush1.msra.mxu0 0.0
      %1083 = vmatprep.subr.mxu0 0.0
      %1084 = vmatpush1.msra.mxu0 0.0
      %1085 = vmatprep.subr.mxu0 0.0
      %1086 = vmatpush1.msra.mxu0 0.0
      %1087 = vmatprep.subr.mxu0 0.0
      %1088 = vmatpush1.msra.mxu0 0.0
      %1089 = vmatprep.subr.mxu0 0.0
      %1090 = vmatpush1.msra.mxu0 0.0
      %1091 = vmatprep.subr.mxu0 0.0
      %1092 = vmatpush1.msra.mxu0 0.0
      %1093 = vmatprep.subr.mxu0 0.0
      %1094 = vmatpush1.msra.mxu0 0.0
      %1095 = vmatprep.subr.mxu0 0.0
      %1096 = vmatpush1.msra.mxu0 0.0
      %1097 = vmatprep.subr.mxu0 0.0
      %1098 = vmatpush1.msra.mxu0 0.0
      %1099 = vmatprep.subr.mxu0 0.0
      %1100 = vmatpush1.msra.mxu0 0.0
      %1101 = vmatprep.subr.mxu0 0.0
      %1102 = vmatpush1.msra.mxu0 0.0
      %1103 = vmatprep.subr.mxu0 0.0
      %1104 = vmatpush1.msra.mxu0 0.0
      %1105 = vmatprep.subr.mxu0 0.0
      %1106 = vmatpush1.msra.mxu0 0.0
      %1107 = vmatprep.subr.mxu0 0.0
      %1108 = vmatpush1.msra.mxu0 0.0
      %1109 = vmatprep.subr.mxu0 0.0
      %1110 = vmatpush1.msra.mxu0 0.0
      %1111 = vmatprep.subr.mxu0 0.0
      %1112 = vmatpush1.msra.mxu0 0.0
      %1113 = vmatprep.subr.mxu0 0.0
      %1114 = vmatpush1.msra.mxu0 0.0
      %1115 = vmatprep.subr.mxu0 0.0
      %1116 = vmatpush1.msra.mxu0 0.0
      %1117 = vmatprep.mubr.f32.mxu0 0.0
      %1118 = vmatmul.mubr.f32.gmra.mrb[0].mxu0 %v677
      %v1119 = vpop.f32.mrb[0].mxu0
      %v1120 = vadd.f32 0.0, %v1119
      %v1121 = vpop.f32.mrb[0].mxu0
      %1122 = vmatprep.mubr.f32.mxu0 0.0
      %1123 = vmatmul.mubr.f32.gmra.mrb[0].mxu0 %v679
      %v1124 = vpop.f32.mrb[0].mxu0
      %v1125 = vadd.f32 0.0, %v1124
      %v1126 = vpop.f32.mrb[0].mxu0
      %1127 = vmatprep.mubr.f32.mxu0 0.0
      %1128 = vmatmul.mubr.f32.gmra.mrb[0].mxu0 %v681
      %v1129 = vpop.f32.mrb[0].mxu0
      %v1130 = vadd.f32 0.0, %v1129
      %v1131 = vpop.f32.mrb[0].mxu0
      %1132 = vmatprep.mubr.f32.mxu0 0.0
      %1133 = vmatmul.mubr.f32.gmra.mrb[0].mxu0 %v683
      %v1134 = vpop.f32.mrb[0].mxu0
      %v1135 = vadd.f32 0.0, %v1134
      %v1136 = vpop.f32.mrb[0].mxu0
      %1137 = vmatprep.mubr.f32.mxu0 0.0
      %1138 = vmatmul.mubr.f32.gmra.mrb[0].mxu0 %v685
      %v1139 = vpop.f32.mrb[0].mxu0
      %v1140 = vadd.f32 0.0, %v1139
      %v1141 = vpop.f32.mrb[0].mxu0
      %1142 = vmatprep.mubr.f32.mxu0 0.0
      %1143 = vmatmul.mubr.f32.gmra.mrb[0].mxu0 %v687
      %v1144 = vpop.f32.mrb[0].mxu0
      %v1145 = vadd.f32 0.0, %v1144
      %v1146 = vpop.f32.mrb[0].mxu0
      %1147 = vmatprep.mubr.f32.mxu0 0.0
      %1148 = vmatmul.mubr.f32.gmra.mrb[0].mxu0 %v689
      %v1149 = vpop.f32.mrb[0].mxu0
      %v1150 = vadd.f32 0.0, %v1149
      %v1151 = vpop.f32.mrb[0].mxu0
      %1152 = vmatprep.mubr.f32.mxu0 0.0
      %1153 = vmatmul.mubr.f32.gmra.mrb[0].mxu0 %v1051
      %v1154 = vpop.f32.mrb[0].mxu0
      %v1155 = vadd.f32 0.0, %v1154
      %v1156 = vpop.f32.mrb[0].mxu0
      %1157 = vdwg.mxu0
      %v1158 = vadd.f32 %v1037, %v1120
      %v1159 = vadd.f32 %v1038, %v1125
      %v1160 = vadd.f32 %v1039, %v1130
      %v1161 = vadd.f32 %v1040, %v1135
      %v1162 = vadd.f32 %v1041, %v1140
      %v1163 = vadd.f32 %v1042, %v1145
      %v1164 = vadd.f32 %v1043, %v1150
      %v1165 = vadd.f32 %v1044, %v1155
      %s1166 = scalar_lea.vmem %s280, 96
      %v1167 = vld [vmem:[%s1166] sm:$0xff]
      %v1168 = vld [vmem:[%s1166 + $0x8] sm:$0xff]
      %v1170 = vsel %vm344, %v332, 0
      %1172 = vmatprep.subr.mxu0 0.0
      %1173 = vmatpush1.msra.mxu0 %v1167
      %1174 = vmatprep.subr.mxu0 0.0
      %1175 = vmatpush1.msra.mxu0 %v1168
      %1176 = vmatprep.subr.mxu0 0.0
      %1177 = vmatpush1.msra.mxu0 0.0
      %1178 = vmatprep.subr.mxu0 0.0
      %1179 = vmatpush1.msra.mxu0 0.0
      %1180 = vmatprep.subr.mxu0 0.0
      %1181 = vmatpush1.msra.mxu0 0.0
      %1182 = vmatprep.subr.mxu0 0.0
      %1183 = vmatpush1.msra.mxu0 0.0
      %1184 = vmatprep.subr.mxu0 0.0
      %1185 = vmatpush1.msra.mxu0 0.0
      %1186 = vmatprep.subr.mxu0 0.0
      %1187 = vmatpush1.msra.mxu0 0.0
      %1188 = vmatprep.subr.mxu0 0.0
      %1189 = vmatpush1.msra.mxu0 0.0
      %1190 = vmatprep.subr.mxu0 0.0
      %1191 = vmatpush1.msra.mxu0 0.0
      %1192 = vmatprep.subr.mxu0 0.0
      %1193 = vmatpush1.msra.mxu0 0.0
      %1194 = vmatprep.subr.mxu0 0.0
      %1195 = vmatpush1.msra.mxu0 0.0
      %1196 = vmatprep.subr.mxu0 0.0
      %1197 = vmatpush1.msra.mxu0 0.0
      %1198 = vmatprep.subr.mxu0 0.0
      %1199 = vmatpush1.msra.mxu0 0.0
      %1200 = vmatprep.subr.mxu0 0.0
      %1201 = vmatpush1.msra.mxu0 0.0
      %1202 = vmatprep.subr.mxu0 0.0
      %1203 = vmatpush1.msra.mxu0 0.0
      %1204 = vmatprep.subr.mxu0 0.0
      %1205 = vmatpush1.msra.mxu0 0.0
      %1206 = vmatprep.subr.mxu0 0.0
      %1207 = vmatpush1.msra.mxu0 0.0
      %1208 = vmatprep.subr.mxu0 0.0
      %1209 = vmatpush1.msra.mxu0 0.0
      %1210 = vmatprep.subr.mxu0 0.0
      %1211 = vmatpush1.msra.mxu0 0.0
      %1212 = vmatprep.subr.mxu0 0.0
      %1213 = vmatpush1.msra.mxu0 0.0
      %1214 = vmatprep.subr.mxu0 0.0
      %1215 = vmatpush1.msra.mxu0 0.0
      %1216 = vmatprep.subr.mxu0 0.0
      %1217 = vmatpush1.msra.mxu0 0.0
      %1218 = vmatprep.subr.mxu0 0.0
      %1219 = vmatpush1.msra.mxu0 0.0
      %1220 = vmatprep.subr.mxu0 0.0
      %1221 = vmatpush1.msra.mxu0 0.0
      %1222 = vmatprep.subr.mxu0 0.0
      %1223 = vmatpush1.msra.mxu0 0.0
      %1224 = vmatprep.subr.mxu0 0.0
      %1225 = vmatpush1.msra.mxu0 0.0
      %1226 = vmatprep.subr.mxu0 0.0
      %1227 = vmatpush1.msra.mxu0 0.0
      %1228 = vmatprep.subr.mxu0 0.0
      %1229 = vmatpush1.msra.mxu0 0.0
      %1230 = vmatprep.subr.mxu0 0.0
      %1231 = vmatpush1.msra.mxu0 0.0
      %1232 = vmatprep.subr.mxu0 0.0
      %1233 = vmatpush1.msra.mxu0 0.0
      %1234 = vmatprep.subr.mxu0 0.0
      %1235 = vmatpush1.msra.mxu0 0.0
      %1236 = vmatprep.mubr.f32.mxu0 0.0
      %1237 = vmatmul.mubr.f32.gmra.mrb[0].mxu0 %v352
      %v1238 = vpop.f32.mrb[0].mxu0
      %v1239 = vadd.f32 0.0, %v1238
      %v1240 = vpop.f32.mrb[0].mxu0
      %1241 = vmatprep.mubr.f32.mxu0 0.0
      %1242 = vmatmul.mubr.f32.gmra.mrb[0].mxu0 %v355
      %v1243 = vpop.f32.mrb[0].mxu0
      %v1244 = vadd.f32 0.0, %v1243
      %v1245 = vpop.f32.mrb[0].mxu0
      %1246 = vmatprep.mubr.f32.mxu0 0.0
      %1247 = vmatmul.mubr.f32.gmra.mrb[0].mxu0 %v358
      %v1248 = vpop.f32.mrb[0].mxu0
      %v1249 = vadd.f32 0.0, %v1248
      %v1250 = vpop.f32.mrb[0].mxu0
      %1251 = vmatprep.mubr.f32.mxu0 0.0
      %1252 = vmatmul.mubr.f32.gmra.mrb[0].mxu0 %v361
      %v1253 = vpop.f32.mrb[0].mxu0
      %v1254 = vadd.f32 0.0, %v1253
      %v1255 = vpop.f32.mrb[0].mxu0
      %1256 = vmatprep.mubr.f32.mxu0 0.0
      %1257 = vmatmul.mubr.f32.gmra.mrb[0].mxu0 %v364
      %v1258 = vpop.f32.mrb[0].mxu0
      %v1259 = vadd.f32 0.0, %v1258
      %v1260 = vpop.f32.mrb[0].mxu0
      %1261 = vmatprep.mubr.f32.mxu0 0.0
      %1262 = vmatmul.mubr.f32.gmra.mrb[0].mxu0 %v367
      %v1263 = vpop.f32.mrb[0].mxu0
      %v1264 = vadd.f32 0.0, %v1263
      %v1265 = vpop.f32.mrb[0].mxu0
      %1266 = vmatprep.mubr.f32.mxu0 0.0
      %1267 = vmatmul.mubr.f32.gmra.mrb[0].mxu0 %v808
      %v1268 = vpop.f32.mrb[0].mxu0
      %v1269 = vadd.f32 0.0, %v1268
      %v1270 = vpop.f32.mrb[0].mxu0
      %1271 = vmatprep.mubr.f32.mxu0 0.0
      %1272 = vmatmul.mubr.f32.gmra.mrb[0].mxu0 %v1170
      %v1273 = vpop.f32.mrb[0].mxu0
      %v1274 = vadd.f32 0.0, %v1273
      %v1275 = vpop.f32.mrb[0].mxu0
      %1276 = vdwg.mxu0
      %v1277 = vadd.f32 %v1158, %v1239
      %v1278 = vadd.f32 %v1159, %v1244
      %v1279 = vadd.f32 %v1160, %v1249
      %v1280 = vadd.f32 %v1161, %v1254
      %v1281 = vadd.f32 %v1162, %v1259
      %v1282 = vadd.f32 %v1163, %v1264
      %v1283 = vadd.f32 %v1164, %v1269
      %v1284 = vadd.f32 %v1165, %v1274
      %v1286 = vrot.slane %v332, 1
      %v1287 = vrot.slane %v333, 1
      %v1288 = vsel %vm490, %v1286, %v1287
      %s1289 = scalar_lea.vmem %s280, 112
      %v1290 = vld [vmem:[%s1289] sm:$0xff]
      %v1291 = vld [vmem:[%s1289 + $0x8] sm:$0xff]
      %v1292 = vsel %vm344, %v1288, 0
      %1294 = vmatprep.subr.mxu0 0.0
      %1295 = vmatpush1.msra.mxu0 %v1290
      %1296 = vmatprep.subr.mxu0 0.0
      %1297 = vmatpush1.msra.mxu0 %v1291
      %1298 = vmatprep.subr.mxu0 0.0
      %1299 = vmatpush1.msra.mxu0 0.0
      %1300 = vmatprep.subr.mxu0 0.0
      %1301 = vmatpush1.msra.mxu0 0.0
      %1302 = vmatprep.subr.mxu0 0.0
      %1303 = vmatpush1.msra.mxu0 0.0
      %1304 = vmatprep.subr.mxu0 0.0
      %1305 = vmatpush1.msra.mxu0 0.0
      %1306 = vmatprep.subr.mxu0 0.0
      %1307 = vmatpush1.msra.mxu0 0.0
      %1308 = vmatprep.subr.mxu0 0.0
      %1309 = vmatpush1.msra.mxu0 0.0
      %1310 = vmatprep.subr.mxu0 0.0
      %1311 = vmatpush1.msra.mxu0 0.0
      %1312 = vmatprep.subr.mxu0 0.0
      %1313 = vmatpush1.msra.mxu0 0.0
      %1314 = vmatprep.subr.mxu0 0.0
      %1315 = vmatpush1.msra.mxu0 0.0
      %1316 = vmatprep.subr.mxu0 0.0
      %1317 = vmatpush1.msra.mxu0 0.0
      %1318 = vmatprep.subr.mxu0 0.0
      %1319 = vmatpush1.msra.mxu0 0.0
      %1320 = vmatprep.subr.mxu0 0.0
      %1321 = vmatpush1.msra.mxu0 0.0
      %1322 = vmatprep.subr.mxu0 0.0
      %1323 = vmatpush1.msra.mxu0 0.0
      %1324 = vmatprep.subr.mxu0 0.0
      %1325 = vmatpush1.msra.mxu0 0.0
      %1326 = vmatprep.subr.mxu0 0.0
      %1327 = vmatpush1.msra.mxu0 0.0
      %1328 = vmatprep.subr.mxu0 0.0
      %1329 = vmatpush1.msra.mxu0 0.0
      %1330 = vmatprep.subr.mxu0 0.0
      %1331 = vmatpush1.msra.mxu0 0.0
      %1332 = vmatprep.subr.mxu0 0.0
      %1333 = vmatpush1.msra.mxu0 0.0
      %1334 = vmatprep.subr.mxu0 0.0
      %1335 = vmatpush1.msra.mxu0 0.0
      %1336 = vmatprep.subr.mxu0 0.0
      %1337 = vmatpush1.msra.mxu0 0.0
      %1338 = vmatprep.subr.mxu0 0.0
      %1339 = vmatpush1.msra.mxu0 0.0
      %1340 = vmatprep.subr.mxu0 0.0
      %1341 = vmatpush1.msra.mxu0 0.0
      %1342 = vmatprep.subr.mxu0 0.0
      %1343 = vmatpush1.msra.mxu0 0.0
      %1344 = vmatprep.subr.mxu0 0.0
      %1345 = vmatpush1.msra.mxu0 0.0
      %1346 = vmatprep.subr.mxu0 0.0
      %1347 = vmatpush1.msra.mxu0 0.0
      %1348 = vmatprep.subr.mxu0 0.0
      %1349 = vmatpush1.msra.mxu0 0.0
      %1350 = vmatprep.subr.mxu0 0.0
      %1351 = vmatpush1.msra.mxu0 0.0
      %1352 = vmatprep.subr.mxu0 0.0
      %1353 = vmatpush1.msra.mxu0 0.0
      %1354 = vmatprep.subr.mxu0 0.0
      %1355 = vmatpush1.msra.mxu0 0.0
      %1356 = vmatprep.subr.mxu0 0.0
      %1357 = vmatpush1.msra.mxu0 0.0
      %1358 = vmatprep.mubr.f32.mxu0 0.0
      %1359 = vmatmul.mubr.f32.gmra.mrb[0].mxu0 %v522
      %v1360 = vpop.f32.mrb[0].mxu0
      %v1361 = vadd.f32 0.0, %v1360
      %v1362 = vpop.f32.mrb[0].mxu0
      %1363 = vmatprep.mubr.f32.mxu0 0.0
      %1364 = vmatmul.mubr.f32.gmra.mrb[0].mxu0 %v524
      %v1365 = vpop.f32.mrb[0].mxu0
      %v1366 = vadd.f32 0.0, %v1365
      %v1367 = vpop.f32.mrb[0].mxu0
      %1368 = vmatprep.mubr.f32.mxu0 0.0
      %1369 = vmatmul.mubr.f32.gmra.mrb[0].mxu0 %v526
      %v1370 = vpop.f32.mrb[0].mxu0
      %v1371 = vadd.f32 0.0, %v1370
      %v1372 = vpop.f32.mrb[0].mxu0
      %1373 = vmatprep.mubr.f32.mxu0 0.0
      %1374 = vmatmul.mubr.f32.gmra.mrb[0].mxu0 %v528
      %v1375 = vpop.f32.mrb[0].mxu0
      %v1376 = vadd.f32 0.0, %v1375
      %v1377 = vpop.f32.mrb[0].mxu0
      %1378 = vmatprep.mubr.f32.mxu0 0.0
      %1379 = vmatmul.mubr.f32.gmra.mrb[0].mxu0 %v530
      %v1380 = vpop.f32.mrb[0].mxu0
      %v1381 = vadd.f32 0.0, %v1380
      %v1382 = vpop.f32.mrb[0].mxu0
      %1383 = vmatprep.mubr.f32.mxu0 0.0
      %1384 = vmatmul.mubr.f32.gmra.mrb[0].mxu0 %v532
      %v1385 = vpop.f32.mrb[0].mxu0
      %v1386 = vadd.f32 0.0, %v1385
      %v1387 = vpop.f32.mrb[0].mxu0
      %1388 = vmatprep.mubr.f32.mxu0 0.0
      %1389 = vmatmul.mubr.f32.gmra.mrb[0].mxu0 %v930
      %v1390 = vpop.f32.mrb[0].mxu0
      %v1391 = vadd.f32 0.0, %v1390
      %v1392 = vpop.f32.mrb[0].mxu0
      %1393 = vmatprep.mubr.f32.mxu0 0.0
      %1394 = vmatmul.mubr.f32.gmra.mrb[0].mxu0 %v1292
      %v1395 = vpop.f32.mrb[0].mxu0
      %v1396 = vadd.f32 0.0, %v1395
      %v1397 = vpop.f32.mrb[0].mxu0
      %1398 = vdwg.mxu0
      %v1399 = vadd.f32 %v1277, %v1361
      %v1400 = vadd.f32 %v1278, %v1366
      %v1401 = vadd.f32 %v1279, %v1371
      %v1402 = vadd.f32 %v1280, %v1376
      %v1403 = vadd.f32 %v1281, %v1381
      %v1404 = vadd.f32 %v1282, %v1386
      %v1405 = vadd.f32 %v1283, %v1391
      %v1406 = vadd.f32 %v1284, %v1396
      %v1407 = vrot.slane %v332, 2
      %v1408 = vrot.slane %v333, 2
      %v1409 = vsel %vm647, %v1407, %v1408
      %s1410 = scalar_lea.vmem %s280, 128
      %v1411 = vld [vmem:[%s1410] sm:$0xff]
      %v1412 = vld [vmem:[%s1410 + $0x8] sm:$0xff]
      %v1413 = vsel %vm344, %v1409, 0
      %1415 = vmatprep.subr.mxu0 0.0
      %1416 = vmatpush1.msra.mxu0 %v1411
      %1417 = vmatprep.subr.mxu0 0.0
      %1418 = vmatpush1.msra.mxu0 %v1412
      %1419 = vmatprep.subr.mxu0 0.0
      %1420 = vmatpush1.msra.mxu0 0.0
      %1421 = vmatprep.subr.mxu0 0.0
      %1422 = vmatpush1.msra.mxu0 0.0
      %1423 = vmatprep.subr.mxu0 0.0
      %1424 = vmatpush1.msra.mxu0 0.0
      %1425 = vmatprep.subr.mxu0 0.0
      %1426 = vmatpush1.msra.mxu0 0.0
      %1427 = vmatprep.subr.mxu0 0.0
      %1428 = vmatpush1.msra.mxu0 0.0
      %1429 = vmatprep.subr.mxu0 0.0
      %1430 = vmatpush1.msra.mxu0 0.0
      %1431 = vmatprep.subr.mxu0 0.0
      %1432 = vmatpush1.msra.mxu0 0.0
      %1433 = vmatprep.subr.mxu0 0.0
      %1434 = vmatpush1.msra.mxu0 0.0
      %1435 = vmatprep.subr.mxu0 0.0
      %1436 = vmatpush1.msra.mxu0 0.0
      %1437 = vmatprep.subr.mxu0 0.0
      %1438 = vmatpush1.msra.mxu0 0.0
      %1439 = vmatprep.subr.mxu0 0.0
      %1440 = vmatpush1.msra.mxu0 0.0
      %1441 = vmatprep.subr.mxu0 0.0
      %1442 = vmatpush1.msra.mxu0 0.0
      %1443 = vmatprep.subr.mxu0 0.0
      %1444 = vmatpush1.msra.mxu0 0.0
      %1445 = vmatprep.subr.mxu0 0.0
      %1446 = vmatpush1.msra.mxu0 0.0
      %1447 = vmatprep.subr.mxu0 0.0
      %1448 = vmatpush1.msra.mxu0 0.0
      %1449 = vmatprep.subr.mxu0 0.0
      %1450 = vmatpush1.msra.mxu0 0.0
      %1451 = vmatprep.subr.mxu0 0.0
      %1452 = vmatpush1.msra.mxu0 0.0
      %1453 = vmatprep.subr.mxu0 0.0
      %1454 = vmatpush1.msra.mxu0 0.0
      %1455 = vmatprep.subr.mxu0 0.0
      %1456 = vmatpush1.msra.mxu0 0.0
      %1457 = vmatprep.subr.mxu0 0.0
      %1458 = vmatpush1.msra.mxu0 0.0
      %1459 = vmatprep.subr.mxu0 0.0
      %1460 = vmatpush1.msra.mxu0 0.0
      %1461 = vmatprep.subr.mxu0 0.0
      %1462 = vmatpush1.msra.mxu0 0.0
      %1463 = vmatprep.subr.mxu0 0.0
      %1464 = vmatpush1.msra.mxu0 0.0
      %1465 = vmatprep.subr.mxu0 0.0
      %1466 = vmatpush1.msra.mxu0 0.0
      %1467 = vmatprep.subr.mxu0 0.0
      %1468 = vmatpush1.msra.mxu0 0.0
      %1469 = vmatprep.subr.mxu0 0.0
      %1470 = vmatpush1.msra.mxu0 0.0
      %1471 = vmatprep.subr.mxu0 0.0
      %1472 = vmatpush1.msra.mxu0 0.0
      %1473 = vmatprep.subr.mxu0 0.0
      %1474 = vmatpush1.msra.mxu0 0.0
      %1475 = vmatprep.subr.mxu0 0.0
      %1476 = vmatpush1.msra.mxu0 0.0
      %1477 = vmatprep.subr.mxu0 0.0
      %1478 = vmatpush1.msra.mxu0 0.0
      %1479 = vmatprep.mubr.f32.mxu0 0.0
      %1480 = vmatmul.mubr.f32.gmra.mrb[0].mxu0 %v679
      %v1481 = vpop.f32.mrb[0].mxu0
      %v1482 = vadd.f32 0.0, %v1481
      %v1483 = vpop.f32.mrb[0].mxu0
      %1484 = vmatprep.mubr.f32.mxu0 0.0
      %1485 = vmatmul.mubr.f32.gmra.mrb[0].mxu0 %v681
      %v1486 = vpop.f32.mrb[0].mxu0
      %v1487 = vadd.f32 0.0, %v1486
      %v1488 = vpop.f32.mrb[0].mxu0
      %1489 = vmatprep.mubr.f32.mxu0 0.0
      %1490 = vmatmul.mubr.f32.gmra.mrb[0].mxu0 %v683
      %v1491 = vpop.f32.mrb[0].mxu0
      %v1492 = vadd.f32 0.0, %v1491
      %v1493 = vpop.f32.mrb[0].mxu0
      %1494 = vmatprep.mubr.f32.mxu0 0.0
      %1495 = vmatmul.mubr.f32.gmra.mrb[0].mxu0 %v685
      %v1496 = vpop.f32.mrb[0].mxu0
      %v1497 = vadd.f32 0.0, %v1496
      %v1498 = vpop.f32.mrb[0].mxu0
      %1499 = vmatprep.mubr.f32.mxu0 0.0
      %1500 = vmatmul.mubr.f32.gmra.mrb[0].mxu0 %v687
      %v1501 = vpop.f32.mrb[0].mxu0
      %v1502 = vadd.f32 0.0, %v1501
      %v1503 = vpop.f32.mrb[0].mxu0
      %1504 = vmatprep.mubr.f32.mxu0 0.0
      %1505 = vmatmul.mubr.f32.gmra.mrb[0].mxu0 %v689
      %v1506 = vpop.f32.mrb[0].mxu0
      %v1507 = vadd.f32 0.0, %v1506
      %v1508 = vpop.f32.mrb[0].mxu0
      %1509 = vmatprep.mubr.f32.mxu0 0.0
      %1510 = vmatmul.mubr.f32.gmra.mrb[0].mxu0 %v1051
      %v1511 = vpop.f32.mrb[0].mxu0
      %v1512 = vadd.f32 0.0, %v1511
      %v1513 = vpop.f32.mrb[0].mxu0
      %1514 = vmatprep.mubr.f32.mxu0 0.0
      %1515 = vmatmul.mubr.f32.gmra.mrb[0].mxu0 %v1413
      %v1516 = vpop.f32.mrb[0].mxu0
      %v1517 = vadd.f32 0.0, %v1516
      %v1518 = vpop.f32.mrb[0].mxu0
      %1519 = vdwg.mxu0
      %v1520 = vadd.f32 %v1399, %v1482
      %v1521 = vadd.f32 %v1400, %v1487
      %v1522 = vadd.f32 %v1401, %v1492
      %v1523 = vadd.f32 %v1402, %v1497
      %v1524 = vadd.f32 %v1403, %v1502
      %v1525 = vadd.f32 %v1404, %v1507
      %v1526 = vadd.f32 %v1405, %v1512
      %v1527 = vadd.f32 %v1406, %v1517
      %1528 = vst.msk [vmem:[#allocation2] sm:$0xff] %vm344, %v1520
      %1529 = vst.msk [vmem:[#allocation2 + $0x8] sm:$0xff] %vm344, %v1521
      %1530 = vst.msk [vmem:[#allocation2 + $0x10] sm:$0xff] %vm344, %v1522
      %1531 = vst.msk [vmem:[#allocation2 + $0x18] sm:$0xff] %vm344, %v1523
      %1532 = vst.msk [vmem:[#allocation2 + $0x20] sm:$0xff] %vm344, %v1524
      %1533 = vst.msk [vmem:[#allocation2 + $0x28] sm:$0xff] %vm344, %v1525
      %1534 = vst.msk [vmem:[#allocation2 + $0x30] sm:$0xff] %vm344, %v1526
      %1535 = vst.msk [vmem:[#allocation2 + $0x38] sm:$0xff] %vm344, %v1527
      %p1536 = scmp.eq.s32.totalorder %s24, 2
      // Predicated region
      $region41: #{res_conv_forward.4} parent=31 // pred_check
        %p1537 = pneg %p1536
      $region42: #{res_conv_forward.4} parent=31 // pred_check_branch
        %1539 = sbr.rel (%p1537) target = $region44
      $region43: #{res_conv_forward.4} parent=31 // pred_region
        %v1540 = vld [vmem:[#allocation2] sm:$0xff]
        %v1541 = vld [vmem:[#allocation2 + $0x8] sm:$0xff]
        %v1542 = vld [vmem:[#allocation2 + $0x10] sm:$0xff]
        %v1543 = vld [vmem:[#allocation2 + $0x18] sm:$0xff]
        %v1544 = vld [vmem:[#allocation2 + $0x20] sm:$0xff]
        %v1545 = vld [vmem:[#allocation2 + $0x28] sm:$0xff]
        %v1546 = vld [vmem:[#allocation2 + $0x30] sm:$0xff]
        %v1547 = vld [vmem:[#allocation2 + $0x38] sm:$0xff]
        %v1548 = vld [vmem:[%s2] sm:$0x1]
        %v1550 = vlaneseq
        %v1551 = vshrl.u32 %v1550, 7
        %v1552 = vsub.s32 0, %v1551
        %v1553 = vrot.slane %v1548, %v1552
        %v1555 = vadd.f32 %v1540, %v1553
        %v1556 = vadd.f32 %v1541, %v1553
        %v1557 = vadd.f32 %v1542, %v1553
        %v1558 = vadd.f32 %v1543, %v1553
        %v1559 = vadd.f32 %v1544, %v1553
        %v1560 = vadd.f32 %v1545, %v1553
        %v1561 = vadd.f32 %v1546, %v1553
        %v1562 = vadd.f32 %v1547, %v1553
        %1563 = vst.msk [vmem:[%s289] sm:$0xff] %vm344, %v1555
        %1564 = vst.msk [vmem:[%s289 + $0x8] sm:$0xff] %vm344, %v1556
        %1565 = vst.msk [vmem:[%s289 + $0x10] sm:$0xff] %vm344, %v1557
        %1566 = vst.msk [vmem:[%s289 + $0x18] sm:$0xff] %vm344, %v1558
        %1567 = vst.msk [vmem:[%s289 + $0x20] sm:$0xff] %vm344, %v1559
        %1568 = vst.msk [vmem:[%s289 + $0x28] sm:$0xff] %vm344, %v1560
        %1569 = vst.msk [vmem:[%s289 + $0x30] sm:$0xff] %vm344, %v1561
        %1570 = vst.msk [vmem:[%s289 + $0x38] sm:$0xff] %vm344, %v1562
        %v1571 = vld [vmem:[%s4] sm:$0x1]
        %v1572 = vsel %vm344, %v1555, 0.0
        %v1573 = vsel %vm344, %v1556, 0.0
        %v1574 = vadd.f32 %v1572, %v1573
        %v1575 = vsel %vm344, %v1557, 0.0
        %v1576 = vadd.f32 %v1574, %v1575
        %v1577 = vsel %vm344, %v1558, 0.0
        %v1578 = vadd.f32 %v1576, %v1577
        %v1579 = vsel %vm344, %v1559, 0.0
        %v1580 = vadd.f32 %v1578, %v1579
        %v1581 = vsel %vm344, %v1560, 0.0
        %v1582 = vadd.f32 %v1580, %v1581
        %v1583 = vsel %vm344, %v1561, 0.0
        %v1584 = vadd.f32 %v1582, %v1583
        %v1585 = vsel %vm344, %v1562, 0.0
        %v1586 = vadd.f32 %v1584, %v1585
        %v1587 = vrot.slane %v1586, 4
        %v1588 = vadd.f32 %v1586, %v1587
        %v1589 = vrot.slane %v1588, 2
        %v1590 = vadd.f32 %v1588, %v1589
        %v1591 = vrot.slane %v1590, 1
        %v1592 = vadd.f32 %v1590, %v1591
        %v1593 = vadd.f32 %v1571, %v1592
        %vm1594 = vcmask 122880
        %1595 = vst.msk [vmem:[%s4] sm:$0x1] %vm1594, %v1593
        %v1596 = vld [vmem:[%s5] sm:$0x1]
        %v1597 = vmul.f32 %v1555, %v1555
        %v1598 = vmul.f32 %v1556, %v1556
        %v1599 = vmul.f32 %v1557, %v1557
        %v1600 = vmul.f32 %v1558, %v1558
        %v1601 = vmul.f32 %v1559, %v1559
        %v1602 = vmul.f32 %v1560, %v1560
        %v1603 = vmul.f32 %v1561, %v1561
        %v1604 = vmul.f32 %v1562, %v1562
        %v1605 = vsel %vm344, %v1597, 0.0
        %v1606 = vsel %vm344, %v1598, 0.0
        %v1607 = vadd.f32 %v1605, %v1606
        %v1608 = vsel %vm344, %v1599, 0.0
        %v1609 = vadd.f32 %v1607, %v1608
        %v1610 = vsel %vm344, %v1600, 0.0
        %v1611 = vadd.f32 %v1609, %v1610
        %v1612 = vsel %vm344, %v1601, 0.0
        %v1613 = vadd.f32 %v1611, %v1612
        %v1614 = vsel %vm344, %v1602, 0.0
        %v1615 = vadd.f32 %v1613, %v1614
        %v1616 = vsel %vm344, %v1603, 0.0
        %v1617 = vadd.f32 %v1615, %v1616
        %v1618 = vsel %vm344, %v1604, 0.0
        %v1619 = vadd.f32 %v1617, %v1618
        %v1620 = vrot.slane %v1619, 4
        %v1621 = vadd.f32 %v1619, %v1620
        %v1622 = vrot.slane %v1621, 2
        %v1623 = vadd.f32 %v1621, %v1622
        %v1624 = vrot.slane %v1623, 1
        %v1625 = vadd.f32 %v1623, %v1624
        %v1626 = vadd.f32 %v1596, %v1625
        %1627 = vst.msk [vmem:[%s5] sm:$0x1] %vm1594, %v1626
      $region44: #{res_conv_forward.4} parent=31 // pred_fallthru
        _
      %p1628 = scmp.lt.s32.totalorder %s22, 1
      %s1629 = scalar_select %p1628, %s22, 1
      %p1630 = scmp.lt.s32.totalorder %s23, 7
      %s1631 = scalar_select %p1630, %s23, 7
      %s1632 = smul.addr %s1631, 8
      %s1633 = smul.addr %s1629, 64
      %s1634 = sadd.s32 %s1632, %s1633
      %s1635 = smul.addr %s1634, 8
      %s1636 = scalar_lea.vmem %s3, %s1635
      // Predicated region
      $region45: #{res_conv_forward.4} parent=31 // pred_check
        %p1637 = pneg %p133
      $region46: #{res_conv_forward.4} parent=31 // pred_check_branch
        %1639 = sbr.rel (%p1637) target = $region48
      $region47: #{res_conv_forward.4} parent=31 // pred_region
        _
      $region48: #{res_conv_forward.4} parent=31 // pred_fallthru
        _
      // Predicated region
      $region49: #{res_conv_forward.4} parent=31 // pred_check
        %p1640 = pneg %p154
      $region50: #{res_conv_forward.4} parent=31 // pred_check_branch
        %1642 = sbr.rel (%p1640) target = $region52
      $region51: #{res_conv_forward.4} parent=31 // pred_region
        _
      $region52: #{res_conv_forward.4} parent=31 // pred_fallthru
        _
      // Predicated region
      $region53: #{res_conv_forward.4} parent=31 // pred_check
        %p1643 = pneg %p175
      $region54: #{res_conv_forward.4} parent=31 // pred_check_branch
        %1645 = sbr.rel (%p1643) target = $region56
      $region55: #{res_conv_forward.4} parent=31 // pred_region
        _
      $region56: #{res_conv_forward.4} parent=31 // pred_fallthru
        _
      // Predicated region
      $region57: #{res_conv_forward.4} parent=31 // pred_check
        %p1646 = pneg %p154
      $region58: #{res_conv_forward.4} parent=31 // pred_check_branch
        %1648 = sbr.rel (%p1646) target = $region60
      $region59: #{res_conv_forward.4} parent=31 // pred_region
        _
      $region60: #{res_conv_forward.4} parent=31 // pred_fallthru
        _
      // Predicated region
      $region61: #{res_conv_forward.4} parent=31 // pred_check
        %p1649 = pneg %p175
      $region62: #{res_conv_forward.4} parent=31 // pred_check_branch
        %1651 = sbr.rel (%p1649) target = $region64
      $region63: #{res_conv_forward.4} parent=31 // pred_region
        _
      $region64: #{res_conv_forward.4} parent=31 // pred_fallthru
        _
    $region32: #{res_conv_forward.4} parent=5 // pred_fallthru
      _
    %p1652 = scmp.le.s32.totalorder 2, %s12
    // Predicated region
    $region65: #{res_conv_forward.4} parent=5 // pred_check
      %p1653 = pneg %p1652
    $region66: #{res_conv_forward.4} parent=5 // pred_check_branch
      %1655 = sbr.rel (%p1653) target = $region68
    $region67: #{res_conv_forward.4} parent=5 // pred_region
      %s1656 = ssub.s32 %s12, 2
      // Predicated region
      $region69: #{res_conv_forward.4} parent=67 // pred_check
        %p1657 = pneg %p139
      $region70: #{res_conv_forward.4} parent=67 // pred_check_branch
        %1659 = sbr.rel (%p1657) target = $region72
      $region71: #{res_conv_forward.4} parent=67 // pred_region
        %p1660 = scmp.lt.s32.totalorder %s25, 1
        %s1661 = scalar_select %p1660, %s25, 1
        %p1662 = scmp.lt.s32.totalorder %s26, 7
        %s1663 = scalar_select %p1662, %s26, 7
        %s1664 = smul.addr %s1663, 8
        %s1665 = smul.addr %s1661, 64
        %s1666 = sadd.s32 %s1664, %s1665
        %s1667 = smul.addr %s1666, 8
        %s1668 = scalar_lea.vmem %s3, %s1667
      $region72: #{res_conv_forward.4} parent=67 // pred_fallthru
        _
    $region68: #{res_conv_forward.4} parent=5 // pred_fallthru
      _
  $region6: #{res_conv_forward.4} parent=0 // loop_footer
    %s16 = sadd.s32 1, %s12
  $region7: #{res_conv_forward.4} parent=0 // loop_footer_branch
    %11 = sbr.rel target = $region3
  $region8: #{res_conv_forward.4} parent=0 // loop_exit
    _

</llo_original>
